<compile_context>
chip_gen: v6e
topology: v6e:2x2x1
jax: 0.10.0
libtpu: 0.0.40
codegen_flags: <defaults>
</compile_context>

<pallas_src>
import math
import functools

import jax
import jax.numpy as jnp
from jax import lax
from jax.experimental import pallas as pl
from jax.experimental.pallas import tpu as pltpu


def _cattention_kernel(q_in_ref, k_in_ref, v_in_ref,
                       wq_ref, wk_ref, wv_ref, wo_ref,
                       bq_ref, bk_ref, bv_ref, bo_ref,
                       o_ref,
                       ctx_ref, kproj_ref, vproj_ref,
                       *, n_heads, d_k, matmul_dtype):
    qi = pl.program_id(1)

    # K/V projections depend only on the batch element -> compute once (first
    # q-tile) and cache (in matmul_dtype) in VMEM scratch that persists across
    # grid steps.
    @pl.when(qi == 0)
    def _():
        xk = k_in_ref[0].astype(matmul_dtype)            # (S, D)
        xv = v_in_ref[0].astype(matmul_dtype)
        kproj_ref[...] = (jnp.dot(xk, wk_ref[...],
                                  preferred_element_type=jnp.float32)
                          + bk_ref[0]).astype(matmul_dtype)
        vproj_ref[...] = (jnp.dot(xv, wv_ref[...],
                                  preferred_element_type=jnp.float32)
                          + bv_ref[0]).astype(matmul_dtype)

    # Q projection for this tile. wq/bq were pre-scaled by 1/sqrt(d_k) in the
    # wrapper, so q already carries the attention scale.
    xq = q_in_ref[0].astype(matmul_dtype)                # (TQ, D)
    q = (jnp.dot(xq, wq_ref[...], preferred_element_type=jnp.float32)
         + bq_ref[0])                                    # (TQ, D) f32

    # Per-head attention. d_k is a multiple of 128 -> lane-aligned slices.
    for h in range(n_heads):
        lo = h * d_k
        qh = q[:, lo:lo + d_k].astype(matmul_dtype)      # (TQ, d_k)
        kh = kproj_ref[:, lo:lo + d_k]                   # (S, d_k) bf16
        vh = vproj_ref[:, lo:lo + d_k]                   # (S, d_k) bf16

        # scores = qh @ kh^T without materializing a transpose.
        scores = lax.dot_general(
            qh, kh, dimension_numbers=(((1,), (1,)), ((), ())),
            preferred_element_type=jnp.float32)          # (TQ, S)

        # Numerically-stable softmax; reciprocal runs on the EUP (approx).
        m = jnp.max(scores, axis=-1, keepdims=True)
        e = jnp.exp(scores - m)
        p = e * pl.reciprocal(jnp.sum(e, axis=-1, keepdims=True), approx=True)
        # TODO(synk): attn_mask path (masked_fill with -1e9) and
        # nn.Dropout(p=0.1) on p_attn are not plumbed; the module is exercised
        # with attn_mask=None in eval mode (dropout = identity).

        # Head's context written into its lane slab of the merged buffer.
        ctx_ref[:, lo:lo + d_k] = jnp.dot(
            p.astype(matmul_dtype), vh,
            preferred_element_type=jnp.float32).astype(matmul_dtype)

    # Single full-K output projection over all heads at once.
    out = (jnp.dot(ctx_ref[...], wo_ref[...],
                   preferred_element_type=jnp.float32) + bo_ref[0])
    o_ref[0] = out.astype(o_ref.dtype)


def cattention_forward(query, key, value, params, *, n_heads,
                       q_tile=None, matmul_dtype=jnp.bfloat16):
    """query/key/value: (B, S, D) f32.  params: dict of pre-transposed f32 weights."""
    B, S, D = query.shape
    assert D % n_heads == 0
    d_k = D // n_heads
    # Keep head slices lane-aligned on the 128-wide vreg lane axis.
    assert d_k % 128 == 0, "this kernel expects d_k to be a multiple of 128"
    if q_tile is None:
        q_tile = min(S, 128)
    assert S % q_tile == 0

    # Fold the attention scale into the Q projection; pre-cast weights so the
    # MXU sees bf16 operands and weight DMA bytes are halved. Biases stay f32.
    scale = 1.0 / math.sqrt(d_k)
    wq = (params["wq"] * scale).astype(matmul_dtype)
    wk = params["wk"].astype(matmul_dtype)
    wv = params["wv"].astype(matmul_dtype)
    wo = params["wo"].astype(matmul_dtype)
    bq = params["bq"] * scale
    bk, bv, bo = params["bk"], params["bv"], params["bo"]

    kernel = functools.partial(_cattention_kernel, n_heads=n_heads, d_k=d_k,
                               matmul_dtype=matmul_dtype)

    q_spec = pl.BlockSpec((1, q_tile, D), lambda b, qi: (b, qi, 0))
    kv_spec = pl.BlockSpec((1, S, D), lambda b, qi: (b, 0, 0))
    w_spec = pl.BlockSpec((D, D), lambda b, qi: (0, 0))
    bias_spec = pl.BlockSpec((1, D), lambda b, qi: (0, 0))
    out_spec = pl.BlockSpec((1, q_tile, D), lambda b, qi: (b, qi, 0))

    wbytes = jnp.dtype(matmul_dtype).itemsize
    cost = pl.CostEstimate(
        flops=int(B * (8 * S * D * D + 4 * n_heads * S * S * d_k)),
        transcendentals=int(B * n_heads * S * S),
        bytes_accessed=int(4 * B * S * D * 4 + 4 * D * D * wbytes + 8 * D * 4),
    )

    return pl.pallas_call(
        kernel,
        out_shape=jax.ShapeDtypeStruct((B, S, D), query.dtype),
        grid_spec=pltpu.PrefetchScalarGridSpec(
            num_scalar_prefetch=0,
            grid=(B, S // q_tile),
            in_specs=[q_spec, kv_spec, kv_spec,
                      w_spec, w_spec, w_spec, w_spec,
                      bias_spec, bias_spec, bias_spec, bias_spec],
            out_specs=out_spec,
            scratch_shapes=[
                pltpu.VMEM((q_tile, D), matmul_dtype),  # merged per-head ctx
                pltpu.VMEM((S, D), matmul_dtype),       # cached K projection
                pltpu.VMEM((S, D), matmul_dtype),       # cached V projection
            ]),
        compiler_params=pltpu.CompilerParams(
            dimension_semantics=("parallel", "arbitrary"),
            vmem_limit_bytes=32 * 1024 * 1024),
        cost_estimate=cost,
    )(query, key, value, wq, wk, wv, wo, bq, bk, bv, bo)


def _init_params(key, d_model):
    """Deterministic nn.Linear-style init; weights stored as (in, out)."""
    ks = jax.random.split(key, 8)
    bound = 1.0 / math.sqrt(d_model)

    def lin(kw, kb):
        w = jax.random.uniform(kw, (d_model, d_model), jnp.float32, -bound, bound)
        b = jax.random.uniform(kb, (1, d_model), jnp.float32, -bound, bound)
        return w, b

    wq, bq = lin(ks[0], ks[1])
    wk, bk = lin(ks[2], ks[3])
    wv, bv = lin(ks[4], ks[5])
    wo, bo = lin(ks[6], ks[7])
    return dict(wq=wq, wk=wk, wv=wv, wo=wo, bq=bq, bk=bk, bv=bv, bo=bo)


def _reference_forward(query, key, value, params, *, n_heads):
    """Pure-JAX f32 reference mirroring the PyTorch module (eval mode, no mask)."""
    B, S, D = query.shape
    d_k = D // n_heads

    def proj(x, w, b):
        y = x @ w + b[0]
        return y.reshape(B, S, n_heads, d_k).transpose(0, 2, 1, 3)

    q = proj(query, params["wq"], params["bq"])
    k = proj(key, params["wk"], params["bk"])
    v = proj(value, params["wv"], params["bv"])

    scores = jnp.einsum("bhqd,bhkd->bhqk", q, k) / math.sqrt(d_k)
    p = jax.nn.softmax(scores, axis=-1)
    ctx = jnp.einsum("bhqk,bhkd->bhqd", p, v)
    ctx = ctx.transpose(0, 2, 1, 3).reshape(B, S, D)
    return ctx @ params["wo"] + params["bo"][0]


if __name__ == "__main__":
    # batch, seq, d_model, heads -> d_k = 128 (lane-aligned head slices).
    B, S, D, H = 2, 128, 256, 2

    root = jax.random.PRNGKey(0)
    k_params, k_q, k_k, k_v = jax.random.split(root, 4)

    params = _init_params(k_params, D)
    query = jax.random.normal(k_q, (B, S, D), jnp.float32)
    key = jax.random.normal(k_k, (B, S, D), jnp.float32)
    value = jax.random.normal(k_v, (B, S, D), jnp.float32)

    out = cattention_forward(query, key, value, params, n_heads=H)
    out = jax.block_until_ready(out)

    ref = _reference_forward(query, key, value, params, n_heads=H)
    assert out.shape == (B, S, D)
    # bf16 matmul operands (f32 accumulation) -> tolerance loosened vs pure f32.
    assert jnp.allclose(out, ref, atol=2e-2, rtol=2e-2), "mismatch vs reference"

    print("KERNEL_OK")
</pallas_src>

<mosaic_0001>
module attributes {stable_mosaic.version = 11 : i64} {
  func.func @_cattention_kernel(%arg0: i32, %arg1: i32, %arg2: memref<1x128x256xf32, #tpu.memory_space<vmem>>, %arg3: memref<1x128x256xf32, #tpu.memory_space<vmem>>, %arg4: memref<1x128x256xf32, #tpu.memory_space<vmem>>, %arg5: memref<256x256xbf16, #tpu.memory_space<vmem>>, %arg6: memref<256x256xbf16, #tpu.memory_space<vmem>>, %arg7: memref<256x256xbf16, #tpu.memory_space<vmem>>, %arg8: memref<256x256xbf16, #tpu.memory_space<vmem>>, %arg9: memref<1x256xf32, #tpu.memory_space<vmem>>, %arg10: memref<1x256xf32, #tpu.memory_space<vmem>>, %arg11: memref<1x256xf32, #tpu.memory_space<vmem>>, %arg12: memref<1x256xf32, #tpu.memory_space<vmem>>, %arg13: memref<1x128x256xf32, #tpu.memory_space<vmem>>, %arg14: memref<128x256xbf16, #tpu.memory_space<vmem>>, %arg15: memref<128x256xbf16, #tpu.memory_space<vmem>>, %arg16: memref<128x256xbf16, #tpu.memory_space<vmem>>) attributes {dimension_semantics = [#tpu.dimension_semantics<parallel>, #tpu.dimension_semantics<arbitrary>], iteration_bounds = array<i64: 2, 1>, scalar_prefetch = 0 : i64, scratch_operands = 3 : i64, tpu.core_type = #tpu.core_type<tc>, window_params = [{transform_indices = @transform_0, window_bounds = array<i64: 1, 128, 256>}, {transform_indices = @transform_1, window_bounds = array<i64: 1, 128, 256>}, {transform_indices = @transform_2, window_bounds = array<i64: 1, 128, 256>}, {pipeline_mode = #tpu.pipeline_mode<synchronous>, transform_indices = @transform_3, window_bounds = array<i64: 256, 256>}, {pipeline_mode = #tpu.pipeline_mode<synchronous>, transform_indices = @transform_4, window_bounds = array<i64: 256, 256>}, {pipeline_mode = #tpu.pipeline_mode<synchronous>, transform_indices = @transform_5, window_bounds = array<i64: 256, 256>}, {pipeline_mode = #tpu.pipeline_mode<synchronous>, transform_indices = @transform_6, window_bounds = array<i64: 256, 256>}, {pipeline_mode = #tpu.pipeline_mode<synchronous>, transform_indices = @transform_7, window_bounds = array<i64: 1, 256>}, {pipeline_mode = #tpu.pipeline_mode<synchronous>, transform_indices = @transform_8, window_bounds = array<i64: 1, 256>}, {pipeline_mode = #tpu.pipeline_mode<synchronous>, transform_indices = @transform_9, window_bounds = array<i64: 1, 256>}, {pipeline_mode = #tpu.pipeline_mode<synchronous>, transform_indices = @transform_10, window_bounds = array<i64: 1, 256>}, {transform_indices = @transform_11, window_bounds = array<i64: 1, 128, 256>}]} {
    %c0_i32 = arith.constant 0 : i32
    %0 = arith.cmpi eq, %arg1, %c0_i32 : i32
    %1 = arith.extui %0 : i1 to i32
    %c0_i32_0 = arith.constant 0 : i32
    %2 = arith.cmpi ne, %1, %c0_i32_0 : i32
    scf.if %2 {
      %c0_36 = arith.constant 0 : index
      %c0_37 = arith.constant 0 : index
      %c0_38 = arith.constant 0 : index
      %62 = vector.load %arg3[%c0_36, %c0_37, %c0_38] : memref<1x128x256xf32, #tpu.memory_space<vmem>>, vector<1x128x256xf32>
      %63 = vector.shape_cast %62 : vector<1x128x256xf32> to vector<128x256xf32>
      %64 = arith.truncf %63 : vector<128x256xf32> to vector<128x256xbf16>
      %c0_39 = arith.constant 0 : index
      %c0_40 = arith.constant 0 : index
      %c0_41 = arith.constant 0 : index
      %65 = vector.load %arg4[%c0_39, %c0_40, %c0_41] : memref<1x128x256xf32, #tpu.memory_space<vmem>>, vector<1x128x256xf32>
      %66 = vector.shape_cast %65 : vector<1x128x256xf32> to vector<128x256xf32>
      %67 = arith.truncf %66 : vector<128x256xf32> to vector<128x256xbf16>
      %c0_42 = arith.constant 0 : index
      %c0_43 = arith.constant 0 : index
      %68 = vector.load %arg6[%c0_42, %c0_43] : memref<256x256xbf16, #tpu.memory_space<vmem>>, vector<256x256xbf16>
      %cst_44 = arith.constant dense<0.000000e+00> : vector<128x256xf32>
      %69 = tpu.matmul %64, %68, %cst_44 {dimension_numbers = #tpu.dot_dimension_numbers<[1], [0], [0], [1], [0, 0, 1, 1], [], []>} : vector<128x256xbf16>, vector<256x256xbf16>, vector<128x256xf32> -> vector<128x256xf32>
      %c0_45 = arith.constant 0 : index
      %c0_46 = arith.constant 0 : index
      %70 = vector.load %arg10[%c0_45, %c0_46] : memref<1x256xf32, #tpu.memory_space<vmem>>, vector<1x256xf32>
      %71 = vector.shape_cast %70 : vector<1x256xf32> to vector<256xf32>
      %72 = vector.shape_cast %71 : vector<256xf32> to vector<1x256xf32>
      %73 = vector.broadcast %72 : vector<1x256xf32> to vector<128x256xf32>
      %74 = arith.addf %69, %73 : vector<128x256xf32>
      %75 = arith.truncf %74 : vector<128x256xf32> to vector<128x256xbf16>
      %c0_47 = arith.constant 0 : index
      %c0_48 = arith.constant 0 : index
      %76 = vector.load %arg15[%c0_47, %c0_48] : memref<128x256xbf16, #tpu.memory_space<vmem>>, vector<128x256xbf16>
      tpu.vector_store %arg15[%c0_47, %c0_48], %75 {strides = array<i32>} : memref<128x256xbf16, #tpu.memory_space<vmem>>, vector<128x256xbf16>,
      %c0_49 = arith.constant 0 : index
      %c0_50 = arith.constant 0 : index
      %77 = vector.load %arg7[%c0_49, %c0_50] : memref<256x256xbf16, #tpu.memory_space<vmem>>, vector<256x256xbf16>
      %cst_51 = arith.constant dense<0.000000e+00> : vector<128x256xf32>
      %78 = tpu.matmul %67, %77, %cst_51 {dimension_numbers = #tpu.dot_dimension_numbers<[1], [0], [0], [1], [0, 0, 1, 1], [], []>} : vector<128x256xbf16>, vector<256x256xbf16>, vector<128x256xf32> -> vector<128x256xf32>
      %c0_52 = arith.constant 0 : index
      %c0_53 = arith.constant 0 : index
      %79 = vector.load %arg11[%c0_52, %c0_53] : memref<1x256xf32, #tpu.memory_space<vmem>>, vector<1x256xf32>
      %80 = vector.shape_cast %79 : vector<1x256xf32> to vector<256xf32>
      %81 = vector.shape_cast %80 : vector<256xf32> to vector<1x256xf32>
      %82 = vector.broadcast %81 : vector<1x256xf32> to vector<128x256xf32>
      %83 = arith.addf %78, %82 : vector<128x256xf32>
      %84 = arith.truncf %83 : vector<128x256xf32> to vector<128x256xbf16>
      %c0_54 = arith.constant 0 : index
      %c0_55 = arith.constant 0 : index
      %85 = vector.load %arg16[%c0_54, %c0_55] : memref<128x256xbf16, #tpu.memory_space<vmem>>, vector<128x256xbf16>
      tpu.vector_store %arg16[%c0_54, %c0_55], %84 {strides = array<i32>} : memref<128x256xbf16, #tpu.memory_space<vmem>>, vector<128x256xbf16>,
    } else {
    }
    %c0 = arith.constant 0 : index
    %c0_1 = arith.constant 0 : index
    %c0_2 = arith.constant 0 : index
    %3 = vector.load %arg2[%c0, %c0_1, %c0_2] : memref<1x128x256xf32, #tpu.memory_space<vmem>>, vector<1x128x256xf32>
    %4 = vector.shape_cast %3 : vector<1x128x256xf32> to vector<128x256xf32>
    %5 = arith.truncf %4 : vector<128x256xf32> to vector<128x256xbf16>
    %c0_3 = arith.constant 0 : index
    %c0_4 = arith.constant 0 : index
    %6 = vector.load %arg5[%c0_3, %c0_4] : memref<256x256xbf16, #tpu.memory_space<vmem>>, vector<256x256xbf16>
    %cst = arith.constant dense<0.000000e+00> : vector<128x256xf32>
    %7 = tpu.matmul %5, %6, %cst {dimension_numbers = #tpu.dot_dimension_numbers<[1], [0], [0], [1], [0, 0, 1, 1], [], []>} : vector<128x256xbf16>, vector<256x256xbf16>, vector<128x256xf32> -> vector<128x256xf32>
    %c0_5 = arith.constant 0 : index
    %c0_6 = arith.constant 0 : index
    %8 = vector.load %arg9[%c0_5, %c0_6] : memref<1x256xf32, #tpu.memory_space<vmem>>, vector<1x256xf32>
    %9 = vector.shape_cast %8 : vector<1x256xf32> to vector<256xf32>
    %10 = vector.shape_cast %9 : vector<256xf32> to vector<1x256xf32>
    %11 = vector.broadcast %10 : vector<1x256xf32> to vector<128x256xf32>
    %12 = arith.addf %7, %11 : vector<128x256xf32>
    %13 = vector.extract_strided_slice %12 {offsets = [0, 0], sizes = [128, 128], strides = [1, 1]} : vector<128x256xf32> to vector<128x128xf32>
    %14 = arith.truncf %13 : vector<128x128xf32> to vector<128x128xbf16>
    %c0_7 = arith.constant 0 : index
    %c0_8 = arith.constant 0 : index
    %15 = vector.load %arg15[%c0_7, %c0_8] : memref<128x256xbf16, #tpu.memory_space<vmem>>, vector<128x128xbf16>
    %c0_9 = arith.constant 0 : index
    %c0_10 = arith.constant 0 : index
    %16 = vector.load %arg16[%c0_9, %c0_10] : memref<128x256xbf16, #tpu.memory_space<vmem>>, vector<128x128xbf16>
    %cst_11 = arith.constant dense<0.000000e+00> : vector<128x128xf32>
    %17 = tpu.matmul %14, %15, %cst_11 {dimension_numbers = #tpu.dot_dimension_numbers<[1], [1], [0], [0], [0, 0, 1, 0], [], []>} : vector<128x128xbf16>, vector<128x128xbf16>, vector<128x128xf32> -> vector<128x128xf32>
    %cst_12 = arith.constant dense<0xFF800000> : vector<128xf32>
    %18 = vector.multi_reduction <maximumf>, %17, %cst_12 [1] : vector<128x128xf32> to vector<128xf32>
    %19 = vector.shape_cast %18 : vector<128xf32> to vector<128x1xf32>
    %20 = vector.broadcast %19 : vector<128x1xf32> to vector<128x128xf32>
    %21 = arith.subf %17, %20 : vector<128x128xf32>
    %22 = math.exp %21 : vector<128x128xf32>
    %cst_13 = arith.constant dense<0.000000e+00> : vector<128xf32>
    %23 = vector.multi_reduction <add>, %22, %cst_13 [1] : vector<128x128xf32> to vector<128xf32>
    %24 = vector.shape_cast %23 : vector<128xf32> to vector<128x1xf32>
    %25 = tpu.reciprocal %24 {approx = true} : vector<128x1xf32> -> vector<128x1xf32>
    %26 = vector.broadcast %25 : vector<128x1xf32> to vector<128x128xf32>
    %27 = arith.mulf %22, %26 : vector<128x128xf32>
    %28 = arith.truncf %27 : vector<128x128xf32> to vector<128x128xbf16>
    %cst_14 = arith.constant dense<0.000000e+00> : vector<128x128xf32>
    %29 = tpu.matmul %28, %16, %cst_14 {dimension_numbers = #tpu.dot_dimension_numbers<[1], [0], [0], [1], [0, 0, 1, 1], [], []>} : vector<128x128xbf16>, vector<128x128xbf16>, vector<128x128xf32> -> vector<128x128xf32>
    %30 = arith.truncf %29 : vector<128x128xf32> to vector<128x128xbf16>
    %c0_15 = arith.constant 0 : index
    %c0_16 = arith.constant 0 : index
    %31 = vector.load %arg14[%c0_15, %c0_16] : memref<128x256xbf16, #tpu.memory_space<vmem>>, vector<128x128xbf16>
    tpu.vector_store %arg14[%c0_15, %c0_16], %30 {strides = array<i32>} : memref<128x256xbf16, #tpu.memory_space<vmem>>, vector<128x128xbf16>,
    %32 = vector.extract_strided_slice %12 {offsets = [0, 128], sizes = [128, 128], strides = [1, 1]} : vector<128x256xf32> to vector<128x128xf32>
    %33 = arith.truncf %32 : vector<128x128xf32> to vector<128x128xbf16>
    %c0_17 = arith.constant 0 : index
    %c128 = arith.constant 128 : index
    %34 = vector.load %arg15[%c0_17, %c128] : memref<128x256xbf16, #tpu.memory_space<vmem>>, vector<128x128xbf16>
    %c0_18 = arith.constant 0 : index
    %c128_19 = arith.constant 128 : index
    %35 = vector.load %arg16[%c0_18, %c128_19] : memref<128x256xbf16, #tpu.memory_space<vmem>>, vector<128x128xbf16>
    %cst_20 = arith.constant dense<0.000000e+00> : vector<128x128xf32>
    %36 = tpu.matmul %33, %34, %cst_20 {dimension_numbers = #tpu.dot_dimension_numbers<[1], [1], [0], [0], [0, 0, 1, 0], [], []>} : vector<128x128xbf16>, vector<128x128xbf16>, vector<128x128xf32> -> vector<128x128xf32>
    %cst_21 = arith.constant dense<0xFF800000> : vector<128xf32>
    %37 = vector.multi_reduction <maximumf>, %36, %cst_21 [1] : vector<128x128xf32> to vector<128xf32>
    %38 = vector.shape_cast %37 : vector<128xf32> to vector<128x1xf32>
    %39 = vector.broadcast %38 : vector<128x1xf32> to vector<128x128xf32>
    %40 = arith.subf %36, %39 : vector<128x128xf32>
    %41 = math.exp %40 : vector<128x128xf32>
    %cst_22 = arith.constant dense<0.000000e+00> : vector<128xf32>
    %42 = vector.multi_reduction <add>, %41, %cst_22 [1] : vector<128x128xf32> to vector<128xf32>
    %43 = vector.shape_cast %42 : vector<128xf32> to vector<128x1xf32>
    %44 = tpu.reciprocal %43 {approx = true} : vector<128x1xf32> -> vector<128x1xf32>
    %45 = vector.broadcast %44 : vector<128x1xf32> to vector<128x128xf32>
    %46 = arith.mulf %41, %45 : vector<128x128xf32>
    %47 = arith.truncf %46 : vector<128x128xf32> to vector<128x128xbf16>
    %cst_23 = arith.constant dense<0.000000e+00> : vector<128x128xf32>
    %48 = tpu.matmul %47, %35, %cst_23 {dimension_numbers = #tpu.dot_dimension_numbers<[1], [0], [0], [1], [0, 0, 1, 1], [], []>} : vector<128x128xbf16>, vector<128x128xbf16>, vector<128x128xf32> -> vector<128x128xf32>
    %49 = arith.truncf %48 : vector<128x128xf32> to vector<128x128xbf16>
    %c0_24 = arith.constant 0 : index
    %c128_25 = arith.constant 128 : index
    %50 = vector.load %arg14[%c0_24, %c128_25] : memref<128x256xbf16, #tpu.memory_space<vmem>>, vector<128x128xbf16>
    tpu.vector_store %arg14[%c0_24, %c128_25], %49 {strides = array<i32>} : memref<128x256xbf16, #tpu.memory_space<vmem>>, vector<128x128xbf16>,
    %c0_26 = arith.constant 0 : index
    %c0_27 = arith.constant 0 : index
    %51 = vector.load %arg14[%c0_26, %c0_27] : memref<128x256xbf16, #tpu.memory_space<vmem>>, vector<128x256xbf16>
    %c0_28 = arith.constant 0 : index
    %c0_29 = arith.constant 0 : index
    %52 = vector.load %arg8[%c0_28, %c0_29] : memref<256x256xbf16, #tpu.memory_space<vmem>>, vector<256x256xbf16>
    %cst_30 = arith.constant dense<0.000000e+00> : vector<128x256xf32>
    %53 = tpu.matmul %51, %52, %cst_30 {dimension_numbers = #tpu.dot_dimension_numbers<[1], [0], [0], [1], [0, 0, 1, 1], [], []>} : vector<128x256xbf16>, vector<256x256xbf16>, vector<128x256xf32> -> vector<128x256xf32>
    %c0_31 = arith.constant 0 : index
    %c0_32 = arith.constant 0 : index
    %54 = vector.load %arg12[%c0_31, %c0_32] : memref<1x256xf32, #tpu.memory_space<vmem>>, vector<1x256xf32>
    %55 = vector.shape_cast %54 : vector<1x256xf32> to vector<256xf32>
    %56 = vector.shape_cast %55 : vector<256xf32> to vector<1x256xf32>
    %57 = vector.broadcast %56 : vector<1x256xf32> to vector<128x256xf32>
    %58 = arith.addf %53, %57 : vector<128x256xf32>
    %c0_33 = arith.constant 0 : index
    %c0_34 = arith.constant 0 : index
    %c0_35 = arith.constant 0 : index
    %59 = vector.load %arg13[%c0_33, %c0_34, %c0_35] : memref<1x128x256xf32, #tpu.memory_space<vmem>>, vector<1x128x256xf32>
    %60 = vector.shape_cast %59 : vector<1x128x256xf32> to vector<128x256xf32>
    %61 = vector.shape_cast %58 : vector<128x256xf32> to vector<1x128x256xf32>
    tpu.vector_store %arg13[%c0_33, %c0_34, %c0_35], %61 {strides = array<i32>} : memref<1x128x256xf32, #tpu.memory_space<vmem>>, vector<1x128x256xf32>,
    return
  }
  func.func @transform_0(%arg0: i32, %arg1: i32) -> (i32, i32, i32) {
    %c0_i32 = arith.constant 0 : i32
    %c0_i32_0 = arith.constant 0 : i32
    return %arg0, %arg1, %c0_i32 : i32, i32, i32
  }
  func.func @transform_1(%arg0: i32, %arg1: i32) -> (i32, i32, i32) {
    %c0_i32 = arith.constant 0 : i32
    %c0_i32_0 = arith.constant 0 : i32
    %c0_i32_1 = arith.constant 0 : i32
    return %arg0, %c0_i32, %c0_i32_0 : i32, i32, i32
  }
  func.func @transform_2(%arg0: i32, %arg1: i32) -> (i32, i32, i32) {
    %c0_i32 = arith.constant 0 : i32
    %c0_i32_0 = arith.constant 0 : i32
    %c0_i32_1 = arith.constant 0 : i32
    return %arg0, %c0_i32, %c0_i32_0 : i32, i32, i32
  }
  func.func @transform_3(%arg0: i32, %arg1: i32) -> (i32, i32) {
    %c0_i32 = arith.constant 0 : i32
    %c0_i32_0 = arith.constant 0 : i32
    %c0_i32_1 = arith.constant 0 : i32
    return %c0_i32, %c0_i32_0 : i32, i32
  }
  func.func @transform_4(%arg0: i32, %arg1: i32) -> (i32, i32) {
    %c0_i32 = arith.constant 0 : i32
    %c0_i32_0 = arith.constant 0 : i32
    %c0_i32_1 = arith.constant 0 : i32
    return %c0_i32, %c0_i32_0 : i32, i32
  }
  func.func @transform_5(%arg0: i32, %arg1: i32) -> (i32, i32) {
    %c0_i32 = arith.constant 0 : i32
    %c0_i32_0 = arith.constant 0 : i32
    %c0_i32_1 = arith.constant 0 : i32
    return %c0_i32, %c0_i32_0 : i32, i32
  }
  func.func @transform_6(%arg0: i32, %arg1: i32) -> (i32, i32) {
    %c0_i32 = arith.constant 0 : i32
    %c0_i32_0 = arith.constant 0 : i32
    %c0_i32_1 = arith.constant 0 : i32
    return %c0_i32, %c0_i32_0 : i32, i32
  }
  func.func @transform_7(%arg0: i32, %arg1: i32) -> (i32, i32) {
    %c0_i32 = arith.constant 0 : i32
    %c0_i32_0 = arith.constant 0 : i32
    %c0_i32_1 = arith.constant 0 : i32
    return %c0_i32, %c0_i32_0 : i32, i32
  }
  func.func @transform_8(%arg0: i32, %arg1: i32) -> (i32, i32) {
    %c0_i32 = arith.constant 0 : i32
    %c0_i32_0 = arith.constant 0 : i32
    %c0_i32_1 = arith.constant 0 : i32
    return %c0_i32, %c0_i32_0 : i32, i32
  }
  func.func @transform_9(%arg0: i32, %arg1: i32) -> (i32, i32) {
    %c0_i32 = arith.constant 0 : i32
    %c0_i32_0 = arith.constant 0 : i32
    %c0_i32_1 = arith.constant 0 : i32
    return %c0_i32, %c0_i32_0 : i32, i32
  }
  func.func @transform_10(%arg0: i32, %arg1: i32) -> (i32, i32) {
    %c0_i32 = arith.constant 0 : i32
    %c0_i32_0 = arith.constant 0 : i32
    %c0_i32_1 = arith.constant 0 : i32
    return %c0_i32, %c0_i32_0 : i32, i32
  }
  func.func @transform_11(%arg0: i32, %arg1: i32) -> (i32, i32, i32) {
    %c0_i32 = arith.constant 0 : i32
    %c0_i32_0 = arith.constant 0 : i32
    return %arg0, %arg1, %c0_i32 : i32, i32, i32
  }
}

</mosaic_0001>

<llo_original>
// kernel: tpu_custom_call.1
$region0: #{tpu_custom_call.1}
  #allocation0 [shape = 'u32[]', space=smem, size = 0x4, offset = 0x4, fixed_abs, tag = 'smem constant byte address 0x4 - core index']
  #allocation1 [shape = 'u32[144,128]{1,0:T(1,128)}', space=vmem, size = 0x12000, scoped, tag = 'internal scratch']
  #allocation2 [shape = 'bf16[128,256]{1,0:T(8,128)(2,1)}', space=vmem, size = 0x10000, scoped, tag = 'scratch operand']
  #allocation3 [shape = 'bf16[128,256]{1,0:T(8,128)(2,1)}', space=vmem, size = 0x10000, scoped, tag = 'scratch operand']
  #allocation4 [shape = 'bf16[128,256]{1,0:T(8,128)(2,1)}', space=vmem, size = 0x10000, scoped, tag = 'scratch operand']
  %s0 = inlined_call_operand.hbm [shape: f32[2,128,256], index: 0, kind: input, shape index: {}]
  %s1 = inlined_call_operand.hbm [shape: f32[2,128,256], index: 1, kind: input, shape index: {}]
  %s2 = inlined_call_operand.hbm [shape: f32[2,128,256], index: 2, kind: input, shape index: {}]
  %s3 = inlined_call_operand.hbm [shape: bf16[256,256], index: 3, kind: input, shape index: {}]
  %s4 = inlined_call_operand.hbm [shape: bf16[256,256], index: 4, kind: input, shape index: {}]
  %s5 = inlined_call_operand.hbm [shape: bf16[256,256], index: 5, kind: input, shape index: {}]
  %s6 = inlined_call_operand.hbm [shape: bf16[256,256], index: 6, kind: input, shape index: {}]
  %s7 = inlined_call_operand.vmem [shape: f32[1,256], index: 7, kind: input, shape index: {}]
  %s8 = inlined_call_operand.vmem [shape: f32[1,256], index: 8, kind: input, shape index: {}]
  %s9 = inlined_call_operand.vmem [shape: f32[1,256], index: 9, kind: input, shape index: {}]
  %s10 = inlined_call_operand.vmem [shape: f32[1,256], index: 10, kind: input, shape index: {}]
  %s11 = inlined_call_operand.hbm [shape: f32[2,128,256], index: 11, kind: output, shape index: {}]
  %s12 = sld [smem:[#allocation0]]
  $region109: #{tpu_custom_call.1} parent=0
    _
  %s14 = ssub.s32 1, %s12
  %s15 = scalar_select 0, %s14, %s12
  $region1: #{tpu_custom_call.1} parent=0
    #allocation5 [shape = 'u8[262144]{0}', space=vmem, size = 0x40000, scoped, tag = 'input window, operand 0']
    #allocation6 [shape = 's32[2]{0}', space=sflag, size = 0x8, scoped, tag = 'scoped memory for tpu_custom_call.1']
    #allocation7 [shape = 's32[2]{0}', space=sflag, size = 0x8, scoped, tag = 'scoped memory for tpu_custom_call.1']
    #allocation8 [shape = 'u8[262144]{0}', space=vmem, size = 0x40000, scoped, tag = 'input window, operand 1']
    #allocation9 [shape = 's32[2]{0}', space=sflag, size = 0x8, scoped, tag = 'scoped memory for tpu_custom_call.1']
    #allocation10 [shape = 'u8[262144]{0}', space=vmem, size = 0x40000, scoped, tag = 'input window, operand 2']
    #allocation11 [shape = 'u8[131072]{0}', space=vmem, size = 0x20000, scoped, tag = 'input window, operand 3, single buffered']
    #allocation12 [shape = 's32[1]{0}', space=sflag, size = 0x4, scoped, tag = 'scoped memory for tpu_custom_call.1']
    #allocation13 [shape = 'u8[131072]{0}', space=vmem, size = 0x20000, scoped, tag = 'input window, operand 4, single buffered']
    #allocation14 [shape = 'u8[131072]{0}', space=vmem, size = 0x20000, scoped, tag = 'input window, operand 5, single buffered']
    #allocation15 [shape = 's32[1]{0}', space=sflag, size = 0x4, scoped, tag = 'scoped memory for tpu_custom_call.1']
    #allocation16 [shape = 'u8[131072]{0}', space=vmem, size = 0x20000, scoped, tag = 'input window, operand 6, single buffered']
    #allocation17 [shape = 'u8[262144]{0}', space=vmem, size = 0x40000, scoped, tag = 'output window, operand 0']
    %16 = vsyncpa [#allocation6], 0
    %s17 = scalar_lea.sflag [#allocation6], 1
    %18 = vsyncpa %s17, 0
    %19 = vsyncpa [#allocation9], 0
    %s20 = scalar_lea.sflag [#allocation9], 1
    %21 = vsyncpa %s20, 0
    %22 = vsyncpa [#allocation12], 0
    %23 = vsyncpa [#allocation15], 0
    %24 = vsyncpa [#allocation7], 0
    %s25 = scalar_lea.sflag [#allocation7], 1
    %26 = vsyncpa %s25, 0
    loop: start=0, step=1, limit=4
    $region2: #{tpu_custom_call.1} parent=1 // loop_pre_header
      _
    $region3: #{tpu_custom_call.1} parent=1 // loop_header
      %s28 = sphi 0, %s32
      %p29 = scmp.ge.s32.totalorder %s28, 4
      %s35 = sphi 0, %s47
      %s36 = sphi 0, %s43
      %s37 = sphi 0, %s35
      %s38 = sphi 0, %s36
      %s39 = sphi 0, %s37
      %s40 = sphi 0, %s38
      %s52 = sphi 0, %s54
      %s55 = sphi 0, %s52
      %s56 = sphi 0, %s55
      %s72 = sphi 0, %s56
      %s78 = sphi 0, %s80
      %s81 = sphi 0, %s78
      %s82 = sphi 0, %s81
      %s98 = sphi 0, %s82
      %s104 = sphi 0, %s106
      %s107 = sphi 0, %s104
      %s108 = sphi 0, %s107
      %s124 = sphi 0, %s108
      %s128 = sphi 0, %s128
      %s130 = sphi 0, %s128
      %s131 = sphi 0, %s130
      %s145 = sphi 0, %s131
      %s149 = sphi 0, %s149
      %s151 = sphi 0, %s149
      %s152 = sphi 0, %s151
      %s166 = sphi 0, %s152
      %s170 = sphi 0, %s170
      %s172 = sphi 0, %s170
      %s173 = sphi 0, %s172
      %s187 = sphi 0, %s173
      %s191 = sphi 0, %s191
      %s193 = sphi 0, %s191
      %s194 = sphi 0, %s193
      %s208 = sphi 0, %s194
      %s212 = sphi 0, %s212
      %s214 = sphi 0, %s212
      %s215 = sphi 0, %s214
      %s229 = sphi 0, %s215
      %s233 = sphi 0, %s233
      %s235 = sphi 0, %s233
      %s236 = sphi 0, %s235
      %s250 = sphi 0, %s236
      %s254 = sphi 0, %s254
      %s256 = sphi 0, %s254
      %s257 = sphi 0, %s256
      %s271 = sphi 0, %s257
      %s275 = sphi 0, %s275
      %s277 = sphi 0, %s275
      %s278 = sphi 0, %s277
      %s292 = sphi 0, %s278
      %s300 = sphi 0, %s302
      %s303 = sphi 0, %s300
      %s304 = sphi 0, %s303
      %s320 = sphi 0, %s304
    $region4: #{tpu_custom_call.1} parent=1 // loop_header_branch
      %31 = sbr.rel (%p29) target = $region8
    $region5: #{tpu_custom_call.1} parent=1 // loop_body
      %s33 = ssub.s32 %s28, 1
      %s34 = ssub.s32 %s28, 2
      %s41 = sadd.s32 1, %s36
      %p42 = scmp.ge.s32.totalorder %s41, 1
      %s43 = scalar_select %p42, 0, %s41
      %s44 = sadd.s32 1, %s35
      %s45 = scalar_select %p42, %s44, %s35
      %p46 = scmp.ge.s32.totalorder %s45, 2
      %s47 = scalar_select %p46, 0, %s45
      %s48 = ssub.s32 %s35, %s47
      %s49 = ssub.s32 %s36, %s43
      %s50 = sor.u32 %s48, %s49
      %p51 = scmp.eq.s32.totalorder %s50, 0
      %s53 = sadd.s32 %s52, 1
      %s54 = scalar_select %p51, %s52, %s53
      %p57 = pneg %p51
      %p58 = scmp.eq.s32.totalorder %s28, 1
      %p59 = por %p57, %p58
      %p60 = scmp.ne.s32.totalorder %s52, %s55
      %p61 = scmp.eq.s32.totalorder %s28, 0
      %p62 = por %p60, %p61
      %p63 = scmp.ne.s32.totalorder %s52, %s55
      %p64 = scmp.eq.s32.totalorder %s33, 1
      %p65 = por %p63, %p64
      %p66 = scmp.ne.s32.totalorder %s55, %s56
      %p67 = scmp.eq.s32.totalorder %s33, 0
      %p68 = por %p66, %p67
      %p69 = scmp.ne.s32.totalorder %s55, %s56
      %p70 = scmp.eq.s32.totalorder %s34, 1
      %p71 = por %p69, %p70
      %p73 = scmp.ne.s32.totalorder %s56, %s72
      %p74 = scmp.eq.s32.totalorder %s34, 0
      %p75 = por %p73, %p74
      %s76 = ssub.s32 %s35, %s47
      %p77 = scmp.eq.s32.totalorder %s76, 0
      %s79 = sadd.s32 %s78, 1
      %s80 = scalar_select %p77, %s78, %s79
      %p83 = pneg %p77
      %p84 = scmp.eq.s32.totalorder %s28, 1
      %p85 = por %p83, %p84
      %p86 = scmp.ne.s32.totalorder %s78, %s81
      %p87 = scmp.eq.s32.totalorder %s28, 0
      %p88 = por %p86, %p87
      %p89 = scmp.ne.s32.totalorder %s78, %s81
      %p90 = scmp.eq.s32.totalorder %s33, 1
      %p91 = por %p89, %p90
      %p92 = scmp.ne.s32.totalorder %s81, %s82
      %p93 = scmp.eq.s32.totalorder %s33, 0
      %p94 = por %p92, %p93
      %p95 = scmp.ne.s32.totalorder %s81, %s82
      %p96 = scmp.eq.s32.totalorder %s34, 1
      %p97 = por %p95, %p96
      %p99 = scmp.ne.s32.totalorder %s82, %s98
      %p100 = scmp.eq.s32.totalorder %s34, 0
      %p101 = por %p99, %p100
      %s102 = ssub.s32 %s35, %s47
      %p103 = scmp.eq.s32.totalorder %s102, 0
      %s105 = sadd.s32 %s104, 1
      %s106 = scalar_select %p103, %s104, %s105
      %p109 = pneg %p103
      %p110 = scmp.eq.s32.totalorder %s28, 1
      %p111 = por %p109, %p110
      %p112 = scmp.ne.s32.totalorder %s104, %s107
      %p113 = scmp.eq.s32.totalorder %s28, 0
      %p114 = por %p112, %p113
      %p115 = scmp.ne.s32.totalorder %s104, %s107
      %p116 = scmp.eq.s32.totalorder %s33, 1
      %p117 = por %p115, %p116
      %p118 = scmp.ne.s32.totalorder %s107, %s108
      %p119 = scmp.eq.s32.totalorder %s33, 0
      %p120 = por %p118, %p119
      %p121 = scmp.ne.s32.totalorder %s107, %s108
      %p122 = scmp.eq.s32.totalorder %s34, 1
      %p123 = por %p121, %p122
      %p125 = scmp.ne.s32.totalorder %s108, %s124
      %p126 = scmp.eq.s32.totalorder %s34, 0
      %p127 = por %p125, %p126
      %s129 = sadd.s32 %s128, 1
      %p132 = scmp.eq.s32.totalorder %s28, 1
      %p133 = scmp.ne.s32.totalorder %s128, %s130
      %p134 = scmp.eq.s32.totalorder %s28, 0
      %p135 = por %p133, %p134
      %p136 = scmp.ne.s32.totalorder %s128, %s130
      %p137 = scmp.eq.s32.totalorder %s33, 1
      %p138 = por %p136, %p137
      %p139 = scmp.ne.s32.totalorder %s130, %s131
      %p140 = scmp.eq.s32.totalorder %s33, 0
      %p141 = por %p139, %p140
      %p142 = scmp.ne.s32.totalorder %s130, %s131
      %p143 = scmp.eq.s32.totalorder %s34, 1
      %p144 = por %p142, %p143
      %p146 = scmp.ne.s32.totalorder %s131, %s145
      %p147 = scmp.eq.s32.totalorder %s34, 0
      %p148 = por %p146, %p147
      %s150 = sadd.s32 %s149, 1
      %p153 = scmp.eq.s32.totalorder %s28, 1
      %p154 = scmp.ne.s32.totalorder %s149, %s151
      %p155 = scmp.eq.s32.totalorder %s28, 0
      %p156 = por %p154, %p155
      %p157 = scmp.ne.s32.totalorder %s149, %s151
      %p158 = scmp.eq.s32.totalorder %s33, 1
      %p159 = por %p157, %p158
      %p160 = scmp.ne.s32.totalorder %s151, %s152
      %p161 = scmp.eq.s32.totalorder %s33, 0
      %p162 = por %p160, %p161
      %p163 = scmp.ne.s32.totalorder %s151, %s152
      %p164 = scmp.eq.s32.totalorder %s34, 1
      %p165 = por %p163, %p164
      %p167 = scmp.ne.s32.totalorder %s152, %s166
      %p168 = scmp.eq.s32.totalorder %s34, 0
      %p169 = por %p167, %p168
      %s171 = sadd.s32 %s170, 1
      %p174 = scmp.eq.s32.totalorder %s28, 1
      %p175 = scmp.ne.s32.totalorder %s170, %s172
      %p176 = scmp.eq.s32.totalorder %s28, 0
      %p177 = por %p175, %p176
      %p178 = scmp.ne.s32.totalorder %s170, %s172
      %p179 = scmp.eq.s32.totalorder %s33, 1
      %p180 = por %p178, %p179
      %p181 = scmp.ne.s32.totalorder %s172, %s173
      %p182 = scmp.eq.s32.totalorder %s33, 0
      %p183 = por %p181, %p182
      %p184 = scmp.ne.s32.totalorder %s172, %s173
      %p185 = scmp.eq.s32.totalorder %s34, 1
      %p186 = por %p184, %p185
      %p188 = scmp.ne.s32.totalorder %s173, %s187
      %p189 = scmp.eq.s32.totalorder %s34, 0
      %p190 = por %p188, %p189
      %s192 = sadd.s32 %s191, 1
      %p195 = scmp.eq.s32.totalorder %s28, 1
      %p196 = scmp.ne.s32.totalorder %s191, %s193
      %p197 = scmp.eq.s32.totalorder %s28, 0
      %p198 = por %p196, %p197
      %p199 = scmp.ne.s32.totalorder %s191, %s193
      %p200 = scmp.eq.s32.totalorder %s33, 1
      %p201 = por %p199, %p200
      %p202 = scmp.ne.s32.totalorder %s193, %s194
      %p203 = scmp.eq.s32.totalorder %s33, 0
      %p204 = por %p202, %p203
      %p205 = scmp.ne.s32.totalorder %s193, %s194
      %p206 = scmp.eq.s32.totalorder %s34, 1
      %p207 = por %p205, %p206
      %p209 = scmp.ne.s32.totalorder %s194, %s208
      %p210 = scmp.eq.s32.totalorder %s34, 0
      %p211 = por %p209, %p210
      %s213 = sadd.s32 %s212, 1
      %p216 = scmp.eq.s32.totalorder %s28, 1
      %p217 = scmp.ne.s32.totalorder %s212, %s214
      %p218 = scmp.eq.s32.totalorder %s28, 0
      %p219 = por %p217, %p218
      %p220 = scmp.ne.s32.totalorder %s212, %s214
      %p221 = scmp.eq.s32.totalorder %s33, 1
      %p222 = por %p220, %p221
      %p223 = scmp.ne.s32.totalorder %s214, %s215
      %p224 = scmp.eq.s32.totalorder %s33, 0
      %p225 = por %p223, %p224
      %p226 = scmp.ne.s32.totalorder %s214, %s215
      %p227 = scmp.eq.s32.totalorder %s34, 1
      %p228 = por %p226, %p227
      %p230 = scmp.ne.s32.totalorder %s215, %s229
      %p231 = scmp.eq.s32.totalorder %s34, 0
      %p232 = por %p230, %p231
      %s234 = sadd.s32 %s233, 1
      %p237 = scmp.eq.s32.totalorder %s28, 1
      %p238 = scmp.ne.s32.totalorder %s233, %s235
      %p239 = scmp.eq.s32.totalorder %s28, 0
      %p240 = por %p238, %p239
      %p241 = scmp.ne.s32.totalorder %s233, %s235
      %p242 = scmp.eq.s32.totalorder %s33, 1
      %p243 = por %p241, %p242
      %p244 = scmp.ne.s32.totalorder %s235, %s236
      %p245 = scmp.eq.s32.totalorder %s33, 0
      %p246 = por %p244, %p245
      %p247 = scmp.ne.s32.totalorder %s235, %s236
      %p248 = scmp.eq.s32.totalorder %s34, 1
      %p249 = por %p247, %p248
      %p251 = scmp.ne.s32.totalorder %s236, %s250
      %p252 = scmp.eq.s32.totalorder %s34, 0
      %p253 = por %p251, %p252
      %s255 = sadd.s32 %s254, 1
      %p258 = scmp.eq.s32.totalorder %s28, 1
      %p259 = scmp.ne.s32.totalorder %s254, %s256
      %p260 = scmp.eq.s32.totalorder %s28, 0
      %p261 = por %p259, %p260
      %p262 = scmp.ne.s32.totalorder %s254, %s256
      %p263 = scmp.eq.s32.totalorder %s33, 1
      %p264 = por %p262, %p263
      %p265 = scmp.ne.s32.totalorder %s256, %s257
      %p266 = scmp.eq.s32.totalorder %s33, 0
      %p267 = por %p265, %p266
      %p268 = scmp.ne.s32.totalorder %s256, %s257
      %p269 = scmp.eq.s32.totalorder %s34, 1
      %p270 = por %p268, %p269
      %p272 = scmp.ne.s32.totalorder %s257, %s271
      %p273 = scmp.eq.s32.totalorder %s34, 0
      %p274 = por %p272, %p273
      %s276 = sadd.s32 %s275, 1
      %p279 = scmp.eq.s32.totalorder %s28, 1
      %p280 = scmp.ne.s32.totalorder %s275, %s277
      %p281 = scmp.eq.s32.totalorder %s28, 0
      %p282 = por %p280, %p281
      %p283 = scmp.ne.s32.totalorder %s275, %s277
      %p284 = scmp.eq.s32.totalorder %s33, 1
      %p285 = por %p283, %p284
      %p286 = scmp.ne.s32.totalorder %s277, %s278
      %p287 = scmp.eq.s32.totalorder %s33, 0
      %p288 = por %p286, %p287
      %p289 = scmp.ne.s32.totalorder %s277, %s278
      %p290 = scmp.eq.s32.totalorder %s34, 1
      %p291 = por %p289, %p290
      %p293 = scmp.ne.s32.totalorder %s278, %s292
      %p294 = scmp.eq.s32.totalorder %s34, 0
      %p295 = por %p293, %p294
      %s296 = ssub.s32 %s35, %s47
      %s297 = ssub.s32 %s36, %s43
      %s298 = sor.u32 %s296, %s297
      %p299 = scmp.eq.s32.totalorder %s298, 0
      %s301 = sadd.s32 %s300, 1
      %s302 = scalar_select %p299, %s300, %s301
      %p305 = pneg %p299
      %p306 = scmp.eq.s32.totalorder %s28, 1
      %p307 = por %p305, %p306
      %p308 = scmp.ne.s32.totalorder %s300, %s303
      %p309 = scmp.eq.s32.totalorder %s28, 0
      %p310 = por %p308, %p309
      %p311 = scmp.ne.s32.totalorder %s300, %s303
      %p312 = scmp.eq.s32.totalorder %s33, 1
      %p313 = por %p311, %p312
      %p314 = scmp.ne.s32.totalorder %s303, %s304
      %p315 = scmp.eq.s32.totalorder %s33, 0
      %p316 = por %p314, %p315
      %p317 = scmp.ne.s32.totalorder %s303, %s304
      %p318 = scmp.eq.s32.totalorder %s34, 1
      %p319 = por %p317, %p318
      %p321 = scmp.ne.s32.totalorder %s304, %s320
      %p322 = scmp.eq.s32.totalorder %s34, 0
      %p323 = por %p321, %p322
      %p324 = scmp.le.s32.totalorder 1, %s28
      %p325 = scmp.lt.s32.totalorder %s28, 3
      %p326 = pnand %p324, %p325
      %p327 = pneg %p326
      // Predicated region
      $region9: #{tpu_custom_call.1} parent=5 // pred_check
        _
      $region10: #{tpu_custom_call.1} parent=5 // pred_check_branch
        %329 = sbr.rel (%p326) target = $region12
      $region11: #{tpu_custom_call.1} parent=5 // pred_region
        %s330 = ssub.s32 %s28, 1
        // Predicated region
        $region13: #{tpu_custom_call.1} parent=11 // pred_check
          %p331 = pneg %p141
        $region14: #{tpu_custom_call.1} parent=11 // pred_check_branch
          %333 = sbr.rel (%p331) target = $region16
        $region15: #{tpu_custom_call.1} parent=11 // pred_region
          %s335 = ssub.s32 4096, 4096
          %336 = vsyncadd [#allocation12], %s335
          %s337 = sshll.u32 [#allocation11], 4
          %s338 = int_to_ptr.vmem [resolvable:$true] %s337
          %343 = dma.hbm_to_vmem [thread:$0]  %s3, 4096, %s338, [#allocation12], 128, 128, 8
        $region16: #{tpu_custom_call.1} parent=11 // pred_fallthru
          _
        // Predicated region
        $region17: #{tpu_custom_call.1} parent=11 // pred_check
          %p344 = pneg %p162
        $region18: #{tpu_custom_call.1} parent=11 // pred_check_branch
          %346 = sbr.rel (%p344) target = $region20
        $region19: #{tpu_custom_call.1} parent=11 // pred_region
          %s348 = ssub.s32 4096, 4096
          %349 = vsyncadd [#allocation12], %s348
          %s350 = sshll.u32 [#allocation13], 4
          %s351 = int_to_ptr.vmem [resolvable:$true] %s350
          %356 = dma.hbm_to_vmem [thread:$0]  %s4, 4096, %s351, [#allocation12], 128, 128, 8
        $region20: #{tpu_custom_call.1} parent=11 // pred_fallthru
          _
        // Predicated region
        $region21: #{tpu_custom_call.1} parent=11 // pred_check
          %p357 = pneg %p183
        $region22: #{tpu_custom_call.1} parent=11 // pred_check_branch
          %359 = sbr.rel (%p357) target = $region24
        $region23: #{tpu_custom_call.1} parent=11 // pred_region
          %s361 = ssub.s32 4096, 4096
          %362 = vsyncadd [#allocation15], %s361
          %s363 = sshll.u32 [#allocation14], 4
          %s364 = int_to_ptr.vmem [resolvable:$true] %s363
          %369 = dma.hbm_to_vmem [thread:$0]  %s5, 4096, %s364, [#allocation15], 128, 128, 8
        $region24: #{tpu_custom_call.1} parent=11 // pred_fallthru
          _
        // Predicated region
        $region25: #{tpu_custom_call.1} parent=11 // pred_check
          %p370 = pneg %p204
        $region26: #{tpu_custom_call.1} parent=11 // pred_check_branch
          %372 = sbr.rel (%p370) target = $region28
        $region27: #{tpu_custom_call.1} parent=11 // pred_region
          %s374 = ssub.s32 4096, 4096
          %375 = vsyncadd [#allocation15], %s374
          %s376 = sshll.u32 [#allocation16], 4
          %s377 = int_to_ptr.vmem [resolvable:$true] %s376
          %382 = dma.hbm_to_vmem [thread:$0]  %s6, 4096, %s377, [#allocation15], 128, 128, 8
        $region28: #{tpu_custom_call.1} parent=11 // pred_fallthru
          _
        // Predicated region
        $region29: #{tpu_custom_call.1} parent=11 // pred_check
          %p383 = pneg %p225
        $region30: #{tpu_custom_call.1} parent=11 // pred_check_branch
          %385 = sbr.rel (%p383) target = $region32
        $region31: #{tpu_custom_call.1} parent=11 // pred_region
          _
        $region32: #{tpu_custom_call.1} parent=11 // pred_fallthru
          _
        // Predicated region
        $region33: #{tpu_custom_call.1} parent=11 // pred_check
          %p386 = pneg %p246
        $region34: #{tpu_custom_call.1} parent=11 // pred_check_branch
          %388 = sbr.rel (%p386) target = $region36
        $region35: #{tpu_custom_call.1} parent=11 // pred_region
          _
        $region36: #{tpu_custom_call.1} parent=11 // pred_fallthru
          _
        // Predicated region
        $region37: #{tpu_custom_call.1} parent=11 // pred_check
          %p389 = pneg %p267
        $region38: #{tpu_custom_call.1} parent=11 // pred_check_branch
          %391 = sbr.rel (%p389) target = $region40
        $region39: #{tpu_custom_call.1} parent=11 // pred_region
          _
        $region40: #{tpu_custom_call.1} parent=11 // pred_fallthru
          _
        // Predicated region
        $region41: #{tpu_custom_call.1} parent=11 // pred_check
          %p392 = pneg %p288
        $region42: #{tpu_custom_call.1} parent=11 // pred_check_branch
          %394 = sbr.rel (%p392) target = $region44
        $region43: #{tpu_custom_call.1} parent=11 // pred_region
          _
        $region44: #{tpu_custom_call.1} parent=11 // pred_fallthru
          _
      $region12: #{tpu_custom_call.1} parent=5 // pred_fallthru
        _
      %p395 = scmp.lt.s32.totalorder %s28, 2
      // Predicated region
      $region45: #{tpu_custom_call.1} parent=5 // pred_check
        %p396 = pneg %p395
      $region46: #{tpu_custom_call.1} parent=5 // pred_check_branch
        %398 = sbr.rel (%p396) target = $region48
      $region47: #{tpu_custom_call.1} parent=5 // pred_region
        // Predicated region
        $region49: #{tpu_custom_call.1} parent=47 // pred_check
          %p399 = pneg %p62
        $region50: #{tpu_custom_call.1} parent=47 // pred_check_branch
          %401 = sbr.rel (%p399) target = $region52
        $region51: #{tpu_custom_call.1} parent=47 // pred_region
          %s402 = sand.u32 %s52, 1
          %s403 = scalar_lea.sflag [#allocation6], %s402
          %s404 = sand.u32 %s52, 1
          %s405 = smul.addr %s404, 256
          %s406 = scalar_lea.vmem [#allocation5], %s405
          %s407 = smul.u32 16, %s36
          %s409 = ssub.s32 4096, 4096
          %410 = vsyncadd %s403, %s409
          %s411 = smul.addr %s407, 2
          %s412 = smul.addr %s35, 32
          %s413 = sadd.s32 %s411, %s412
          %s414 = smul.addr %s413, 128
          %s415 = scalar_lea.hbm %s0, %s414
          %s416 = sshll.u32 %s406, 4
          %s417 = int_to_ptr.vmem [resolvable:$true] %s416
          %422 = dma.hbm_to_vmem [thread:$0]  %s415, 4096, %s417, %s403, 256, 256, 16
        $region52: #{tpu_custom_call.1} parent=47 // pred_fallthru
          _
        // Predicated region
        $region53: #{tpu_custom_call.1} parent=47 // pred_check
          %p423 = pneg %p88
        $region54: #{tpu_custom_call.1} parent=47 // pred_check_branch
          %425 = sbr.rel (%p423) target = $region56
        $region55: #{tpu_custom_call.1} parent=47 // pred_region
          %s426 = sand.u32 %s28, 1
          %s427 = scalar_lea.sflag [#allocation9], %s426
          %s428 = sand.u32 %s78, 1
          %s429 = smul.addr %s428, 256
          %s430 = scalar_lea.vmem [#allocation8], %s429
          %s432 = ssub.s32 4096, 4096
          %433 = vsyncadd %s427, %s432
          %s434 = smul.addr %s35, 32
          %s435 = smul.addr %s434, 128
          %s436 = scalar_lea.hbm %s1, %s435
          %s437 = sshll.u32 %s430, 4
          %s438 = int_to_ptr.vmem [resolvable:$true] %s437
          %443 = dma.hbm_to_vmem [thread:$0]  %s436, 4096, %s438, %s427, 256, 256, 16
        $region56: #{tpu_custom_call.1} parent=47 // pred_fallthru
          _
        // Predicated region
        $region57: #{tpu_custom_call.1} parent=47 // pred_check
          %p444 = pneg %p114
        $region58: #{tpu_custom_call.1} parent=47 // pred_check_branch
          %446 = sbr.rel (%p444) target = $region60
        $region59: #{tpu_custom_call.1} parent=47 // pred_region
          %s447 = sand.u32 %s28, 1
          %s448 = scalar_lea.sflag [#allocation9], %s447
          %s449 = sand.u32 %s104, 1
          %s450 = smul.addr %s449, 256
          %s451 = scalar_lea.vmem [#allocation10], %s450
          %s453 = ssub.s32 4096, 4096
          %454 = vsyncadd %s448, %s453
          %s455 = smul.addr %s35, 32
          %s456 = smul.addr %s455, 128
          %s457 = scalar_lea.hbm %s2, %s456
          %s458 = sshll.u32 %s451, 4
          %s459 = int_to_ptr.vmem [resolvable:$true] %s458
          %464 = dma.hbm_to_vmem [thread:$0]  %s457, 4096, %s459, %s448, 256, 256, 16
        $region60: #{tpu_custom_call.1} parent=47 // pred_fallthru
          _
      $region48: #{tpu_custom_call.1} parent=5 // pred_fallthru
        _
      %p465 = scmp.le.s32.totalorder 1, %s28
      %p466 = scmp.lt.s32.totalorder %s28, 3
      %p467 = pnand %p465, %p466
      %p468 = pneg %p467
      // Predicated region
      $region61: #{tpu_custom_call.1} parent=5 // pred_check
        _
      $region62: #{tpu_custom_call.1} parent=5 // pred_check_branch
        %470 = sbr.rel (%p467) target = $region64
      $region63: #{tpu_custom_call.1} parent=5 // pred_region
        %s471 = ssub.s32 %s28, 1
        %s472 = sand.u32 %s55, 1
        %s473 = scalar_lea.sflag [#allocation6], %s472
        %s474 = sand.u32 %s55, 1
        %s475 = smul.addr %s474, 256
        %s476 = scalar_lea.vmem [#allocation5], %s475
        // Predicated region
        $region65: #{tpu_custom_call.1} parent=63 // pred_check
          %p477 = pneg %p68
        $region66: #{tpu_custom_call.1} parent=63 // pred_check_branch
          %479 = sbr.rel (%p477) target = $region68
        $region67: #{tpu_custom_call.1} parent=63 // pred_region
          %480 = dma.done %s473, 4096
        $region68: #{tpu_custom_call.1} parent=63 // pred_fallthru
          _
        %s481 = sand.u32 %s33, 1
        %s482 = scalar_lea.sflag [#allocation9], %s481
        %s483 = sand.u32 %s81, 1
        %s484 = smul.addr %s483, 256
        %s485 = scalar_lea.vmem [#allocation8], %s484
        // Predicated region
        $region69: #{tpu_custom_call.1} parent=63 // pred_check
          %p486 = pneg %p94
        $region70: #{tpu_custom_call.1} parent=63 // pred_check_branch
          %488 = sbr.rel (%p486) target = $region72
        $region71: #{tpu_custom_call.1} parent=63 // pred_region
          %489 = dma.done %s482, 4096
        $region72: #{tpu_custom_call.1} parent=63 // pred_fallthru
          _
        %s490 = sand.u32 %s33, 1
        %s491 = scalar_lea.sflag [#allocation9], %s490
        %s492 = sand.u32 %s107, 1
        %s493 = smul.addr %s492, 256
        %s494 = scalar_lea.vmem [#allocation10], %s493
        // Predicated region
        $region73: #{tpu_custom_call.1} parent=63 // pred_check
          %p495 = pneg %p120
        $region74: #{tpu_custom_call.1} parent=63 // pred_check_branch
          %497 = sbr.rel (%p495) target = $region76
        $region75: #{tpu_custom_call.1} parent=63 // pred_region
          %498 = dma.done %s491, 4096
        $region76: #{tpu_custom_call.1} parent=63 // pred_fallthru
          _
        // Predicated region
        $region77: #{tpu_custom_call.1} parent=63 // pred_check
          %p499 = pneg %p141
        $region78: #{tpu_custom_call.1} parent=63 // pred_check_branch
          %501 = sbr.rel (%p499) target = $region80
        $region79: #{tpu_custom_call.1} parent=63 // pred_region
          %502 = dma.done [#allocation12], 4096
        $region80: #{tpu_custom_call.1} parent=63 // pred_fallthru
          _
        // Predicated region
        $region81: #{tpu_custom_call.1} parent=63 // pred_check
          %p503 = pneg %p162
        $region82: #{tpu_custom_call.1} parent=63 // pred_check_branch
          %505 = sbr.rel (%p503) target = $region84
        $region83: #{tpu_custom_call.1} parent=63 // pred_region
          %506 = dma.done [#allocation12], 4096
        $region84: #{tpu_custom_call.1} parent=63 // pred_fallthru
          _
        // Predicated region
        $region85: #{tpu_custom_call.1} parent=63 // pred_check
          %p507 = pneg %p183
        $region86: #{tpu_custom_call.1} parent=63 // pred_check_branch
          %509 = sbr.rel (%p507) target = $region88
        $region87: #{tpu_custom_call.1} parent=63 // pred_region
          %510 = dma.done [#allocation15], 4096
        $region88: #{tpu_custom_call.1} parent=63 // pred_fallthru
          _
        // Predicated region
        $region89: #{tpu_custom_call.1} parent=63 // pred_check
          %p511 = pneg %p204
        $region90: #{tpu_custom_call.1} parent=63 // pred_check_branch
          %513 = sbr.rel (%p511) target = $region92
        $region91: #{tpu_custom_call.1} parent=63 // pred_region
          %514 = dma.done [#allocation15], 4096
        $region92: #{tpu_custom_call.1} parent=63 // pred_fallthru
          _
        %s515 = sand.u32 %s55, 1
        %s516 = scalar_lea.sflag [#allocation6], %s515
        %s517 = sand.u32 %s55, 1
        %s518 = smul.addr %s517, 256
        %s519 = scalar_lea.vmem [#allocation5], %s518
        %p520 = pneg %p68
        %p521 = pneg %p65
        %s522 = sand.u32 %s33, 1
        %s523 = scalar_lea.sflag [#allocation9], %s522
        %s524 = sand.u32 %s81, 1
        %s525 = smul.addr %s524, 256
        %s526 = scalar_lea.vmem [#allocation8], %s525
        %p527 = pneg %p94
        %p528 = pneg %p91
        %s529 = sand.u32 %s33, 1
        %s530 = scalar_lea.sflag [#allocation9], %s529
        %s531 = sand.u32 %s107, 1
        %s532 = smul.addr %s531, 256
        %s533 = scalar_lea.vmem [#allocation10], %s532
        %p534 = pneg %p120
        %p535 = pneg %p117
        %p536 = pneg %p141
        %p537 = pneg %p138
        %p538 = pneg %p162
        %p539 = pneg %p159
        %p540 = pneg %p183
        %p541 = pneg %p180
        %p542 = pneg %p204
        %p543 = pneg %p201
        %p544 = pneg %p225
        %p545 = pneg %p222
        %p546 = pneg %p246
        %p547 = pneg %p243
        %p548 = pneg %p267
        %p549 = pneg %p264
        %p550 = pneg %p288
        %p551 = pneg %p285
        %p552 = pneg %p316
        %p553 = pneg %p313
        %s554 = sand.u32 %s303, 1
        %s555 = scalar_lea.sflag [#allocation7], %s554
        %s556 = sand.u32 %s303, 1
        %s557 = smul.addr %s556, 256
        %s558 = scalar_lea.vmem [#allocation17], %s557
        %s559 = smul.u32 16, %s38
        %s560 = smul.u32 16, %s38
        %p562 = scmp.eq.s32.totalorder %s38, 0
        // Predicated region
        $region93: #{tpu_custom_call.1} parent=63 // pred_check
          %p563 = pneg %p562
        $region94: #{tpu_custom_call.1} parent=63 // pred_check_branch
          %565 = sbr.rel (%p563) target = $region96
        $region95: #{tpu_custom_call.1} parent=63 // pred_region
          %v566 = vld [vmem:[%s485] sm:$0xff]
          %v567 = vld [vmem:[%s485 + $0x8] sm:$0xff]
          %v568 = vld [vmem:[%s485 + $0x10] sm:$0xff]
          %v569 = vld [vmem:[%s485 + $0x18] sm:$0xff]
          %v570 = vld [vmem:[%s485 + $0x20] sm:$0xff]
          %v571 = vld [vmem:[%s485 + $0x28] sm:$0xff]
          %v572 = vld [vmem:[%s485 + $0x30] sm:$0xff]
          %v573 = vld [vmem:[%s485 + $0x38] sm:$0xff]
          %v574 = vld [vmem:[%s485 + $0x40] sm:$0xff]
          %v575 = vld [vmem:[%s485 + $0x48] sm:$0xff]
          %v576 = vld [vmem:[%s485 + $0x50] sm:$0xff]
          %v577 = vld [vmem:[%s485 + $0x58] sm:$0xff]
          %v578 = vld [vmem:[%s485 + $0x60] sm:$0xff]
          %v579 = vld [vmem:[%s485 + $0x68] sm:$0xff]
          %v580 = vld [vmem:[%s485 + $0x70] sm:$0xff]
          %v581 = vld [vmem:[%s485 + $0x78] sm:$0xff]
          %v582 = vld [vmem:[%s485 + $0x80] sm:$0xff]
          %v583 = vld [vmem:[%s485 + $0x88] sm:$0xff]
          %v584 = vld [vmem:[%s485 + $0x90] sm:$0xff]
          %v585 = vld [vmem:[%s485 + $0x98] sm:$0xff]
          %v586 = vld [vmem:[%s485 + $0xa0] sm:$0xff]
          %v587 = vld [vmem:[%s485 + $0xa8] sm:$0xff]
          %v588 = vld [vmem:[%s485 + $0xb0] sm:$0xff]
          %v589 = vld [vmem:[%s485 + $0xb8] sm:$0xff]
          %v590 = vld [vmem:[%s485 + $0xc0] sm:$0xff]
          %v591 = vld [vmem:[%s485 + $0xc8] sm:$0xff]
          %v592 = vld [vmem:[%s485 + $0xd0] sm:$0xff]
          %v593 = vld [vmem:[%s485 + $0xd8] sm:$0xff]
          %v594 = vld [vmem:[%s485 + $0xe0] sm:$0xff]
          %v595 = vld [vmem:[%s485 + $0xe8] sm:$0xff]
          %v596 = vld [vmem:[%s485 + $0xf0] sm:$0xff]
          %v597 = vld [vmem:[%s485 + $0xf8] sm:$0xff]
          %v598 = vpack.c.bf16 %v568, %v566
          %v599 = vpack.c.bf16 %v569, %v567
          %v600 = vpack.c.bf16 %v572, %v570
          %v601 = vpack.c.bf16 %v573, %v571
          %v602 = vpack.c.bf16 %v576, %v574
          %v603 = vpack.c.bf16 %v577, %v575
          %v604 = vpack.c.bf16 %v580, %v578
          %v605 = vpack.c.bf16 %v581, %v579
          %v606 = vpack.c.bf16 %v584, %v582
          %v607 = vpack.c.bf16 %v585, %v583
          %v608 = vpack.c.bf16 %v588, %v586
          %v609 = vpack.c.bf16 %v589, %v587
          %v610 = vpack.c.bf16 %v592, %v590
          %v611 = vpack.c.bf16 %v593, %v591
          %v612 = vpack.c.bf16 %v596, %v594
          %v613 = vpack.c.bf16 %v597, %v595
          %v614 = vld [vmem:[%s494] sm:$0xff]
          %v615 = vld [vmem:[%s494 + $0x8] sm:$0xff]
          %v616 = vld [vmem:[%s494 + $0x10] sm:$0xff]
          %v617 = vld [vmem:[%s494 + $0x18] sm:$0xff]
          %v618 = vld [vmem:[%s494 + $0x20] sm:$0xff]
          %v619 = vld [vmem:[%s494 + $0x28] sm:$0xff]
          %v620 = vld [vmem:[%s494 + $0x30] sm:$0xff]
          %v621 = vld [vmem:[%s494 + $0x38] sm:$0xff]
          %v622 = vld [vmem:[%s494 + $0x40] sm:$0xff]
          %v623 = vld [vmem:[%s494 + $0x48] sm:$0xff]
          %v624 = vld [vmem:[%s494 + $0x50] sm:$0xff]
          %v625 = vld [vmem:[%s494 + $0x58] sm:$0xff]
          %v626 = vld [vmem:[%s494 + $0x60] sm:$0xff]
          %v627 = vld [vmem:[%s494 + $0x68] sm:$0xff]
          %v628 = vld [vmem:[%s494 + $0x70] sm:$0xff]
          %v629 = vld [vmem:[%s494 + $0x78] sm:$0xff]
          %v630 = vld [vmem:[%s494 + $0x80] sm:$0xff]
          %v631 = vld [vmem:[%s494 + $0x88] sm:$0xff]
          %v632 = vld [vmem:[%s494 + $0x90] sm:$0xff]
          %v633 = vld [vmem:[%s494 + $0x98] sm:$0xff]
          %v634 = vld [vmem:[%s494 + $0xa0] sm:$0xff]
          %v635 = vld [vmem:[%s494 + $0xa8] sm:$0xff]
          %v636 = vld [vmem:[%s494 + $0xb0] sm:$0xff]
          %v637 = vld [vmem:[%s494 + $0xb8] sm:$0xff]
          %v638 = vld [vmem:[%s494 + $0xc0] sm:$0xff]
          %v639 = vld [vmem:[%s494 + $0xc8] sm:$0xff]
          %v640 = vld [vmem:[%s494 + $0xd0] sm:$0xff]
          %v641 = vld [vmem:[%s494 + $0xd8] sm:$0xff]
          %v642 = vld [vmem:[%s494 + $0xe0] sm:$0xff]
          %v643 = vld [vmem:[%s494 + $0xe8] sm:$0xff]
          %v644 = vld [vmem:[%s494 + $0xf0] sm:$0xff]
          %v645 = vld [vmem:[%s494 + $0xf8] sm:$0xff]
          %v646 = vpack.c.bf16 %v616, %v614
          %v647 = vpack.c.bf16 %v617, %v615
          %v648 = vpack.c.bf16 %v620, %v618
          %v649 = vpack.c.bf16 %v621, %v619
          %v650 = vpack.c.bf16 %v624, %v622
          %v651 = vpack.c.bf16 %v625, %v623
          %v652 = vpack.c.bf16 %v628, %v626
          %v653 = vpack.c.bf16 %v629, %v627
          %v654 = vpack.c.bf16 %v632, %v630
          %v655 = vpack.c.bf16 %v633, %v631
          %v656 = vpack.c.bf16 %v636, %v634
          %v657 = vpack.c.bf16 %v637, %v635
          %v658 = vpack.c.bf16 %v640, %v638
          %v659 = vpack.c.bf16 %v641, %v639
          %v660 = vpack.c.bf16 %v644, %v642
          %v661 = vpack.c.bf16 %v645, %v643
          %v662 = vld [vmem:[#allocation13] sm:$0xff]
          %v663 = vld [vmem:[#allocation13 + $0x8] sm:$0xff]
          %v664 = vld [vmem:[#allocation13 + $0x10] sm:$0xff]
          %v665 = vld [vmem:[#allocation13 + $0x18] sm:$0xff]
          %v666 = vld [vmem:[#allocation13 + $0x20] sm:$0xff]
          %v667 = vld [vmem:[#allocation13 + $0x28] sm:$0xff]
          %v668 = vld [vmem:[#allocation13 + $0x30] sm:$0xff]
          %v669 = vld [vmem:[#allocation13 + $0x38] sm:$0xff]
          %v670 = vld [vmem:[#allocation13 + $0x40] sm:$0xff]
          %v671 = vld [vmem:[#allocation13 + $0x48] sm:$0xff]
          %v672 = vld [vmem:[#allocation13 + $0x50] sm:$0xff]
          %v673 = vld [vmem:[#allocation13 + $0x58] sm:$0xff]
          %v674 = vld [vmem:[#allocation13 + $0x60] sm:$0xff]
          %v675 = vld [vmem:[#allocation13 + $0x68] sm:$0xff]
          %v676 = vld [vmem:[#allocation13 + $0x70] sm:$0xff]
          %v677 = vld [vmem:[#allocation13 + $0x78] sm:$0xff]
          %v678 = vld [vmem:[#allocation13 + $0x80] sm:$0xff]
          %v679 = vld [vmem:[#allocation13 + $0x88] sm:$0xff]
          %v680 = vld [vmem:[#allocation13 + $0x90] sm:$0xff]
          %v681 = vld [vmem:[#allocation13 + $0x98] sm:$0xff]
          %v682 = vld [vmem:[#allocation13 + $0xa0] sm:$0xff]
          %v683 = vld [vmem:[#allocation13 + $0xa8] sm:$0xff]
          %v684 = vld [vmem:[#allocation13 + $0xb0] sm:$0xff]
          %v685 = vld [vmem:[#allocation13 + $0xb8] sm:$0xff]
          %v686 = vld [vmem:[#allocation13 + $0xc0] sm:$0xff]
          %v687 = vld [vmem:[#allocation13 + $0xc8] sm:$0xff]
          %v688 = vld [vmem:[#allocation13 + $0xd0] sm:$0xff]
          %v689 = vld [vmem:[#allocation13 + $0xd8] sm:$0xff]
          %v690 = vld [vmem:[#allocation13 + $0xe0] sm:$0xff]
          %v691 = vld [vmem:[#allocation13 + $0xe8] sm:$0xff]
          %v692 = vld [vmem:[#allocation13 + $0xf0] sm:$0xff]
          %v693 = vld [vmem:[#allocation13 + $0xf8] sm:$0xff]
          %v694 = vld [vmem:[%s8] sm:$0x3]
          %v696 = vlaneseq
          %v697 = vshrl.u32 %v696, 7
          %v698 = vsub.s32 0, %v697
          %v699 = vrot.slane %v694, %v698
          %v700 = vlaneseq
          %v701 = vshrl.u32 %v700, 7
          %v702 = vsub.s32 1, %v701
          %v703 = vrot.slane %v694, %v702
          %v738 = vunpack.c.l.b16 %v662
          %v739 = vunpack.c.h.b16 %v662
          %v740 = vunpack.c.l.b16 %v663
          %v741 = vunpack.c.h.b16 %v663
          %v742 = vunpack.c.l.b16 %v664
          %v743 = vunpack.c.h.b16 %v664
          %v744 = vunpack.c.l.b16 %v665
          %v745 = vunpack.c.h.b16 %v665
          %v746 = vunpack.c.l.b16 %v666
          %v747 = vunpack.c.h.b16 %v666
          %v748 = vunpack.c.l.b16 %v667
          %v749 = vunpack.c.h.b16 %v667
          %v750 = vunpack.c.l.b16 %v668
          %v751 = vunpack.c.h.b16 %v668
          %v752 = vunpack.c.l.b16 %v669
          %v753 = vunpack.c.h.b16 %v669
          %v754 = vunpack.c.l.b16 %v670
          %v755 = vunpack.c.h.b16 %v670
          %v756 = vunpack.c.l.b16 %v671
          %v757 = vunpack.c.h.b16 %v671
          %v758 = vunpack.c.l.b16 %v672
          %v759 = vunpack.c.h.b16 %v672
          %v760 = vunpack.c.l.b16 %v673
          %v761 = vunpack.c.h.b16 %v673
          %v762 = vunpack.c.l.b16 %v674
          %v763 = vunpack.c.h.b16 %v674
          %v764 = vunpack.c.l.b16 %v675
          %v765 = vunpack.c.h.b16 %v675
          %v766 = vunpack.c.l.b16 %v676
          %v767 = vunpack.c.h.b16 %v676
          %v768 = vunpack.c.l.b16 %v677
          %v769 = vunpack.c.h.b16 %v677
          %v770 = vunpack.c.l.b16 %v678
          %v771 = vunpack.c.h.b16 %v678
          %v772 = vunpack.c.l.b16 %v679
          %v773 = vunpack.c.h.b16 %v679
          %v774 = vunpack.c.l.b16 %v680
          %v775 = vunpack.c.h.b16 %v680
          %v776 = vunpack.c.l.b16 %v681
          %v777 = vunpack.c.h.b16 %v681
          %v778 = vunpack.c.l.b16 %v682
          %v779 = vunpack.c.h.b16 %v682
          %v780 = vunpack.c.l.b16 %v683
          %v781 = vunpack.c.h.b16 %v683
          %v782 = vunpack.c.l.b16 %v684
          %v783 = vunpack.c.h.b16 %v684
          %v784 = vunpack.c.l.b16 %v685
          %v785 = vunpack.c.h.b16 %v685
          %v786 = vunpack.c.l.b16 %v686
          %v787 = vunpack.c.h.b16 %v686
          %v788 = vunpack.c.l.b16 %v687
          %v789 = vunpack.c.h.b16 %v687
          %v790 = vunpack.c.l.b16 %v688
          %v791 = vunpack.c.h.b16 %v688
          %v792 = vunpack.c.l.b16 %v689
          %v793 = vunpack.c.h.b16 %v689
          %v794 = vunpack.c.l.b16 %v690
          %v795 = vunpack.c.h.b16 %v690
          %v796 = vunpack.c.l.b16 %v691
          %v797 = vunpack.c.h.b16 %v691
          %v798 = vunpack.c.l.b16 %v692
          %v799 = vunpack.c.h.b16 %v692
          %v800 = vunpack.c.l.b16 %v693
          %v801 = vunpack.c.h.b16 %v693
          %v802 = vpack.c.b16 %v740, %v738
          %v803 = vpack.c.b16 %v741, %v739
          %v804 = vpack.c.b16 %v744, %v742
          %v805 = vpack.c.b16 %v745, %v743
          %v806 = vpack.c.b16 %v748, %v746
          %v807 = vpack.c.b16 %v749, %v747
          %v808 = vpack.c.b16 %v752, %v750
          %v809 = vpack.c.b16 %v753, %v751
          %v810 = vpack.c.b16 %v756, %v754
          %v811 = vpack.c.b16 %v757, %v755
          %v812 = vpack.c.b16 %v760, %v758
          %v813 = vpack.c.b16 %v761, %v759
          %v814 = vpack.c.b16 %v764, %v762
          %v815 = vpack.c.b16 %v765, %v763
          %v816 = vpack.c.b16 %v768, %v766
          %v817 = vpack.c.b16 %v769, %v767
          %v818 = vpack.c.b16 %v772, %v770
          %v819 = vpack.c.b16 %v773, %v771
          %v820 = vpack.c.b16 %v776, %v774
          %v821 = vpack.c.b16 %v777, %v775
          %v822 = vpack.c.b16 %v780, %v778
          %v823 = vpack.c.b16 %v781, %v779
          %v824 = vpack.c.b16 %v784, %v782
          %v825 = vpack.c.b16 %v785, %v783
          %v826 = vpack.c.b16 %v788, %v786
          %v827 = vpack.c.b16 %v789, %v787
          %v828 = vpack.c.b16 %v792, %v790
          %v829 = vpack.c.b16 %v793, %v791
          %v830 = vpack.c.b16 %v796, %v794
          %v831 = vpack.c.b16 %v797, %v795
          %v832 = vpack.c.b16 %v800, %v798
          %v833 = vpack.c.b16 %v801, %v799
          %866 = vmatprep.subr.bf16.mxu0 %v817
          %867 = vmatpush1.bf16.msra.mxu0 %v816
          %868 = vmatprep.subr.bf16.mxu0 %v815
          %869 = vmatpush1.bf16.msra.mxu0 %v814
          %870 = vmatprep.subr.bf16.mxu0 %v813
          %871 = vmatpush1.bf16.msra.mxu0 %v812
          %872 = vmatprep.subr.bf16.mxu0 %v811
          %873 = vmatpush1.bf16.msra.mxu0 %v810
          %874 = vmatprep.subr.bf16.mxu0 %v809
          %875 = vmatpush1.bf16.msra.mxu0 %v808
          %876 = vmatprep.subr.bf16.mxu0 %v807
          %877 = vmatpush1.bf16.msra.mxu0 %v806
          %878 = vmatprep.subr.bf16.mxu0 %v805
          %879 = vmatpush1.bf16.msra.mxu0 %v804
          %880 = vmatprep.subr.bf16.mxu0 %v803
          %881 = vmatpush1.bf16.msra.mxu0 %v802
          %882 = vmatprep.subr.bf16.mxu0 %v833
          %883 = vmatpush2.bf16.msra.mxu0 %v832
          %884 = vmatprep.subr.bf16.mxu0 %v831
          %885 = vmatpush2.bf16.msra.mxu0 %v830
          %886 = vmatprep.subr.bf16.mxu0 %v829
          %887 = vmatpush2.bf16.msra.mxu0 %v828
          %888 = vmatprep.subr.bf16.mxu0 %v827
          %889 = vmatpush2.bf16.msra.mxu0 %v826
          %890 = vmatprep.subr.bf16.mxu0 %v825
          %891 = vmatpush2.bf16.msra.mxu0 %v824
          %892 = vmatprep.subr.bf16.mxu0 %v823
          %893 = vmatpush2.bf16.msra.mxu0 %v822
          %894 = vmatprep.subr.bf16.mxu0 %v821
          %895 = vmatpush2.bf16.msra.mxu0 %v820
          %896 = vmatprep.subr.bf16.mxu0 %v819
          %897 = vmatpush2.bf16.msra.mxu0 %v818
          %898 = vmatprep.mubr.bf16.mxu0 %v599
          %899 = vmatmul.mubr.bf16.gmra.mxu0 %v598
          %v900 = vpop.f32.mrf.mxu0
          %v901 = vadd.f32 %v699, %v900
          %v902 = vpop.f32.mrf.mxu0
          %v903 = vadd.f32 %v703, %v902
          %v904 = vpop.f32.mrf.mxu0
          %v905 = vadd.f32 %v699, %v904
          %v906 = vpop.f32.mrf.mxu0
          %v907 = vadd.f32 %v703, %v906
          %908 = vmatprep.mubr.bf16.mxu0 %v601
          %909 = vmatmul.mubr.bf16.gmra.mxu0 %v600
          %v910 = vpop.f32.mrf.mxu0
          %v911 = vadd.f32 %v699, %v910
          %v912 = vpop.f32.mrf.mxu0
          %v913 = vadd.f32 %v703, %v912
          %v914 = vpop.f32.mrf.mxu0
          %v915 = vadd.f32 %v699, %v914
          %v916 = vpop.f32.mrf.mxu0
          %v917 = vadd.f32 %v703, %v916
          %918 = vmatprep.mubr.bf16.mxu0 %v603
          %919 = vmatmul.mubr.bf16.gmra.mxu0 %v602
          %v920 = vpop.f32.mrf.mxu0
          %v921 = vadd.f32 %v699, %v920
          %v922 = vpop.f32.mrf.mxu0
          %v923 = vadd.f32 %v703, %v922
          %v924 = vpop.f32.mrf.mxu0
          %v925 = vadd.f32 %v699, %v924
          %v926 = vpop.f32.mrf.mxu0
          %v927 = vadd.f32 %v703, %v926
          %928 = vmatprep.mubr.bf16.mxu0 %v605
          %929 = vmatmul.mubr.bf16.gmra.mxu0 %v604
          %v930 = vpop.f32.mrf.mxu0
          %v931 = vadd.f32 %v699, %v930
          %v932 = vpop.f32.mrf.mxu0
          %v933 = vadd.f32 %v703, %v932
          %v934 = vpop.f32.mrf.mxu0
          %v935 = vadd.f32 %v699, %v934
          %v936 = vpop.f32.mrf.mxu0
          %v937 = vadd.f32 %v703, %v936
          %938 = vmatprep.mubr.bf16.mxu0 %v607
          %939 = vmatmul.mubr.bf16.gmra.mxu0 %v606
          %v940 = vpop.f32.mrf.mxu0
          %v941 = vadd.f32 %v699, %v940
          %v942 = vpop.f32.mrf.mxu0
          %v943 = vadd.f32 %v703, %v942
          %v944 = vpop.f32.mrf.mxu0
          %v945 = vadd.f32 %v699, %v944
          %v946 = vpop.f32.mrf.mxu0
          %v947 = vadd.f32 %v703, %v946
          %948 = vmatprep.mubr.bf16.mxu0 %v609
          %949 = vmatmul.mubr.bf16.gmra.mxu0 %v608
          %v950 = vpop.f32.mrf.mxu0
          %v951 = vadd.f32 %v699, %v950
          %v952 = vpop.f32.mrf.mxu0
          %v953 = vadd.f32 %v703, %v952
          %v954 = vpop.f32.mrf.mxu0
          %v955 = vadd.f32 %v699, %v954
          %v956 = vpop.f32.mrf.mxu0
          %v957 = vadd.f32 %v703, %v956
          %958 = vmatprep.mubr.bf16.mxu0 %v611
          %959 = vmatmul.mubr.bf16.gmra.mxu0 %v610
          %v960 = vpop.f32.mrf.mxu0
          %v961 = vadd.f32 %v699, %v960
          %v962 = vpop.f32.mrf.mxu0
          %v963 = vadd.f32 %v703, %v962
          %v964 = vpop.f32.mrf.mxu0
          %v965 = vadd.f32 %v699, %v964
          %v966 = vpop.f32.mrf.mxu0
          %v967 = vadd.f32 %v703, %v966
          %968 = vmatprep.mubr.bf16.mxu0 %v613
          %969 = vmatmul.mubr.bf16.gmra.mxu0 %v612
          %v970 = vpop.f32.mrf.mxu0
          %v971 = vadd.f32 %v699, %v970
          %v972 = vpop.f32.mrf.mxu0
          %v973 = vadd.f32 %v703, %v972
          %v974 = vpop.f32.mrf.mxu0
          %v975 = vadd.f32 %v699, %v974
          %v976 = vpop.f32.mrf.mxu0
          %v977 = vadd.f32 %v703, %v976
          %978 = vdwg.mxu0
          %v979 = vpack.c.bf16 %v905, %v901
          %v980 = vpack.c.bf16 %v907, %v903
          %v981 = vpack.c.bf16 %v915, %v911
          %v982 = vpack.c.bf16 %v917, %v913
          %v983 = vpack.c.bf16 %v925, %v921
          %v984 = vpack.c.bf16 %v927, %v923
          %v985 = vpack.c.bf16 %v935, %v931
          %v986 = vpack.c.bf16 %v937, %v933
          %v987 = vpack.c.bf16 %v945, %v941
          %v988 = vpack.c.bf16 %v947, %v943
          %v989 = vpack.c.bf16 %v955, %v951
          %v990 = vpack.c.bf16 %v957, %v953
          %v991 = vpack.c.bf16 %v965, %v961
          %v992 = vpack.c.bf16 %v967, %v963
          %v993 = vpack.c.bf16 %v975, %v971
          %v994 = vpack.c.bf16 %v977, %v973
          %v1011 = vunpack.c.l.b16 %v979
          %v1012 = vunpack.c.l.b16 %v980
          %v1013 = vunpack.c.h.b16 %v979
          %v1014 = vunpack.c.h.b16 %v980
          %v1015 = vunpack.c.l.b16 %v981
          %v1016 = vunpack.c.l.b16 %v982
          %v1017 = vunpack.c.h.b16 %v981
          %v1018 = vunpack.c.h.b16 %v982
          %v1019 = vunpack.c.l.b16 %v983
          %v1020 = vunpack.c.l.b16 %v984
          %v1021 = vunpack.c.h.b16 %v983
          %v1022 = vunpack.c.h.b16 %v984
          %v1023 = vunpack.c.l.b16 %v985
          %v1024 = vunpack.c.l.b16 %v986
          %v1025 = vunpack.c.h.b16 %v985
          %v1026 = vunpack.c.h.b16 %v986
          %v1027 = vunpack.c.l.b16 %v987
          %v1028 = vunpack.c.l.b16 %v988
          %v1029 = vunpack.c.h.b16 %v987
          %v1030 = vunpack.c.h.b16 %v988
          %v1031 = vunpack.c.l.b16 %v989
          %v1032 = vunpack.c.l.b16 %v990
          %v1033 = vunpack.c.h.b16 %v989
          %v1034 = vunpack.c.h.b16 %v990
          %v1035 = vunpack.c.l.b16 %v991
          %v1036 = vunpack.c.l.b16 %v992
          %v1037 = vunpack.c.h.b16 %v991
          %v1038 = vunpack.c.h.b16 %v992
          %v1039 = vunpack.c.l.b16 %v993
          %v1040 = vunpack.c.l.b16 %v994
          %v1041 = vunpack.c.h.b16 %v993
          %v1042 = vunpack.c.h.b16 %v994
          %v1043 = vpack.c.b16 %v1012, %v1011
          %v1044 = vpack.c.b16 %v1014, %v1013
          %v1045 = vpack.c.b16 %v1016, %v1015
          %v1046 = vpack.c.b16 %v1018, %v1017
          %v1047 = vpack.c.b16 %v1020, %v1019
          %v1048 = vpack.c.b16 %v1022, %v1021
          %v1049 = vpack.c.b16 %v1024, %v1023
          %v1050 = vpack.c.b16 %v1026, %v1025
          %v1051 = vpack.c.b16 %v1028, %v1027
          %v1052 = vpack.c.b16 %v1030, %v1029
          %v1053 = vpack.c.b16 %v1032, %v1031
          %v1054 = vpack.c.b16 %v1034, %v1033
          %v1055 = vpack.c.b16 %v1036, %v1035
          %v1056 = vpack.c.b16 %v1038, %v1037
          %v1057 = vpack.c.b16 %v1040, %v1039
          %v1058 = vpack.c.b16 %v1042, %v1041
          %1075 = vst [vmem:[#allocation3] sm:$0xff] %v1043
          %1076 = vst [vmem:[#allocation3 + $0x8] sm:$0xff] %v1044
          %1077 = vst [vmem:[#allocation3 + $0x10] sm:$0xff] %v1045
          %1078 = vst [vmem:[#allocation3 + $0x18] sm:$0xff] %v1046
          %1079 = vst [vmem:[#allocation3 + $0x20] sm:$0xff] %v1047
          %1080 = vst [vmem:[#allocation3 + $0x28] sm:$0xff] %v1048
          %1081 = vst [vmem:[#allocation3 + $0x30] sm:$0xff] %v1049
          %1082 = vst [vmem:[#allocation3 + $0x38] sm:$0xff] %v1050
          %1083 = vst [vmem:[#allocation3 + $0x40] sm:$0xff] %v1051
          %1084 = vst [vmem:[#allocation3 + $0x48] sm:$0xff] %v1052
          %1085 = vst [vmem:[#allocation3 + $0x50] sm:$0xff] %v1053
          %1086 = vst [vmem:[#allocation3 + $0x58] sm:$0xff] %v1054
          %1087 = vst [vmem:[#allocation3 + $0x60] sm:$0xff] %v1055
          %1088 = vst [vmem:[#allocation3 + $0x68] sm:$0xff] %v1056
          %1089 = vst [vmem:[#allocation3 + $0x70] sm:$0xff] %v1057
          %1090 = vst [vmem:[#allocation3 + $0x78] sm:$0xff] %v1058
          %v1091 = vld [vmem:[#allocation14] sm:$0xff]
          %v1092 = vld [vmem:[#allocation14 + $0x8] sm:$0xff]
          %v1093 = vld [vmem:[#allocation14 + $0x10] sm:$0xff]
          %v1094 = vld [vmem:[#allocation14 + $0x18] sm:$0xff]
          %v1095 = vld [vmem:[#allocation14 + $0x20] sm:$0xff]
          %v1096 = vld [vmem:[#allocation14 + $0x28] sm:$0xff]
          %v1097 = vld [vmem:[#allocation14 + $0x30] sm:$0xff]
          %v1098 = vld [vmem:[#allocation14 + $0x38] sm:$0xff]
          %v1099 = vld [vmem:[#allocation14 + $0x40] sm:$0xff]
          %v1100 = vld [vmem:[#allocation14 + $0x48] sm:$0xff]
          %v1101 = vld [vmem:[#allocation14 + $0x50] sm:$0xff]
          %v1102 = vld [vmem:[#allocation14 + $0x58] sm:$0xff]
          %v1103 = vld [vmem:[#allocation14 + $0x60] sm:$0xff]
          %v1104 = vld [vmem:[#allocation14 + $0x68] sm:$0xff]
          %v1105 = vld [vmem:[#allocation14 + $0x70] sm:$0xff]
          %v1106 = vld [vmem:[#allocation14 + $0x78] sm:$0xff]
          %v1107 = vld [vmem:[#allocation14 + $0x80] sm:$0xff]
          %v1108 = vld [vmem:[#allocation14 + $0x88] sm:$0xff]
          %v1109 = vld [vmem:[#allocation14 + $0x90] sm:$0xff]
          %v1110 = vld [vmem:[#allocation14 + $0x98] sm:$0xff]
          %v1111 = vld [vmem:[#allocation14 + $0xa0] sm:$0xff]
          %v1112 = vld [vmem:[#allocation14 + $0xa8] sm:$0xff]
          %v1113 = vld [vmem:[#allocation14 + $0xb0] sm:$0xff]
          %v1114 = vld [vmem:[#allocation14 + $0xb8] sm:$0xff]
          %v1115 = vld [vmem:[#allocation14 + $0xc0] sm:$0xff]
          %v1116 = vld [vmem:[#allocation14 + $0xc8] sm:$0xff]
          %v1117 = vld [vmem:[#allocation14 + $0xd0] sm:$0xff]
          %v1118 = vld [vmem:[#allocation14 + $0xd8] sm:$0xff]
          %v1119 = vld [vmem:[#allocation14 + $0xe0] sm:$0xff]
          %v1120 = vld [vmem:[#allocation14 + $0xe8] sm:$0xff]
          %v1121 = vld [vmem:[#allocation14 + $0xf0] sm:$0xff]
          %v1122 = vld [vmem:[#allocation14 + $0xf8] sm:$0xff]
          %v1123 = vld [vmem:[%s9] sm:$0x3]
          %v1125 = vlaneseq
          %v1126 = vshrl.u32 %v1125, 7
          %v1127 = vsub.s32 0, %v1126
          %v1128 = vrot.slane %v1123, %v1127
          %v1129 = vlaneseq
          %v1130 = vshrl.u32 %v1129, 7
          %v1131 = vsub.s32 1, %v1130
          %v1132 = vrot.slane %v1123, %v1131
          %v1167 = vunpack.c.l.b16 %v1091
          %v1168 = vunpack.c.h.b16 %v1091
          %v1169 = vunpack.c.l.b16 %v1092
          %v1170 = vunpack.c.h.b16 %v1092
          %v1171 = vunpack.c.l.b16 %v1093
          %v1172 = vunpack.c.h.b16 %v1093
          %v1173 = vunpack.c.l.b16 %v1094
          %v1174 = vunpack.c.h.b16 %v1094
          %v1175 = vunpack.c.l.b16 %v1095
          %v1176 = vunpack.c.h.b16 %v1095
          %v1177 = vunpack.c.l.b16 %v1096
          %v1178 = vunpack.c.h.b16 %v1096
          %v1179 = vunpack.c.l.b16 %v1097
          %v1180 = vunpack.c.h.b16 %v1097
          %v1181 = vunpack.c.l.b16 %v1098
          %v1182 = vunpack.c.h.b16 %v1098
          %v1183 = vunpack.c.l.b16 %v1099
          %v1184 = vunpack.c.h.b16 %v1099
          %v1185 = vunpack.c.l.b16 %v1100
          %v1186 = vunpack.c.h.b16 %v1100
          %v1187 = vunpack.c.l.b16 %v1101
          %v1188 = vunpack.c.h.b16 %v1101
          %v1189 = vunpack.c.l.b16 %v1102
          %v1190 = vunpack.c.h.b16 %v1102
          %v1191 = vunpack.c.l.b16 %v1103
          %v1192 = vunpack.c.h.b16 %v1103
          %v1193 = vunpack.c.l.b16 %v1104
          %v1194 = vunpack.c.h.b16 %v1104
          %v1195 = vunpack.c.l.b16 %v1105
          %v1196 = vunpack.c.h.b16 %v1105
          %v1197 = vunpack.c.l.b16 %v1106
          %v1198 = vunpack.c.h.b16 %v1106
          %v1199 = vunpack.c.l.b16 %v1107
          %v1200 = vunpack.c.h.b16 %v1107
          %v1201 = vunpack.c.l.b16 %v1108
          %v1202 = vunpack.c.h.b16 %v1108
          %v1203 = vunpack.c.l.b16 %v1109
          %v1204 = vunpack.c.h.b16 %v1109
          %v1205 = vunpack.c.l.b16 %v1110
          %v1206 = vunpack.c.h.b16 %v1110
          %v1207 = vunpack.c.l.b16 %v1111
          %v1208 = vunpack.c.h.b16 %v1111
          %v1209 = vunpack.c.l.b16 %v1112
          %v1210 = vunpack.c.h.b16 %v1112
          %v1211 = vunpack.c.l.b16 %v1113
          %v1212 = vunpack.c.h.b16 %v1113
          %v1213 = vunpack.c.l.b16 %v1114
          %v1214 = vunpack.c.h.b16 %v1114
          %v1215 = vunpack.c.l.b16 %v1115
          %v1216 = vunpack.c.h.b16 %v1115
          %v1217 = vunpack.c.l.b16 %v1116
          %v1218 = vunpack.c.h.b16 %v1116
          %v1219 = vunpack.c.l.b16 %v1117
          %v1220 = vunpack.c.h.b16 %v1117
          %v1221 = vunpack.c.l.b16 %v1118
          %v1222 = vunpack.c.h.b16 %v1118
          %v1223 = vunpack.c.l.b16 %v1119
          %v1224 = vunpack.c.h.b16 %v1119
          %v1225 = vunpack.c.l.b16 %v1120
          %v1226 = vunpack.c.h.b16 %v1120
          %v1227 = vunpack.c.l.b16 %v1121
          %v1228 = vunpack.c.h.b16 %v1121
          %v1229 = vunpack.c.l.b16 %v1122
          %v1230 = vunpack.c.h.b16 %v1122
          %v1231 = vpack.c.b16 %v1169, %v1167
          %v1232 = vpack.c.b16 %v1170, %v1168
          %v1233 = vpack.c.b16 %v1173, %v1171
          %v1234 = vpack.c.b16 %v1174, %v1172
          %v1235 = vpack.c.b16 %v1177, %v1175
          %v1236 = vpack.c.b16 %v1178, %v1176
          %v1237 = vpack.c.b16 %v1181, %v1179
          %v1238 = vpack.c.b16 %v1182, %v1180
          %v1239 = vpack.c.b16 %v1185, %v1183
          %v1240 = vpack.c.b16 %v1186, %v1184
          %v1241 = vpack.c.b16 %v1189, %v1187
          %v1242 = vpack.c.b16 %v1190, %v1188
          %v1243 = vpack.c.b16 %v1193, %v1191
          %v1244 = vpack.c.b16 %v1194, %v1192
          %v1245 = vpack.c.b16 %v1197, %v1195
          %v1246 = vpack.c.b16 %v1198, %v1196
          %v1247 = vpack.c.b16 %v1201, %v1199
          %v1248 = vpack.c.b16 %v1202, %v1200
          %v1249 = vpack.c.b16 %v1205, %v1203
          %v1250 = vpack.c.b16 %v1206, %v1204
          %v1251 = vpack.c.b16 %v1209, %v1207
          %v1252 = vpack.c.b16 %v1210, %v1208
          %v1253 = vpack.c.b16 %v1213, %v1211
          %v1254 = vpack.c.b16 %v1214, %v1212
          %v1255 = vpack.c.b16 %v1217, %v1215
          %v1256 = vpack.c.b16 %v1218, %v1216
          %v1257 = vpack.c.b16 %v1221, %v1219
          %v1258 = vpack.c.b16 %v1222, %v1220
          %v1259 = vpack.c.b16 %v1225, %v1223
          %v1260 = vpack.c.b16 %v1226, %v1224
          %v1261 = vpack.c.b16 %v1229, %v1227
          %v1262 = vpack.c.b16 %v1230, %v1228
          %1295 = vmatprep.subr.bf16.mxu0 %v1246
          %1296 = vmatpush1.bf16.msra.mxu0 %v1245
          %1297 = vmatprep.subr.bf16.mxu0 %v1244
          %1298 = vmatpush1.bf16.msra.mxu0 %v1243
          %1299 = vmatprep.subr.bf16.mxu0 %v1242
          %1300 = vmatpush1.bf16.msra.mxu0 %v1241
          %1301 = vmatprep.subr.bf16.mxu0 %v1240
          %1302 = vmatpush1.bf16.msra.mxu0 %v1239
          %1303 = vmatprep.subr.bf16.mxu0 %v1238
          %1304 = vmatpush1.bf16.msra.mxu0 %v1237
          %1305 = vmatprep.subr.bf16.mxu0 %v1236
          %1306 = vmatpush1.bf16.msra.mxu0 %v1235
          %1307 = vmatprep.subr.bf16.mxu0 %v1234
          %1308 = vmatpush1.bf16.msra.mxu0 %v1233
          %1309 = vmatprep.subr.bf16.mxu0 %v1232
          %1310 = vmatpush1.bf16.msra.mxu0 %v1231
          %1311 = vmatprep.subr.bf16.mxu0 %v1262
          %1312 = vmatpush2.bf16.msra.mxu0 %v1261
          %1313 = vmatprep.subr.bf16.mxu0 %v1260
          %1314 = vmatpush2.bf16.msra.mxu0 %v1259
          %1315 = vmatprep.subr.bf16.mxu0 %v1258
          %1316 = vmatpush2.bf16.msra.mxu0 %v1257
          %1317 = vmatprep.subr.bf16.mxu0 %v1256
          %1318 = vmatpush2.bf16.msra.mxu0 %v1255
          %1319 = vmatprep.subr.bf16.mxu0 %v1254
          %1320 = vmatpush2.bf16.msra.mxu0 %v1253
          %1321 = vmatprep.subr.bf16.mxu0 %v1252
          %1322 = vmatpush2.bf16.msra.mxu0 %v1251
          %1323 = vmatprep.subr.bf16.mxu0 %v1250
          %1324 = vmatpush2.bf16.msra.mxu0 %v1249
          %1325 = vmatprep.subr.bf16.mxu0 %v1248
          %1326 = vmatpush2.bf16.msra.mxu0 %v1247
          %1327 = vmatprep.mubr.bf16.mxu0 %v647
          %1328 = vmatmul.mubr.bf16.gmra.mxu0 %v646
          %v1329 = vpop.f32.mrf.mxu0
          %v1330 = vadd.f32 %v1128, %v1329
          %v1331 = vpop.f32.mrf.mxu0
          %v1332 = vadd.f32 %v1132, %v1331
          %v1333 = vpop.f32.mrf.mxu0
          %v1334 = vadd.f32 %v1128, %v1333
          %v1335 = vpop.f32.mrf.mxu0
          %v1336 = vadd.f32 %v1132, %v1335
          %1337 = vmatprep.mubr.bf16.mxu0 %v649
          %1338 = vmatmul.mubr.bf16.gmra.mxu0 %v648
          %v1339 = vpop.f32.mrf.mxu0
          %v1340 = vadd.f32 %v1128, %v1339
          %v1341 = vpop.f32.mrf.mxu0
          %v1342 = vadd.f32 %v1132, %v1341
          %v1343 = vpop.f32.mrf.mxu0
          %v1344 = vadd.f32 %v1128, %v1343
          %v1345 = vpop.f32.mrf.mxu0
          %v1346 = vadd.f32 %v1132, %v1345
          %1347 = vmatprep.mubr.bf16.mxu0 %v651
          %1348 = vmatmul.mubr.bf16.gmra.mxu0 %v650
          %v1349 = vpop.f32.mrf.mxu0
          %v1350 = vadd.f32 %v1128, %v1349
          %v1351 = vpop.f32.mrf.mxu0
          %v1352 = vadd.f32 %v1132, %v1351
          %v1353 = vpop.f32.mrf.mxu0
          %v1354 = vadd.f32 %v1128, %v1353
          %v1355 = vpop.f32.mrf.mxu0
          %v1356 = vadd.f32 %v1132, %v1355
          %1357 = vmatprep.mubr.bf16.mxu0 %v653
          %1358 = vmatmul.mubr.bf16.gmra.mxu0 %v652
          %v1359 = vpop.f32.mrf.mxu0
          %v1360 = vadd.f32 %v1128, %v1359
          %v1361 = vpop.f32.mrf.mxu0
          %v1362 = vadd.f32 %v1132, %v1361
          %v1363 = vpop.f32.mrf.mxu0
          %v1364 = vadd.f32 %v1128, %v1363
          %v1365 = vpop.f32.mrf.mxu0
          %v1366 = vadd.f32 %v1132, %v1365
          %1367 = vmatprep.mubr.bf16.mxu0 %v655
          %1368 = vmatmul.mubr.bf16.gmra.mxu0 %v654
          %v1369 = vpop.f32.mrf.mxu0
          %v1370 = vadd.f32 %v1128, %v1369
          %v1371 = vpop.f32.mrf.mxu0
          %v1372 = vadd.f32 %v1132, %v1371
          %v1373 = vpop.f32.mrf.mxu0
          %v1374 = vadd.f32 %v1128, %v1373
          %v1375 = vpop.f32.mrf.mxu0
          %v1376 = vadd.f32 %v1132, %v1375
          %1377 = vmatprep.mubr.bf16.mxu0 %v657
          %1378 = vmatmul.mubr.bf16.gmra.mxu0 %v656
          %v1379 = vpop.f32.mrf.mxu0
          %v1380 = vadd.f32 %v1128, %v1379
          %v1381 = vpop.f32.mrf.mxu0
          %v1382 = vadd.f32 %v1132, %v1381
          %v1383 = vpop.f32.mrf.mxu0
          %v1384 = vadd.f32 %v1128, %v1383
          %v1385 = vpop.f32.mrf.mxu0
          %v1386 = vadd.f32 %v1132, %v1385
          %1387 = vmatprep.mubr.bf16.mxu0 %v659
          %1388 = vmatmul.mubr.bf16.gmra.mxu0 %v658
          %v1389 = vpop.f32.mrf.mxu0
          %v1390 = vadd.f32 %v1128, %v1389
          %v1391 = vpop.f32.mrf.mxu0
          %v1392 = vadd.f32 %v1132, %v1391
          %v1393 = vpop.f32.mrf.mxu0
          %v1394 = vadd.f32 %v1128, %v1393
          %v1395 = vpop.f32.mrf.mxu0
          %v1396 = vadd.f32 %v1132, %v1395
          %1397 = vmatprep.mubr.bf16.mxu0 %v661
          %1398 = vmatmul.mubr.bf16.gmra.mxu0 %v660
          %v1399 = vpop.f32.mrf.mxu0
          %v1400 = vadd.f32 %v1128, %v1399
          %v1401 = vpop.f32.mrf.mxu0
          %v1402 = vadd.f32 %v1132, %v1401
          %v1403 = vpop.f32.mrf.mxu0
          %v1404 = vadd.f32 %v1128, %v1403
          %v1405 = vpop.f32.mrf.mxu0
          %v1406 = vadd.f32 %v1132, %v1405
          %1407 = vdwg.mxu0
          %v1408 = vpack.c.bf16 %v1334, %v1330
          %v1409 = vpack.c.bf16 %v1336, %v1332
          %v1410 = vpack.c.bf16 %v1344, %v1340
          %v1411 = vpack.c.bf16 %v1346, %v1342
          %v1412 = vpack.c.bf16 %v1354, %v1350
          %v1413 = vpack.c.bf16 %v1356, %v1352
          %v1414 = vpack.c.bf16 %v1364, %v1360
          %v1415 = vpack.c.bf16 %v1366, %v1362
          %v1416 = vpack.c.bf16 %v1374, %v1370
          %v1417 = vpack.c.bf16 %v1376, %v1372
          %v1418 = vpack.c.bf16 %v1384, %v1380
          %v1419 = vpack.c.bf16 %v1386, %v1382
          %v1420 = vpack.c.bf16 %v1394, %v1390
          %v1421 = vpack.c.bf16 %v1396, %v1392
          %v1422 = vpack.c.bf16 %v1404, %v1400
          %v1423 = vpack.c.bf16 %v1406, %v1402
          %v1440 = vunpack.c.l.b16 %v1408
          %v1441 = vunpack.c.l.b16 %v1409
          %v1442 = vunpack.c.h.b16 %v1408
          %v1443 = vunpack.c.h.b16 %v1409
          %v1444 = vunpack.c.l.b16 %v1410
          %v1445 = vunpack.c.l.b16 %v1411
          %v1446 = vunpack.c.h.b16 %v1410
          %v1447 = vunpack.c.h.b16 %v1411
          %v1448 = vunpack.c.l.b16 %v1412
          %v1449 = vunpack.c.l.b16 %v1413
          %v1450 = vunpack.c.h.b16 %v1412
          %v1451 = vunpack.c.h.b16 %v1413
          %v1452 = vunpack.c.l.b16 %v1414
          %v1453 = vunpack.c.l.b16 %v1415
          %v1454 = vunpack.c.h.b16 %v1414
          %v1455 = vunpack.c.h.b16 %v1415
          %v1456 = vunpack.c.l.b16 %v1416
          %v1457 = vunpack.c.l.b16 %v1417
          %v1458 = vunpack.c.h.b16 %v1416
          %v1459 = vunpack.c.h.b16 %v1417
          %v1460 = vunpack.c.l.b16 %v1418
          %v1461 = vunpack.c.l.b16 %v1419
          %v1462 = vunpack.c.h.b16 %v1418
          %v1463 = vunpack.c.h.b16 %v1419
          %v1464 = vunpack.c.l.b16 %v1420
          %v1465 = vunpack.c.l.b16 %v1421
          %v1466 = vunpack.c.h.b16 %v1420
          %v1467 = vunpack.c.h.b16 %v1421
          %v1468 = vunpack.c.l.b16 %v1422
          %v1469 = vunpack.c.l.b16 %v1423
          %v1470 = vunpack.c.h.b16 %v1422
          %v1471 = vunpack.c.h.b16 %v1423
          %v1472 = vpack.c.b16 %v1441, %v1440
          %v1473 = vpack.c.b16 %v1443, %v1442
          %v1474 = vpack.c.b16 %v1445, %v1444
          %v1475 = vpack.c.b16 %v1447, %v1446
          %v1476 = vpack.c.b16 %v1449, %v1448
          %v1477 = vpack.c.b16 %v1451, %v1450
          %v1478 = vpack.c.b16 %v1453, %v1452
          %v1479 = vpack.c.b16 %v1455, %v1454
          %v1480 = vpack.c.b16 %v1457, %v1456
          %v1481 = vpack.c.b16 %v1459, %v1458
          %v1482 = vpack.c.b16 %v1461, %v1460
          %v1483 = vpack.c.b16 %v1463, %v1462
          %v1484 = vpack.c.b16 %v1465, %v1464
          %v1485 = vpack.c.b16 %v1467, %v1466
          %v1486 = vpack.c.b16 %v1469, %v1468
          %v1487 = vpack.c.b16 %v1471, %v1470
          %1504 = vst [vmem:[#allocation4] sm:$0xff] %v1472
          %1505 = vst [vmem:[#allocation4 + $0x8] sm:$0xff] %v1473
          %1506 = vst [vmem:[#allocation4 + $0x10] sm:$0xff] %v1474
          %1507 = vst [vmem:[#allocation4 + $0x18] sm:$0xff] %v1475
          %1508 = vst [vmem:[#allocation4 + $0x20] sm:$0xff] %v1476
          %1509 = vst [vmem:[#allocation4 + $0x28] sm:$0xff] %v1477
          %1510 = vst [vmem:[#allocation4 + $0x30] sm:$0xff] %v1478
          %1511 = vst [vmem:[#allocation4 + $0x38] sm:$0xff] %v1479
          %1512 = vst [vmem:[#allocation4 + $0x40] sm:$0xff] %v1480
          %1513 = vst [vmem:[#allocation4 + $0x48] sm:$0xff] %v1481
          %1514 = vst [vmem:[#allocation4 + $0x50] sm:$0xff] %v1482
          %1515 = vst [vmem:[#allocation4 + $0x58] sm:$0xff] %v1483
          %1516 = vst [vmem:[#allocation4 + $0x60] sm:$0xff] %v1484
          %1517 = vst [vmem:[#allocation4 + $0x68] sm:$0xff] %v1485
          %1518 = vst [vmem:[#allocation4 + $0x70] sm:$0xff] %v1486
          %1519 = vst [vmem:[#allocation4 + $0x78] sm:$0xff] %v1487
        $region96: #{tpu_custom_call.1} parent=63 // pred_fallthru
          _
        %v1520 = vld [vmem:[%s476] sm:$0xff]
        %v1521 = vld [vmem:[%s476 + $0x8] sm:$0xff]
        %v1522 = vld [vmem:[%s476 + $0x10] sm:$0xff]
        %v1523 = vld [vmem:[%s476 + $0x18] sm:$0xff]
        %v1524 = vld [vmem:[%s476 + $0x20] sm:$0xff]
        %v1525 = vld [vmem:[%s476 + $0x28] sm:$0xff]
        %v1526 = vld [vmem:[%s476 + $0x30] sm:$0xff]
        %v1527 = vld [vmem:[%s476 + $0x38] sm:$0xff]
        %v1528 = vld [vmem:[%s476 + $0x40] sm:$0xff]
        %v1529 = vld [vmem:[%s476 + $0x48] sm:$0xff]
        %v1530 = vld [vmem:[%s476 + $0x50] sm:$0xff]
        %v1531 = vld [vmem:[%s476 + $0x58] sm:$0xff]
        %v1532 = vld [vmem:[%s476 + $0x60] sm:$0xff]
        %v1533 = vld [vmem:[%s476 + $0x68] sm:$0xff]
        %v1534 = vld [vmem:[%s476 + $0x70] sm:$0xff]
        %v1535 = vld [vmem:[%s476 + $0x78] sm:$0xff]
        %v1536 = vld [vmem:[%s476 + $0x80] sm:$0xff]
        %v1537 = vld [vmem:[%s476 + $0x88] sm:$0xff]
        %v1538 = vld [vmem:[%s476 + $0x90] sm:$0xff]
        %v1539 = vld [vmem:[%s476 + $0x98] sm:$0xff]
        %v1540 = vld [vmem:[%s476 + $0xa0] sm:$0xff]
        %v1541 = vld [vmem:[%s476 + $0xa8] sm:$0xff]
        %v1542 = vld [vmem:[%s476 + $0xb0] sm:$0xff]
        %v1543 = vld [vmem:[%s476 + $0xb8] sm:$0xff]
        %v1544 = vld [vmem:[%s476 + $0xc0] sm:$0xff]
        %v1545 = vld [vmem:[%s476 + $0xc8] sm:$0xff]
        %v1546 = vld [vmem:[%s476 + $0xd0] sm:$0xff]
        %v1547 = vld [vmem:[%s476 + $0xd8] sm:$0xff]
        %v1548 = vld [vmem:[%s476 + $0xe0] sm:$0xff]
        %v1549 = vld [vmem:[%s476 + $0xe8] sm:$0xff]
        %v1550 = vld [vmem:[%s476 + $0xf0] sm:$0xff]
        %v1551 = vld [vmem:[%s476 + $0xf8] sm:$0xff]
        %v1552 = vpack.c.bf16 %v1522, %v1520
        %v1553 = vpack.c.bf16 %v1523, %v1521
        %v1554 = vpack.c.bf16 %v1526, %v1524
        %v1555 = vpack.c.bf16 %v1527, %v1525
        %v1556 = vpack.c.bf16 %v1530, %v1528
        %v1557 = vpack.c.bf16 %v1531, %v1529
        %v1558 = vpack.c.bf16 %v1534, %v1532
        %v1559 = vpack.c.bf16 %v1535, %v1533
        %v1560 = vpack.c.bf16 %v1538, %v1536
        %v1561 = vpack.c.bf16 %v1539, %v1537
        %v1562 = vpack.c.bf16 %v1542, %v1540
        %v1563 = vpack.c.bf16 %v1543, %v1541
        %v1564 = vpack.c.bf16 %v1546, %v1544
        %v1565 = vpack.c.bf16 %v1547, %v1545
        %v1566 = vpack.c.bf16 %v1550, %v1548
        %v1567 = vpack.c.bf16 %v1551, %v1549
        %v1568 = vld [vmem:[#allocation11] sm:$0xff]
        %v1569 = vld [vmem:[#allocation11 + $0x8] sm:$0xff]
        %v1570 = vld [vmem:[#allocation11 + $0x10] sm:$0xff]
        %v1571 = vld [vmem:[#allocation11 + $0x18] sm:$0xff]
        %v1572 = vld [vmem:[#allocation11 + $0x20] sm:$0xff]
        %v1573 = vld [vmem:[#allocation11 + $0x28] sm:$0xff]
        %v1574 = vld [vmem:[#allocation11 + $0x30] sm:$0xff]
        %v1575 = vld [vmem:[#allocation11 + $0x38] sm:$0xff]
        %v1576 = vld [vmem:[#allocation11 + $0x40] sm:$0xff]
        %v1577 = vld [vmem:[#allocation11 + $0x48] sm:$0xff]
        %v1578 = vld [vmem:[#allocation11 + $0x50] sm:$0xff]
        %v1579 = vld [vmem:[#allocation11 + $0x58] sm:$0xff]
        %v1580 = vld [vmem:[#allocation11 + $0x60] sm:$0xff]
        %v1581 = vld [vmem:[#allocation11 + $0x68] sm:$0xff]
        %v1582 = vld [vmem:[#allocation11 + $0x70] sm:$0xff]
        %v1583 = vld [vmem:[#allocation11 + $0x78] sm:$0xff]
        %v1584 = vld [vmem:[#allocation11 + $0x80] sm:$0xff]
        %v1585 = vld [vmem:[#allocation11 + $0x88] sm:$0xff]
        %v1586 = vld [vmem:[#allocation11 + $0x90] sm:$0xff]
        %v1587 = vld [vmem:[#allocation11 + $0x98] sm:$0xff]
        %v1588 = vld [vmem:[#allocation11 + $0xa0] sm:$0xff]
        %v1589 = vld [vmem:[#allocation11 + $0xa8] sm:$0xff]
        %v1590 = vld [vmem:[#allocation11 + $0xb0] sm:$0xff]
        %v1591 = vld [vmem:[#allocation11 + $0xb8] sm:$0xff]
        %v1592 = vld [vmem:[#allocation11 + $0xc0] sm:$0xff]
        %v1593 = vld [vmem:[#allocation11 + $0xc8] sm:$0xff]
        %v1594 = vld [vmem:[#allocation11 + $0xd0] sm:$0xff]
        %v1595 = vld [vmem:[#allocation11 + $0xd8] sm:$0xff]
        %v1596 = vld [vmem:[#allocation11 + $0xe0] sm:$0xff]
        %v1597 = vld [vmem:[#allocation11 + $0xe8] sm:$0xff]
        %v1598 = vld [vmem:[#allocation11 + $0xf0] sm:$0xff]
        %v1599 = vld [vmem:[#allocation11 + $0xf8] sm:$0xff]
        %v1600 = vld [vmem:[%s7] sm:$0x3]
        %v1602 = vlaneseq
        %v1603 = vshrl.u32 %v1602, 7
        %v1604 = vsub.s32 0, %v1603
        %v1605 = vrot.slane %v1600, %v1604
        %v1606 = vlaneseq
        %v1607 = vshrl.u32 %v1606, 7
        %v1608 = vsub.s32 1, %v1607
        %v1609 = vrot.slane %v1600, %v1608
        %v1644 = vunpack.c.l.b16 %v1568
        %v1645 = vunpack.c.h.b16 %v1568
        %v1646 = vunpack.c.l.b16 %v1569
        %v1647 = vunpack.c.h.b16 %v1569
        %v1648 = vunpack.c.l.b16 %v1570
        %v1649 = vunpack.c.h.b16 %v1570
        %v1650 = vunpack.c.l.b16 %v1571
        %v1651 = vunpack.c.h.b16 %v1571
        %v1652 = vunpack.c.l.b16 %v1572
        %v1653 = vunpack.c.h.b16 %v1572
        %v1654 = vunpack.c.l.b16 %v1573
        %v1655 = vunpack.c.h.b16 %v1573
        %v1656 = vunpack.c.l.b16 %v1574
        %v1657 = vunpack.c.h.b16 %v1574
        %v1658 = vunpack.c.l.b16 %v1575
        %v1659 = vunpack.c.h.b16 %v1575
        %v1660 = vunpack.c.l.b16 %v1576
        %v1661 = vunpack.c.h.b16 %v1576
        %v1662 = vunpack.c.l.b16 %v1577
        %v1663 = vunpack.c.h.b16 %v1577
        %v1664 = vunpack.c.l.b16 %v1578
        %v1665 = vunpack.c.h.b16 %v1578
        %v1666 = vunpack.c.l.b16 %v1579
        %v1667 = vunpack.c.h.b16 %v1579
        %v1668 = vunpack.c.l.b16 %v1580
        %v1669 = vunpack.c.h.b16 %v1580
        %v1670 = vunpack.c.l.b16 %v1581
        %v1671 = vunpack.c.h.b16 %v1581
        %v1672 = vunpack.c.l.b16 %v1582
        %v1673 = vunpack.c.h.b16 %v1582
        %v1674 = vunpack.c.l.b16 %v1583
        %v1675 = vunpack.c.h.b16 %v1583
        %v1676 = vunpack.c.l.b16 %v1584
        %v1677 = vunpack.c.h.b16 %v1584
        %v1678 = vunpack.c.l.b16 %v1585
        %v1679 = vunpack.c.h.b16 %v1585
        %v1680 = vunpack.c.l.b16 %v1586
        %v1681 = vunpack.c.h.b16 %v1586
        %v1682 = vunpack.c.l.b16 %v1587
        %v1683 = vunpack.c.h.b16 %v1587
        %v1684 = vunpack.c.l.b16 %v1588
        %v1685 = vunpack.c.h.b16 %v1588
        %v1686 = vunpack.c.l.b16 %v1589
        %v1687 = vunpack.c.h.b16 %v1589
        %v1688 = vunpack.c.l.b16 %v1590
        %v1689 = vunpack.c.h.b16 %v1590
        %v1690 = vunpack.c.l.b16 %v1591
        %v1691 = vunpack.c.h.b16 %v1591
        %v1692 = vunpack.c.l.b16 %v1592
        %v1693 = vunpack.c.h.b16 %v1592
        %v1694 = vunpack.c.l.b16 %v1593
        %v1695 = vunpack.c.h.b16 %v1593
        %v1696 = vunpack.c.l.b16 %v1594
        %v1697 = vunpack.c.h.b16 %v1594
        %v1698 = vunpack.c.l.b16 %v1595
        %v1699 = vunpack.c.h.b16 %v1595
        %v1700 = vunpack.c.l.b16 %v1596
        %v1701 = vunpack.c.h.b16 %v1596
        %v1702 = vunpack.c.l.b16 %v1597
        %v1703 = vunpack.c.h.b16 %v1597
        %v1704 = vunpack.c.l.b16 %v1598
        %v1705 = vunpack.c.h.b16 %v1598
        %v1706 = vunpack.c.l.b16 %v1599
        %v1707 = vunpack.c.h.b16 %v1599
        %v1708 = vpack.c.b16 %v1646, %v1644
        %v1709 = vpack.c.b16 %v1647, %v1645
        %v1710 = vpack.c.b16 %v1650, %v1648
        %v1711 = vpack.c.b16 %v1651, %v1649
        %v1712 = vpack.c.b16 %v1654, %v1652
        %v1713 = vpack.c.b16 %v1655, %v1653
        %v1714 = vpack.c.b16 %v1658, %v1656
        %v1715 = vpack.c.b16 %v1659, %v1657
        %v1716 = vpack.c.b16 %v1662, %v1660
        %v1717 = vpack.c.b16 %v1663, %v1661
        %v1718 = vpack.c.b16 %v1666, %v1664
        %v1719 = vpack.c.b16 %v1667, %v1665
        %v1720 = vpack.c.b16 %v1670, %v1668
        %v1721 = vpack.c.b16 %v1671, %v1669
        %v1722 = vpack.c.b16 %v1674, %v1672
        %v1723 = vpack.c.b16 %v1675, %v1673
        %v1724 = vpack.c.b16 %v1678, %v1676
        %v1725 = vpack.c.b16 %v1679, %v1677
        %v1726 = vpack.c.b16 %v1682, %v1680
        %v1727 = vpack.c.b16 %v1683, %v1681
        %v1728 = vpack.c.b16 %v1686, %v1684
        %v1729 = vpack.c.b16 %v1687, %v1685
        %v1730 = vpack.c.b16 %v1690, %v1688
        %v1731 = vpack.c.b16 %v1691, %v1689
        %v1732 = vpack.c.b16 %v1694, %v1692
        %v1733 = vpack.c.b16 %v1695, %v1693
        %v1734 = vpack.c.b16 %v1698, %v1696
        %v1735 = vpack.c.b16 %v1699, %v1697
        %v1736 = vpack.c.b16 %v1702, %v1700
        %v1737 = vpack.c.b16 %v1703, %v1701
        %v1738 = vpack.c.b16 %v1706, %v1704
        %v1739 = vpack.c.b16 %v1707, %v1705
        %1772 = vmatprep.subr.bf16.mxu0 %v1723
        %1773 = vmatpush1.bf16.msra.mxu0 %v1722
        %1774 = vmatprep.subr.bf16.mxu0 %v1721
        %1775 = vmatpush1.bf16.msra.mxu0 %v1720
        %1776 = vmatprep.subr.bf16.mxu0 %v1719
        %1777 = vmatpush1.bf16.msra.mxu0 %v1718
        %1778 = vmatprep.subr.bf16.mxu0 %v1717
        %1779 = vmatpush1.bf16.msra.mxu0 %v1716
        %1780 = vmatprep.subr.bf16.mxu0 %v1715
        %1781 = vmatpush1.bf16.msra.mxu0 %v1714
        %1782 = vmatprep.subr.bf16.mxu0 %v1713
        %1783 = vmatpush1.bf16.msra.mxu0 %v1712
        %1784 = vmatprep.subr.bf16.mxu0 %v1711
        %1785 = vmatpush1.bf16.msra.mxu0 %v1710
        %1786 = vmatprep.subr.bf16.mxu0 %v1709
        %1787 = vmatpush1.bf16.msra.mxu0 %v1708
        %1788 = vmatprep.subr.bf16.mxu0 %v1739
        %1789 = vmatpush2.bf16.msra.mxu0 %v1738
        %1790 = vmatprep.subr.bf16.mxu0 %v1737
        %1791 = vmatpush2.bf16.msra.mxu0 %v1736
        %1792 = vmatprep.subr.bf16.mxu0 %v1735
        %1793 = vmatpush2.bf16.msra.mxu0 %v1734
        %1794 = vmatprep.subr.bf16.mxu0 %v1733
        %1795 = vmatpush2.bf16.msra.mxu0 %v1732
        %1796 = vmatprep.subr.bf16.mxu0 %v1731
        %1797 = vmatpush2.bf16.msra.mxu0 %v1730
        %1798 = vmatprep.subr.bf16.mxu0 %v1729
        %1799 = vmatpush2.bf16.msra.mxu0 %v1728
        %1800 = vmatprep.subr.bf16.mxu0 %v1727
        %1801 = vmatpush2.bf16.msra.mxu0 %v1726
        %1802 = vmatprep.subr.bf16.mxu0 %v1725
        %1803 = vmatpush2.bf16.msra.mxu0 %v1724
        %1804 = vmatprep.mubr.bf16.mxu0 %v1553
        %1805 = vmatmul.mubr.bf16.gmra.mxu0 %v1552
        %v1806 = vpop.f32.mrf.mxu0
        %v1807 = vadd.f32 %v1605, %v1806
        %v1808 = vpop.f32.mrf.mxu0
        %v1809 = vadd.f32 %v1609, %v1808
        %v1810 = vpop.f32.mrf.mxu0
        %v1811 = vadd.f32 %v1605, %v1810
        %v1812 = vpop.f32.mrf.mxu0
        %v1813 = vadd.f32 %v1609, %v1812
        %1814 = vmatprep.mubr.bf16.mxu0 %v1555
        %1815 = vmatmul.mubr.bf16.gmra.mxu0 %v1554
        %v1816 = vpop.f32.mrf.mxu0
        %v1817 = vadd.f32 %v1605, %v1816
        %v1818 = vpop.f32.mrf.mxu0
        %v1819 = vadd.f32 %v1609, %v1818
        %v1820 = vpop.f32.mrf.mxu0
        %v1821 = vadd.f32 %v1605, %v1820
        %v1822 = vpop.f32.mrf.mxu0
        %v1823 = vadd.f32 %v1609, %v1822
        %1824 = vmatprep.mubr.bf16.mxu0 %v1557
        %1825 = vmatmul.mubr.bf16.gmra.mxu0 %v1556
        %v1826 = vpop.f32.mrf.mxu0
        %v1827 = vadd.f32 %v1605, %v1826
        %v1828 = vpop.f32.mrf.mxu0
        %v1829 = vadd.f32 %v1609, %v1828
        %v1830 = vpop.f32.mrf.mxu0
        %v1831 = vadd.f32 %v1605, %v1830
        %v1832 = vpop.f32.mrf.mxu0
        %v1833 = vadd.f32 %v1609, %v1832
        %1834 = vmatprep.mubr.bf16.mxu0 %v1559
        %1835 = vmatmul.mubr.bf16.gmra.mxu0 %v1558
        %v1836 = vpop.f32.mrf.mxu0
        %v1837 = vadd.f32 %v1605, %v1836
        %v1838 = vpop.f32.mrf.mxu0
        %v1839 = vadd.f32 %v1609, %v1838
        %v1840 = vpop.f32.mrf.mxu0
        %v1841 = vadd.f32 %v1605, %v1840
        %v1842 = vpop.f32.mrf.mxu0
        %v1843 = vadd.f32 %v1609, %v1842
        %1844 = vmatprep.mubr.bf16.mxu0 %v1561
        %1845 = vmatmul.mubr.bf16.gmra.mxu0 %v1560
        %v1846 = vpop.f32.mrf.mxu0
        %v1847 = vadd.f32 %v1605, %v1846
        %v1848 = vpop.f32.mrf.mxu0
        %v1849 = vadd.f32 %v1609, %v1848
        %v1850 = vpop.f32.mrf.mxu0
        %v1851 = vadd.f32 %v1605, %v1850
        %v1852 = vpop.f32.mrf.mxu0
        %v1853 = vadd.f32 %v1609, %v1852
        %1854 = vmatprep.mubr.bf16.mxu0 %v1563
        %1855 = vmatmul.mubr.bf16.gmra.mxu0 %v1562
        %v1856 = vpop.f32.mrf.mxu0
        %v1857 = vadd.f32 %v1605, %v1856
        %v1858 = vpop.f32.mrf.mxu0
        %v1859 = vadd.f32 %v1609, %v1858
        %v1860 = vpop.f32.mrf.mxu0
        %v1861 = vadd.f32 %v1605, %v1860
        %v1862 = vpop.f32.mrf.mxu0
        %v1863 = vadd.f32 %v1609, %v1862
        %1864 = vmatprep.mubr.bf16.mxu0 %v1565
        %1865 = vmatmul.mubr.bf16.gmra.mxu0 %v1564
        %v1866 = vpop.f32.mrf.mxu0
        %v1867 = vadd.f32 %v1605, %v1866
        %v1868 = vpop.f32.mrf.mxu0
        %v1869 = vadd.f32 %v1609, %v1868
        %v1870 = vpop.f32.mrf.mxu0
        %v1871 = vadd.f32 %v1605, %v1870
        %v1872 = vpop.f32.mrf.mxu0
        %v1873 = vadd.f32 %v1609, %v1872
        %1874 = vmatprep.mubr.bf16.mxu0 %v1567
        %1875 = vmatmul.mubr.bf16.gmra.mxu0 %v1566
        %v1876 = vpop.f32.mrf.mxu0
        %v1877 = vadd.f32 %v1605, %v1876
        %v1878 = vpop.f32.mrf.mxu0
        %v1879 = vadd.f32 %v1609, %v1878
        %v1880 = vpop.f32.mrf.mxu0
        %v1881 = vadd.f32 %v1605, %v1880
        %v1882 = vpop.f32.mrf.mxu0
        %v1883 = vadd.f32 %v1609, %v1882
        %1884 = vdwg.mxu0
        %v1885 = vpack.c.bf16 %v1811, %v1807
        %v1886 = vpack.c.bf16 %v1821, %v1817
        %v1887 = vpack.c.bf16 %v1831, %v1827
        %v1888 = vpack.c.bf16 %v1841, %v1837
        %v1889 = vpack.c.bf16 %v1851, %v1847
        %v1890 = vpack.c.bf16 %v1861, %v1857
        %v1891 = vpack.c.bf16 %v1871, %v1867
        %v1892 = vpack.c.bf16 %v1881, %v1877
        %v1893 = vld [vmem:[#allocation3] sm:$0xf]
        %v1894 = vld [vmem:[#allocation3 + $0x8] sm:$0xf]
        %v1895 = vld [vmem:[#allocation3 + $0x10] sm:$0xf]
        %v1896 = vld [vmem:[#allocation3 + $0x18] sm:$0xf]
        %v1897 = vld [vmem:[#allocation3 + $0x20] sm:$0xf]
        %v1898 = vld [vmem:[#allocation3 + $0x28] sm:$0xf]
        %v1899 = vld [vmem:[#allocation3 + $0x30] sm:$0xf]
        %v1900 = vld [vmem:[#allocation3 + $0x38] sm:$0xf]
        %v1901 = vld [vmem:[#allocation3 + $0x40] sm:$0xf]
        %v1902 = vld [vmem:[#allocation3 + $0x48] sm:$0xf]
        %v1903 = vld [vmem:[#allocation3 + $0x50] sm:$0xf]
        %v1904 = vld [vmem:[#allocation3 + $0x58] sm:$0xf]
        %v1905 = vld [vmem:[#allocation3 + $0x60] sm:$0xf]
        %v1906 = vld [vmem:[#allocation3 + $0x68] sm:$0xf]
        %v1907 = vld [vmem:[#allocation3 + $0x70] sm:$0xf]
        %v1908 = vld [vmem:[#allocation3 + $0x78] sm:$0xf]
        %v1909 = vld [vmem:[#allocation4] sm:$0xf]
        %v1910 = vld [vmem:[#allocation4 + $0x8] sm:$0xf]
        %v1911 = vld [vmem:[#allocation4 + $0x10] sm:$0xf]
        %v1912 = vld [vmem:[#allocation4 + $0x18] sm:$0xf]
        %v1913 = vld [vmem:[#allocation4 + $0x20] sm:$0xf]
        %v1914 = vld [vmem:[#allocation4 + $0x28] sm:$0xf]
        %v1915 = vld [vmem:[#allocation4 + $0x30] sm:$0xf]
        %v1916 = vld [vmem:[#allocation4 + $0x38] sm:$0xf]
        %v1917 = vld [vmem:[#allocation4 + $0x40] sm:$0xf]
        %v1918 = vld [vmem:[#allocation4 + $0x48] sm:$0xf]
        %v1919 = vld [vmem:[#allocation4 + $0x50] sm:$0xf]
        %v1920 = vld [vmem:[#allocation4 + $0x58] sm:$0xf]
        %v1921 = vld [vmem:[#allocation4 + $0x60] sm:$0xf]
        %v1922 = vld [vmem:[#allocation4 + $0x68] sm:$0xf]
        %v1923 = vld [vmem:[#allocation4 + $0x70] sm:$0xf]
        %v1924 = vld [vmem:[#allocation4 + $0x78] sm:$0xf]
        %v1941 = vunpack.c.l.b16 %v1893
        %v1942 = vunpack.c.l.b16 %v1894
        %v1943 = vunpack.c.l.b16 %v1895
        %v1944 = vunpack.c.l.b16 %v1896
        %v1945 = vunpack.c.l.b16 %v1897
        %v1946 = vunpack.c.l.b16 %v1898
        %v1947 = vunpack.c.l.b16 %v1899
        %v1948 = vunpack.c.l.b16 %v1900
        %v1949 = vunpack.c.l.b16 %v1901
        %v1950 = vunpack.c.l.b16 %v1902
        %v1951 = vunpack.c.l.b16 %v1903
        %v1952 = vunpack.c.l.b16 %v1904
        %v1953 = vunpack.c.l.b16 %v1905
        %v1954 = vunpack.c.l.b16 %v1906
        %v1955 = vunpack.c.l.b16 %v1907
        %v1956 = vunpack.c.l.b16 %v1908
        %v1957 = vpack.c.b16 %v1942, %v1941
        %v1958 = vpack.c.b16 %v1944, %v1943
        %v1959 = vpack.c.b16 %v1946, %v1945
        %v1960 = vpack.c.b16 %v1948, %v1947
        %v1961 = vpack.c.b16 %v1950, %v1949
        %v1962 = vpack.c.b16 %v1952, %v1951
        %v1963 = vpack.c.b16 %v1954, %v1953
        %v1964 = vpack.c.b16 %v1956, %v1955
        %1973 = vmatprep.subr.bf16.mxu0 0
        %1974 = vmatpush1.bf16.xpose.msra.mxu0 %v1964
        %1975 = vmatprep.subr.bf16.mxu0 0
        %1976 = vmatpush1.bf16.xpose.msra.mxu0 %v1963
        %1977 = vmatprep.subr.bf16.mxu0 0
        %1978 = vmatpush1.bf16.xpose.msra.mxu0 %v1962
        %1979 = vmatprep.subr.bf16.mxu0 0
        %1980 = vmatpush1.bf16.xpose.msra.mxu0 %v1961
        %1981 = vmatprep.subr.bf16.mxu0 0
        %1982 = vmatpush1.bf16.xpose.msra.mxu0 %v1960
        %1983 = vmatprep.subr.bf16.mxu0 0
        %1984 = vmatpush1.bf16.xpose.msra.mxu0 %v1959
        %1985 = vmatprep.subr.bf16.mxu0 0
        %1986 = vmatpush1.bf16.xpose.msra.mxu0 %v1958
        %1987 = vmatprep.subr.bf16.mxu0 0
        %1988 = vmatpush1.bf16.xpose.msra.mxu0 %v1957
        %1989 = vmatprep.subr.bf16.mxu0 0
        %1990 = vmatpush2.bf16.xpose.msra.mxu0 0
        %1991 = vmatprep.subr.bf16.mxu0 0
        %1992 = vmatpush2.bf16.xpose.msra.mxu0 0
        %1993 = vmatprep.subr.bf16.mxu0 0
        %1994 = vmatpush2.bf16.xpose.msra.mxu0 0
        %1995 = vmatprep.subr.bf16.mxu0 0
        %1996 = vmatpush2.bf16.xpose.msra.mxu0 0
        %1997 = vmatprep.subr.bf16.mxu0 0
        %1998 = vmatpush2.bf16.xpose.msra.mxu0 0
        %1999 = vmatprep.subr.bf16.mxu0 0
        %2000 = vmatpush2.bf16.xpose.msra.mxu0 0
        %2001 = vmatprep.subr.bf16.mxu0 0
        %2002 = vmatpush2.bf16.xpose.msra.mxu0 0
        %2003 = vmatprep.subr.bf16.mxu0 0
        %2004 = vmatpush2.bf16.xpose.msra.mxu0 0
        %2005 = vmatprep.mubr.bf16.mxu0 0
        %2006 = vmatmul.mubr.bf16.gmra.mxu0 %v1885
        %v2007 = vpop.f32.mrf.mxu0
        %v2008 = vadd.f32 0.0, %v2007
        %v2009 = vpop.f32.mrf.mxu0
        %v2010 = vpop.f32.mrf.mxu0
        %v2011 = vadd.f32 0.0, %v2010
        %v2012 = vpop.f32.mrf.mxu0
        %2013 = vmatprep.mubr.bf16.mxu0 0
        %2014 = vmatmul.mubr.bf16.gmra.mxu0 %v1886
        %v2015 = vpop.f32.mrf.mxu0
        %v2016 = vadd.f32 0.0, %v2015
        %v2017 = vpop.f32.mrf.mxu0
        %v2018 = vpop.f32.mrf.mxu0
        %v2019 = vadd.f32 0.0, %v2018
        %v2020 = vpop.f32.mrf.mxu0
        %2021 = vmatprep.mubr.bf16.mxu0 0
        %2022 = vmatmul.mubr.bf16.gmra.mxu0 %v1887
        %v2023 = vpop.f32.mrf.mxu0
        %v2024 = vadd.f32 0.0, %v2023
        %v2025 = vpop.f32.mrf.mxu0
        %v2026 = vpop.f32.mrf.mxu0
        %v2027 = vadd.f32 0.0, %v2026
        %v2028 = vpop.f32.mrf.mxu0
        %2029 = vmatprep.mubr.bf16.mxu0 0
        %2030 = vmatmul.mubr.bf16.gmra.mxu0 %v1888
        %v2031 = vpop.f32.mrf.mxu0
        %v2032 = vadd.f32 0.0, %v2031
        %v2033 = vpop.f32.mrf.mxu0
        %v2034 = vpop.f32.mrf.mxu0
        %v2035 = vadd.f32 0.0, %v2034
        %v2036 = vpop.f32.mrf.mxu0
        %2037 = vmatprep.mubr.bf16.mxu0 0
        %2038 = vmatmul.mubr.bf16.gmra.mxu0 %v1889
        %v2039 = vpop.f32.mrf.mxu0
        %v2040 = vadd.f32 0.0, %v2039
        %v2041 = vpop.f32.mrf.mxu0
        %v2042 = vpop.f32.mrf.mxu0
        %v2043 = vadd.f32 0.0, %v2042
        %v2044 = vpop.f32.mrf.mxu0
        %2045 = vmatprep.mubr.bf16.mxu0 0
        %2046 = vmatmul.mubr.bf16.gmra.mxu0 %v1890
        %v2047 = vpop.f32.mrf.mxu0
        %v2048 = vadd.f32 0.0, %v2047
        %v2049 = vpop.f32.mrf.mxu0
        %v2050 = vpop.f32.mrf.mxu0
        %v2051 = vadd.f32 0.0, %v2050
        %v2052 = vpop.f32.mrf.mxu0
        %2053 = vmatprep.mubr.bf16.mxu0 0
        %2054 = vmatmul.mubr.bf16.gmra.mxu0 %v1891
        %v2055 = vpop.f32.mrf.mxu0
        %v2056 = vadd.f32 0.0, %v2055
        %v2057 = vpop.f32.mrf.mxu0
        %v2058 = vpop.f32.mrf.mxu0
        %v2059 = vadd.f32 0.0, %v2058
        %v2060 = vpop.f32.mrf.mxu0
        %2061 = vmatprep.mubr.bf16.mxu0 0
        %2062 = vmatmul.mubr.bf16.gmra.mxu0 %v1892
        %v2063 = vpop.f32.mrf.mxu0
        %v2064 = vadd.f32 0.0, %v2063
        %v2065 = vpop.f32.mrf.mxu0
        %v2066 = vpop.f32.mrf.mxu0
        %v2067 = vadd.f32 0.0, %v2066
        %v2068 = vpop.f32.mrf.mxu0
        %2069 = vdwg.mxu0
        %2070 = vmax.xlane.f32.xlu0 %v2008
        %v2071 = vpop.xlane.xlu0 %2070
        %2072 = vmax.xlane.f32.xlu0 %v2011
        %v2073 = vpop.xlane.xlu0 %2072
        %2074 = vmax.xlane.f32.xlu0 %v2016
        %v2075 = vpop.xlane.xlu0 %2074
        %2076 = vmax.xlane.f32.xlu0 %v2019
        %v2077 = vpop.xlane.xlu0 %2076
        %2078 = vmax.xlane.f32.xlu0 %v2024
        %v2079 = vpop.xlane.xlu0 %2078
        %2080 = vmax.xlane.f32.xlu0 %v2027
        %v2081 = vpop.xlane.xlu0 %2080
        %2082 = vmax.xlane.f32.xlu0 %v2032
        %v2083 = vpop.xlane.xlu0 %2082
        %2084 = vmax.xlane.f32.xlu0 %v2035
        %v2085 = vpop.xlane.xlu0 %2084
        %2086 = vmax.xlane.f32.xlu0 %v2040
        %v2087 = vpop.xlane.xlu0 %2086
        %2088 = vmax.xlane.f32.xlu0 %v2043
        %v2089 = vpop.xlane.xlu0 %2088
        %2090 = vmax.xlane.f32.xlu0 %v2048
        %v2091 = vpop.xlane.xlu0 %2090
        %2092 = vmax.xlane.f32.xlu0 %v2051
        %v2093 = vpop.xlane.xlu0 %2092
        %2094 = vmax.xlane.f32.xlu0 %v2056
        %v2095 = vpop.xlane.xlu0 %2094
        %2096 = vmax.xlane.f32.xlu0 %v2059
        %v2097 = vpop.xlane.xlu0 %2096
        %2098 = vmax.xlane.f32.xlu0 %v2064
        %v2099 = vpop.xlane.xlu0 %2098
        %2100 = vmax.xlane.f32.xlu0 %v2067
        %v2101 = vpop.xlane.xlu0 %2100
        %v2102 = vsub.f32 %v2008, %v2071
        %v2103 = vsub.f32 %v2011, %v2073
        %v2104 = vsub.f32 %v2016, %v2075
        %v2105 = vsub.f32 %v2019, %v2077
        %v2106 = vsub.f32 %v2024, %v2079
        %v2107 = vsub.f32 %v2027, %v2081
        %v2108 = vsub.f32 %v2032, %v2083
        %v2109 = vsub.f32 %v2035, %v2085
        %v2110 = vsub.f32 %v2040, %v2087
        %v2111 = vsub.f32 %v2043, %v2089
        %v2112 = vsub.f32 %v2048, %v2091
        %v2113 = vsub.f32 %v2051, %v2093
        %v2114 = vsub.f32 %v2056, %v2095
        %v2115 = vsub.f32 %v2059, %v2097
        %v2116 = vsub.f32 %v2064, %v2099
        %v2117 = vsub.f32 %v2067, %v2101
        %v2118 = vmul.f32 %v2102, 1.442695
        %v2119 = vpow.pop %v2118
        %v2120 = vmul.f32 %v2103, 1.442695
        %v2121 = vpow.pop %v2120
        %v2122 = vmul.f32 %v2104, 1.442695
        %v2123 = vpow.pop %v2122
        %v2124 = vmul.f32 %v2105, 1.442695
        %v2125 = vpow.pop %v2124
        %v2126 = vmul.f32 %v2106, 1.442695
        %v2127 = vpow.pop %v2126
        %v2128 = vmul.f32 %v2107, 1.442695
        %v2129 = vpow.pop %v2128
        %v2130 = vmul.f32 %v2108, 1.442695
        %v2131 = vpow.pop %v2130
        %v2132 = vmul.f32 %v2109, 1.442695
        %v2133 = vpow.pop %v2132
        %v2134 = vmul.f32 %v2110, 1.442695
        %v2135 = vpow.pop %v2134
        %v2136 = vmul.f32 %v2111, 1.442695
        %v2137 = vpow.pop %v2136
        %v2138 = vmul.f32 %v2112, 1.442695
        %v2139 = vpow.pop %v2138
        %v2140 = vmul.f32 %v2113, 1.442695
        %v2141 = vpow.pop %v2140
        %v2142 = vmul.f32 %v2114, 1.442695
        %v2143 = vpow.pop %v2142
        %v2144 = vmul.f32 %v2115, 1.442695
        %v2145 = vpow.pop %v2144
        %v2146 = vmul.f32 %v2116, 1.442695
        %v2147 = vpow.pop %v2146
        %v2148 = vmul.f32 %v2117, 1.442695
        %v2149 = vpow.pop %v2148
        %2150 = vadd.xlane.f32.xlu0 %v2119
        %v2151 = vpop.xlane.xlu0 %2150
        %2152 = vadd.xlane.f32.xlu0 %v2121
        %v2153 = vpop.xlane.xlu0 %2152
        %2154 = vadd.xlane.f32.xlu0 %v2123
        %v2155 = vpop.xlane.xlu0 %2154
        %2156 = vadd.xlane.f32.xlu0 %v2125
        %v2157 = vpop.xlane.xlu0 %2156
        %2158 = vadd.xlane.f32.xlu0 %v2127
        %v2159 = vpop.xlane.xlu0 %2158
        %2160 = vadd.xlane.f32.xlu0 %v2129
        %v2161 = vpop.xlane.xlu0 %2160
        %2162 = vadd.xlane.f32.xlu0 %v2131
        %v2163 = vpop.xlane.xlu0 %2162
        %2164 = vadd.xlane.f32.xlu0 %v2133
        %v2165 = vpop.xlane.xlu0 %2164
        %2166 = vadd.xlane.f32.xlu0 %v2135
        %v2167 = vpop.xlane.xlu0 %2166
        %2168 = vadd.xlane.f32.xlu0 %v2137
        %v2169 = vpop.xlane.xlu0 %2168
        %2170 = vadd.xlane.f32.xlu0 %v2139
        %v2171 = vpop.xlane.xlu0 %2170
        %2172 = vadd.xlane.f32.xlu0 %v2141
        %v2173 = vpop.xlane.xlu0 %2172
        %2174 = vadd.xlane.f32.xlu0 %v2143
        %v2175 = vpop.xlane.xlu0 %2174
        %2176 = vadd.xlane.f32.xlu0 %v2145
        %v2177 = vpop.xlane.xlu0 %2176
        %2178 = vadd.xlane.f32.xlu0 %v2147
        %v2179 = vpop.xlane.xlu0 %2178
        %2180 = vadd.xlane.f32.xlu0 %v2149
        %v2181 = vpop.xlane.xlu0 %2180
        %v2182 = vrcp.pop %v2151
        %v2183 = vrcp.pop %v2153
        %v2184 = vrcp.pop %v2155
        %v2185 = vrcp.pop %v2157
        %v2186 = vrcp.pop %v2159
        %v2187 = vrcp.pop %v2161
        %v2188 = vrcp.pop %v2163
        %v2189 = vrcp.pop %v2165
        %v2190 = vrcp.pop %v2167
        %v2191 = vrcp.pop %v2169
        %v2192 = vrcp.pop %v2171
        %v2193 = vrcp.pop %v2173
        %v2194 = vrcp.pop %v2175
        %v2195 = vrcp.pop %v2177
        %v2196 = vrcp.pop %v2179
        %v2197 = vrcp.pop %v2181
        %v2198 = vmul.f32 %v2119, %v2182
        %v2199 = vmul.f32 %v2121, %v2183
        %v2200 = vmul.f32 %v2123, %v2184
        %v2201 = vmul.f32 %v2125, %v2185
        %v2202 = vmul.f32 %v2127, %v2186
        %v2203 = vmul.f32 %v2129, %v2187
        %v2204 = vmul.f32 %v2131, %v2188
        %v2205 = vmul.f32 %v2133, %v2189
        %v2206 = vmul.f32 %v2135, %v2190
        %v2207 = vmul.f32 %v2137, %v2191
        %v2208 = vmul.f32 %v2139, %v2192
        %v2209 = vmul.f32 %v2141, %v2193
        %v2210 = vmul.f32 %v2143, %v2194
        %v2211 = vmul.f32 %v2145, %v2195
        %v2212 = vmul.f32 %v2147, %v2196
        %v2213 = vmul.f32 %v2149, %v2197
        %v2214 = vpack.c.bf16 %v2199, %v2198
        %v2215 = vpack.c.bf16 %v2201, %v2200
        %v2216 = vpack.c.bf16 %v2203, %v2202
        %v2217 = vpack.c.bf16 %v2205, %v2204
        %v2218 = vpack.c.bf16 %v2207, %v2206
        %v2219 = vpack.c.bf16 %v2209, %v2208
        %v2220 = vpack.c.bf16 %v2211, %v2210
        %v2221 = vpack.c.bf16 %v2213, %v2212
        %v2238 = vunpack.c.l.b16 %v1909
        %v2239 = vunpack.c.l.b16 %v1910
        %v2240 = vunpack.c.l.b16 %v1911
        %v2241 = vunpack.c.l.b16 %v1912
        %v2242 = vunpack.c.l.b16 %v1913
        %v2243 = vunpack.c.l.b16 %v1914
        %v2244 = vunpack.c.l.b16 %v1915
        %v2245 = vunpack.c.l.b16 %v1916
        %v2246 = vunpack.c.l.b16 %v1917
        %v2247 = vunpack.c.l.b16 %v1918
        %v2248 = vunpack.c.l.b16 %v1919
        %v2249 = vunpack.c.l.b16 %v1920
        %v2250 = vunpack.c.l.b16 %v1921
        %v2251 = vunpack.c.l.b16 %v1922
        %v2252 = vunpack.c.l.b16 %v1923
        %v2253 = vunpack.c.l.b16 %v1924
        %v2254 = vpack.c.b16 %v2239, %v2238
        %v2255 = vpack.c.b16 %v2241, %v2240
        %v2256 = vpack.c.b16 %v2243, %v2242
        %v2257 = vpack.c.b16 %v2245, %v2244
        %v2258 = vpack.c.b16 %v2247, %v2246
        %v2259 = vpack.c.b16 %v2249, %v2248
        %v2260 = vpack.c.b16 %v2251, %v2250
        %v2261 = vpack.c.b16 %v2253, %v2252
        %2270 = vmatprep.subr.bf16.mxu0 0
        %2271 = vmatpush1.bf16.msra.mxu0 %v2261
        %2272 = vmatprep.subr.bf16.mxu0 0
        %2273 = vmatpush1.bf16.msra.mxu0 %v2260
        %2274 = vmatprep.subr.bf16.mxu0 0
        %2275 = vmatpush1.bf16.msra.mxu0 %v2259
        %2276 = vmatprep.subr.bf16.mxu0 0
        %2277 = vmatpush1.bf16.msra.mxu0 %v2258
        %2278 = vmatprep.subr.bf16.mxu0 0
        %2279 = vmatpush1.bf16.msra.mxu0 %v2257
        %2280 = vmatprep.subr.bf16.mxu0 0
        %2281 = vmatpush1.bf16.msra.mxu0 %v2256
        %2282 = vmatprep.subr.bf16.mxu0 0
        %2283 = vmatpush1.bf16.msra.mxu0 %v2255
        %2284 = vmatprep.subr.bf16.mxu0 0
        %2285 = vmatpush1.bf16.msra.mxu0 %v2254
        %2286 = vmatprep.subr.bf16.mxu0 0
        %2287 = vmatpush2.bf16.msra.mxu0 0
        %2288 = vmatprep.subr.bf16.mxu0 0
        %2289 = vmatpush2.bf16.msra.mxu0 0
        %2290 = vmatprep.subr.bf16.mxu0 0
        %2291 = vmatpush2.bf16.msra.mxu0 0
        %2292 = vmatprep.subr.bf16.mxu0 0
        %2293 = vmatpush2.bf16.msra.mxu0 0
        %2294 = vmatprep.subr.bf16.mxu0 0
        %2295 = vmatpush2.bf16.msra.mxu0 0
        %2296 = vmatprep.subr.bf16.mxu0 0
        %2297 = vmatpush2.bf16.msra.mxu0 0
        %2298 = vmatprep.subr.bf16.mxu0 0
        %2299 = vmatpush2.bf16.msra.mxu0 0
        %2300 = vmatprep.subr.bf16.mxu0 0
        %2301 = vmatpush2.bf16.msra.mxu0 0
        %2302 = vmatprep.mubr.bf16.mxu0 0
        %2303 = vmatmul.mubr.bf16.gmra.mxu0 %v2214
        %v2304 = vpop.f32.mrf.mxu0
        %v2305 = vadd.f32 0.0, %v2304
        %v2306 = vpop.f32.mrf.mxu0
        %v2307 = vpop.f32.mrf.mxu0
        %v2308 = vadd.f32 0.0, %v2307
        %v2309 = vpop.f32.mrf.mxu0
        %2310 = vmatprep.mubr.bf16.mxu0 0
        %2311 = vmatmul.mubr.bf16.gmra.mxu0 %v2215
        %v2312 = vpop.f32.mrf.mxu0
        %v2313 = vadd.f32 0.0, %v2312
        %v2314 = vpop.f32.mrf.mxu0
        %v2315 = vpop.f32.mrf.mxu0
        %v2316 = vadd.f32 0.0, %v2315
        %v2317 = vpop.f32.mrf.mxu0
        %2318 = vmatprep.mubr.bf16.mxu0 0
        %2319 = vmatmul.mubr.bf16.gmra.mxu0 %v2216
        %v2320 = vpop.f32.mrf.mxu0
        %v2321 = vadd.f32 0.0, %v2320
        %v2322 = vpop.f32.mrf.mxu0
        %v2323 = vpop.f32.mrf.mxu0
        %v2324 = vadd.f32 0.0, %v2323
        %v2325 = vpop.f32.mrf.mxu0
        %2326 = vmatprep.mubr.bf16.mxu0 0
        %2327 = vmatmul.mubr.bf16.gmra.mxu0 %v2217
        %v2328 = vpop.f32.mrf.mxu0
        %v2329 = vadd.f32 0.0, %v2328
        %v2330 = vpop.f32.mrf.mxu0
        %v2331 = vpop.f32.mrf.mxu0
        %v2332 = vadd.f32 0.0, %v2331
        %v2333 = vpop.f32.mrf.mxu0
        %2334 = vmatprep.mubr.bf16.mxu0 0
        %2335 = vmatmul.mubr.bf16.gmra.mxu0 %v2218
        %v2336 = vpop.f32.mrf.mxu0
        %v2337 = vadd.f32 0.0, %v2336
        %v2338 = vpop.f32.mrf.mxu0
        %v2339 = vpop.f32.mrf.mxu0
        %v2340 = vadd.f32 0.0, %v2339
        %v2341 = vpop.f32.mrf.mxu0
        %2342 = vmatprep.mubr.bf16.mxu0 0
        %2343 = vmatmul.mubr.bf16.gmra.mxu0 %v2219
        %v2344 = vpop.f32.mrf.mxu0
        %v2345 = vadd.f32 0.0, %v2344
        %v2346 = vpop.f32.mrf.mxu0
        %v2347 = vpop.f32.mrf.mxu0
        %v2348 = vadd.f32 0.0, %v2347
        %v2349 = vpop.f32.mrf.mxu0
        %2350 = vmatprep.mubr.bf16.mxu0 0
        %2351 = vmatmul.mubr.bf16.gmra.mxu0 %v2220
        %v2352 = vpop.f32.mrf.mxu0
        %v2353 = vadd.f32 0.0, %v2352
        %v2354 = vpop.f32.mrf.mxu0
        %v2355 = vpop.f32.mrf.mxu0
        %v2356 = vadd.f32 0.0, %v2355
        %v2357 = vpop.f32.mrf.mxu0
        %2358 = vmatprep.mubr.bf16.mxu0 0
        %2359 = vmatmul.mubr.bf16.gmra.mxu0 %v2221
        %v2360 = vpop.f32.mrf.mxu0
        %v2361 = vadd.f32 0.0, %v2360
        %v2362 = vpop.f32.mrf.mxu0
        %v2363 = vpop.f32.mrf.mxu0
        %v2364 = vadd.f32 0.0, %v2363
        %v2365 = vpop.f32.mrf.mxu0
        %2366 = vdwg.mxu0
        %v2367 = vpack.c.bf16 %v2308, %v2305
        %v2368 = vpack.c.bf16 %v2316, %v2313
        %v2369 = vpack.c.bf16 %v2324, %v2321
        %v2370 = vpack.c.bf16 %v2332, %v2329
        %v2371 = vpack.c.bf16 %v2340, %v2337
        %v2372 = vpack.c.bf16 %v2348, %v2345
        %v2373 = vpack.c.bf16 %v2356, %v2353
        %v2374 = vpack.c.bf16 %v2364, %v2361
        %v2383 = vunpack.c.l.b16 %v2367
        %v2384 = vunpack.c.h.b16 %v2367
        %v2385 = vunpack.c.l.b16 %v2368
        %v2386 = vunpack.c.h.b16 %v2368
        %v2387 = vunpack.c.l.b16 %v2369
        %v2388 = vunpack.c.h.b16 %v2369
        %v2389 = vunpack.c.l.b16 %v2370
        %v2390 = vunpack.c.h.b16 %v2370
        %v2391 = vunpack.c.l.b16 %v2371
        %v2392 = vunpack.c.h.b16 %v2371
        %v2393 = vunpack.c.l.b16 %v2372
        %v2394 = vunpack.c.h.b16 %v2372
        %v2395 = vunpack.c.l.b16 %v2373
        %v2396 = vunpack.c.h.b16 %v2373
        %v2397 = vunpack.c.l.b16 %v2374
        %v2398 = vunpack.c.h.b16 %v2374
        %v2399 = vpack.c.b16 %v2383, %v2383
        %v2400 = vpack.c.b16 %v2384, %v2384
        %v2401 = vpack.c.b16 %v2385, %v2385
        %v2402 = vpack.c.b16 %v2386, %v2386
        %v2403 = vpack.c.b16 %v2387, %v2387
        %v2404 = vpack.c.b16 %v2388, %v2388
        %v2405 = vpack.c.b16 %v2389, %v2389
        %v2406 = vpack.c.b16 %v2390, %v2390
        %v2407 = vpack.c.b16 %v2391, %v2391
        %v2408 = vpack.c.b16 %v2392, %v2392
        %v2409 = vpack.c.b16 %v2393, %v2393
        %v2410 = vpack.c.b16 %v2394, %v2394
        %v2411 = vpack.c.b16 %v2395, %v2395
        %v2412 = vpack.c.b16 %v2396, %v2396
        %v2413 = vpack.c.b16 %v2397, %v2397
        %v2414 = vpack.c.b16 %v2398, %v2398
        %2431 = vst [vmem:[#allocation2] sm:$0xf] %v2399
        %2432 = vst [vmem:[#allocation2 + $0x8] sm:$0xf] %v2400
        %2433 = vst [vmem:[#allocation2 + $0x10] sm:$0xf] %v2401
        %2434 = vst [vmem:[#allocation2 + $0x18] sm:$0xf] %v2402
        %2435 = vst [vmem:[#allocation2 + $0x20] sm:$0xf] %v2403
        %2436 = vst [vmem:[#allocation2 + $0x28] sm:$0xf] %v2404
        %2437 = vst [vmem:[#allocation2 + $0x30] sm:$0xf] %v2405
        %2438 = vst [vmem:[#allocation2 + $0x38] sm:$0xf] %v2406
        %2439 = vst [vmem:[#allocation2 + $0x40] sm:$0xf] %v2407
        %2440 = vst [vmem:[#allocation2 + $0x48] sm:$0xf] %v2408
        %2441 = vst [vmem:[#allocation2 + $0x50] sm:$0xf] %v2409
        %2442 = vst [vmem:[#allocation2 + $0x58] sm:$0xf] %v2410
        %2443 = vst [vmem:[#allocation2 + $0x60] sm:$0xf] %v2411
        %2444 = vst [vmem:[#allocation2 + $0x68] sm:$0xf] %v2412
        %2445 = vst [vmem:[#allocation2 + $0x70] sm:$0xf] %v2413
        %2446 = vst [vmem:[#allocation2 + $0x78] sm:$0xf] %v2414
        %v2447 = vpack.c.bf16 %v1813, %v1809
        %v2448 = vpack.c.bf16 %v1823, %v1819
        %v2449 = vpack.c.bf16 %v1833, %v1829
        %v2450 = vpack.c.bf16 %v1843, %v1839
        %v2451 = vpack.c.bf16 %v1853, %v1849
        %v2452 = vpack.c.bf16 %v1863, %v1859
        %v2453 = vpack.c.bf16 %v1873, %v1869
        %v2454 = vpack.c.bf16 %v1883, %v1879
        %v2455 = vld [vmem:[#allocation3 + $0x4] sm:$0xf]
        %v2456 = vld [vmem:[#allocation3 + $0xc] sm:$0xf]
        %v2457 = vld [vmem:[#allocation3 + $0x14] sm:$0xf]
        %v2458 = vld [vmem:[#allocation3 + $0x1c] sm:$0xf]
        %v2459 = vld [vmem:[#allocation3 + $0x24] sm:$0xf]
        %v2460 = vld [vmem:[#allocation3 + $0x2c] sm:$0xf]
        %v2461 = vld [vmem:[#allocation3 + $0x34] sm:$0xf]
        %v2462 = vld [vmem:[#allocation3 + $0x3c] sm:$0xf]
        %v2463 = vld [vmem:[#allocation3 + $0x44] sm:$0xf]
        %v2464 = vld [vmem:[#allocation3 + $0x4c] sm:$0xf]
        %v2465 = vld [vmem:[#allocation3 + $0x54] sm:$0xf]
        %v2466 = vld [vmem:[#allocation3 + $0x5c] sm:$0xf]
        %v2467 = vld [vmem:[#allocation3 + $0x64] sm:$0xf]
        %v2468 = vld [vmem:[#allocation3 + $0x6c] sm:$0xf]
        %v2469 = vld [vmem:[#allocation3 + $0x74] sm:$0xf]
        %v2470 = vld [vmem:[#allocation3 + $0x7c] sm:$0xf]
        %v2471 = vld [vmem:[#allocation4 + $0x4] sm:$0xf]
        %v2472 = vld [vmem:[#allocation4 + $0xc] sm:$0xf]
        %v2473 = vld [vmem:[#allocation4 + $0x14] sm:$0xf]
        %v2474 = vld [vmem:[#allocation4 + $0x1c] sm:$0xf]
        %v2475 = vld [vmem:[#allocation4 + $0x24] sm:$0xf]
        %v2476 = vld [vmem:[#allocation4 + $0x2c] sm:$0xf]
        %v2477 = vld [vmem:[#allocation4 + $0x34] sm:$0xf]
        %v2478 = vld [vmem:[#allocation4 + $0x3c] sm:$0xf]
        %v2479 = vld [vmem:[#allocation4 + $0x44] sm:$0xf]
        %v2480 = vld [vmem:[#allocation4 + $0x4c] sm:$0xf]
        %v2481 = vld [vmem:[#allocation4 + $0x54] sm:$0xf]
        %v2482 = vld [vmem:[#allocation4 + $0x5c] sm:$0xf]
        %v2483 = vld [vmem:[#allocation4 + $0x64] sm:$0xf]
        %v2484 = vld [vmem:[#allocation4 + $0x6c] sm:$0xf]
        %v2485 = vld [vmem:[#allocation4 + $0x74] sm:$0xf]
        %v2486 = vld [vmem:[#allocation4 + $0x7c] sm:$0xf]
        %v2503 = vunpack.c.l.b16 %v2455
        %v2504 = vunpack.c.l.b16 %v2456
        %v2505 = vunpack.c.l.b16 %v2457
        %v2506 = vunpack.c.l.b16 %v2458
        %v2507 = vunpack.c.l.b16 %v2459
        %v2508 = vunpack.c.l.b16 %v2460
        %v2509 = vunpack.c.l.b16 %v2461
        %v2510 = vunpack.c.l.b16 %v2462
        %v2511 = vunpack.c.l.b16 %v2463
        %v2512 = vunpack.c.l.b16 %v2464
        %v2513 = vunpack.c.l.b16 %v2465
        %v2514 = vunpack.c.l.b16 %v2466
        %v2515 = vunpack.c.l.b16 %v2467
        %v2516 = vunpack.c.l.b16 %v2468
        %v2517 = vunpack.c.l.b16 %v2469
        %v2518 = vunpack.c.l.b16 %v2470
        %v2519 = vpack.c.b16 %v2504, %v2503
        %v2520 = vpack.c.b16 %v2506, %v2505
        %v2521 = vpack.c.b16 %v2508, %v2507
        %v2522 = vpack.c.b16 %v2510, %v2509
        %v2523 = vpack.c.b16 %v2512, %v2511
        %v2524 = vpack.c.b16 %v2514, %v2513
        %v2525 = vpack.c.b16 %v2516, %v2515
        %v2526 = vpack.c.b16 %v2518, %v2517
        %2535 = vmatprep.subr.bf16.mxu0 0
        %2536 = vmatpush1.bf16.xpose.msra.mxu0 %v2526
        %2537 = vmatprep.subr.bf16.mxu0 0
        %2538 = vmatpush1.bf16.xpose.msra.mxu0 %v2525
        %2539 = vmatprep.subr.bf16.mxu0 0
        %2540 = vmatpush1.bf16.xpose.msra.mxu0 %v2524
        %2541 = vmatprep.subr.bf16.mxu0 0
        %2542 = vmatpush1.bf16.xpose.msra.mxu0 %v2523
        %2543 = vmatprep.subr.bf16.mxu0 0
        %2544 = vmatpush1.bf16.xpose.msra.mxu0 %v2522
        %2545 = vmatprep.subr.bf16.mxu0 0
        %2546 = vmatpush1.bf16.xpose.msra.mxu0 %v2521
        %2547 = vmatprep.subr.bf16.mxu0 0
        %2548 = vmatpush1.bf16.xpose.msra.mxu0 %v2520
        %2549 = vmatprep.subr.bf16.mxu0 0
        %2550 = vmatpush1.bf16.xpose.msra.mxu0 %v2519
        %2551 = vmatprep.subr.bf16.mxu0 0
        %2552 = vmatpush2.bf16.xpose.msra.mxu0 0
        %2553 = vmatprep.subr.bf16.mxu0 0
        %2554 = vmatpush2.bf16.xpose.msra.mxu0 0
        %2555 = vmatprep.subr.bf16.mxu0 0
        %2556 = vmatpush2.bf16.xpose.msra.mxu0 0
        %2557 = vmatprep.subr.bf16.mxu0 0
        %2558 = vmatpush2.bf16.xpose.msra.mxu0 0
        %2559 = vmatprep.subr.bf16.mxu0 0
        %2560 = vmatpush2.bf16.xpose.msra.mxu0 0
        %2561 = vmatprep.subr.bf16.mxu0 0
        %2562 = vmatpush2.bf16.xpose.msra.mxu0 0
        %2563 = vmatprep.subr.bf16.mxu0 0
        %2564 = vmatpush2.bf16.xpose.msra.mxu0 0
        %2565 = vmatprep.subr.bf16.mxu0 0
        %2566 = vmatpush2.bf16.xpose.msra.mxu0 0
        %2567 = vmatprep.mubr.bf16.mxu0 0
        %2568 = vmatmul.mubr.bf16.gmra.mxu0 %v2447
        %v2569 = vpop.f32.mrf.mxu0
        %v2570 = vadd.f32 0.0, %v2569
        %v2571 = vpop.f32.mrf.mxu0
        %v2572 = vpop.f32.mrf.mxu0
        %v2573 = vadd.f32 0.0, %v2572
        %v2574 = vpop.f32.mrf.mxu0
        %2575 = vmatprep.mubr.bf16.mxu0 0
        %2576 = vmatmul.mubr.bf16.gmra.mxu0 %v2448
        %v2577 = vpop.f32.mrf.mxu0
        %v2578 = vadd.f32 0.0, %v2577
        %v2579 = vpop.f32.mrf.mxu0
        %v2580 = vpop.f32.mrf.mxu0
        %v2581 = vadd.f32 0.0, %v2580
        %v2582 = vpop.f32.mrf.mxu0
        %2583 = vmatprep.mubr.bf16.mxu0 0
        %2584 = vmatmul.mubr.bf16.gmra.mxu0 %v2449
        %v2585 = vpop.f32.mrf.mxu0
        %v2586 = vadd.f32 0.0, %v2585
        %v2587 = vpop.f32.mrf.mxu0
        %v2588 = vpop.f32.mrf.mxu0
        %v2589 = vadd.f32 0.0, %v2588
        %v2590 = vpop.f32.mrf.mxu0
        %2591 = vmatprep.mubr.bf16.mxu0 0
        %2592 = vmatmul.mubr.bf16.gmra.mxu0 %v2450
        %v2593 = vpop.f32.mrf.mxu0
        %v2594 = vadd.f32 0.0, %v2593
        %v2595 = vpop.f32.mrf.mxu0
        %v2596 = vpop.f32.mrf.mxu0
        %v2597 = vadd.f32 0.0, %v2596
        %v2598 = vpop.f32.mrf.mxu0
        %2599 = vmatprep.mubr.bf16.mxu0 0
        %2600 = vmatmul.mubr.bf16.gmra.mxu0 %v2451
        %v2601 = vpop.f32.mrf.mxu0
        %v2602 = vadd.f32 0.0, %v2601
        %v2603 = vpop.f32.mrf.mxu0
        %v2604 = vpop.f32.mrf.mxu0
        %v2605 = vadd.f32 0.0, %v2604
        %v2606 = vpop.f32.mrf.mxu0
        %2607 = vmatprep.mubr.bf16.mxu0 0
        %2608 = vmatmul.mubr.bf16.gmra.mxu0 %v2452
        %v2609 = vpop.f32.mrf.mxu0
        %v2610 = vadd.f32 0.0, %v2609
        %v2611 = vpop.f32.mrf.mxu0
        %v2612 = vpop.f32.mrf.mxu0
        %v2613 = vadd.f32 0.0, %v2612
        %v2614 = vpop.f32.mrf.mxu0
        %2615 = vmatprep.mubr.bf16.mxu0 0
        %2616 = vmatmul.mubr.bf16.gmra.mxu0 %v2453
        %v2617 = vpop.f32.mrf.mxu0
        %v2618 = vadd.f32 0.0, %v2617
        %v2619 = vpop.f32.mrf.mxu0
        %v2620 = vpop.f32.mrf.mxu0
        %v2621 = vadd.f32 0.0, %v2620
        %v2622 = vpop.f32.mrf.mxu0
        %2623 = vmatprep.mubr.bf16.mxu0 0
        %2624 = vmatmul.mubr.bf16.gmra.mxu0 %v2454
        %v2625 = vpop.f32.mrf.mxu0
        %v2626 = vadd.f32 0.0, %v2625
        %v2627 = vpop.f32.mrf.mxu0
        %v2628 = vpop.f32.mrf.mxu0
        %v2629 = vadd.f32 0.0, %v2628
        %v2630 = vpop.f32.mrf.mxu0
        %2631 = vdwg.mxu0
        %2632 = vmax.xlane.f32.xlu0 %v2570
        %v2633 = vpop.xlane.xlu0 %2632
        %2634 = vmax.xlane.f32.xlu0 %v2573
        %v2635 = vpop.xlane.xlu0 %2634
        %2636 = vmax.xlane.f32.xlu0 %v2578
        %v2637 = vpop.xlane.xlu0 %2636
        %2638 = vmax.xlane.f32.xlu0 %v2581
        %v2639 = vpop.xlane.xlu0 %2638
        %2640 = vmax.xlane.f32.xlu0 %v2586
        %v2641 = vpop.xlane.xlu0 %2640
        %2642 = vmax.xlane.f32.xlu0 %v2589
        %v2643 = vpop.xlane.xlu0 %2642
        %2644 = vmax.xlane.f32.xlu0 %v2594
        %v2645 = vpop.xlane.xlu0 %2644
        %2646 = vmax.xlane.f32.xlu0 %v2597
        %v2647 = vpop.xlane.xlu0 %2646
        %2648 = vmax.xlane.f32.xlu0 %v2602
        %v2649 = vpop.xlane.xlu0 %2648
        %2650 = vmax.xlane.f32.xlu0 %v2605
        %v2651 = vpop.xlane.xlu0 %2650
        %2652 = vmax.xlane.f32.xlu0 %v2610
        %v2653 = vpop.xlane.xlu0 %2652
        %2654 = vmax.xlane.f32.xlu0 %v2613
        %v2655 = vpop.xlane.xlu0 %2654
        %2656 = vmax.xlane.f32.xlu0 %v2618
        %v2657 = vpop.xlane.xlu0 %2656
        %2658 = vmax.xlane.f32.xlu0 %v2621
        %v2659 = vpop.xlane.xlu0 %2658
        %2660 = vmax.xlane.f32.xlu0 %v2626
        %v2661 = vpop.xlane.xlu0 %2660
        %2662 = vmax.xlane.f32.xlu0 %v2629
        %v2663 = vpop.xlane.xlu0 %2662
        %v2664 = vsub.f32 %v2570, %v2633
        %v2665 = vsub.f32 %v2573, %v2635
        %v2666 = vsub.f32 %v2578, %v2637
        %v2667 = vsub.f32 %v2581, %v2639
        %v2668 = vsub.f32 %v2586, %v2641
        %v2669 = vsub.f32 %v2589, %v2643
        %v2670 = vsub.f32 %v2594, %v2645
        %v2671 = vsub.f32 %v2597, %v2647
        %v2672 = vsub.f32 %v2602, %v2649
        %v2673 = vsub.f32 %v2605, %v2651
        %v2674 = vsub.f32 %v2610, %v2653
        %v2675 = vsub.f32 %v2613, %v2655
        %v2676 = vsub.f32 %v2618, %v2657
        %v2677 = vsub.f32 %v2621, %v2659
        %v2678 = vsub.f32 %v2626, %v2661
        %v2679 = vsub.f32 %v2629, %v2663
        %v2680 = vmul.f32 %v2664, 1.442695
        %v2681 = vpow.pop %v2680
        %v2682 = vmul.f32 %v2665, 1.442695
        %v2683 = vpow.pop %v2682
        %v2684 = vmul.f32 %v2666, 1.442695
        %v2685 = vpow.pop %v2684
        %v2686 = vmul.f32 %v2667, 1.442695
        %v2687 = vpow.pop %v2686
        %v2688 = vmul.f32 %v2668, 1.442695
        %v2689 = vpow.pop %v2688
        %v2690 = vmul.f32 %v2669, 1.442695
        %v2691 = vpow.pop %v2690
        %v2692 = vmul.f32 %v2670, 1.442695
        %v2693 = vpow.pop %v2692
        %v2694 = vmul.f32 %v2671, 1.442695
        %v2695 = vpow.pop %v2694
        %v2696 = vmul.f32 %v2672, 1.442695
        %v2697 = vpow.pop %v2696
        %v2698 = vmul.f32 %v2673, 1.442695
        %v2699 = vpow.pop %v2698
        %v2700 = vmul.f32 %v2674, 1.442695
        %v2701 = vpow.pop %v2700
        %v2702 = vmul.f32 %v2675, 1.442695
        %v2703 = vpow.pop %v2702
        %v2704 = vmul.f32 %v2676, 1.442695
        %v2705 = vpow.pop %v2704
        %v2706 = vmul.f32 %v2677, 1.442695
        %v2707 = vpow.pop %v2706
        %v2708 = vmul.f32 %v2678, 1.442695
        %v2709 = vpow.pop %v2708
        %v2710 = vmul.f32 %v2679, 1.442695
        %v2711 = vpow.pop %v2710
        %2712 = vadd.xlane.f32.xlu0 %v2681
        %v2713 = vpop.xlane.xlu0 %2712
        %2714 = vadd.xlane.f32.xlu0 %v2683
        %v2715 = vpop.xlane.xlu0 %2714
        %2716 = vadd.xlane.f32.xlu0 %v2685
        %v2717 = vpop.xlane.xlu0 %2716
        %2718 = vadd.xlane.f32.xlu0 %v2687
        %v2719 = vpop.xlane.xlu0 %2718
        %2720 = vadd.xlane.f32.xlu0 %v2689
        %v2721 = vpop.xlane.xlu0 %2720
        %2722 = vadd.xlane.f32.xlu0 %v2691
        %v2723 = vpop.xlane.xlu0 %2722
        %2724 = vadd.xlane.f32.xlu0 %v2693
        %v2725 = vpop.xlane.xlu0 %2724
        %2726 = vadd.xlane.f32.xlu0 %v2695
        %v2727 = vpop.xlane.xlu0 %2726
        %2728 = vadd.xlane.f32.xlu0 %v2697
        %v2729 = vpop.xlane.xlu0 %2728
        %2730 = vadd.xlane.f32.xlu0 %v2699
        %v2731 = vpop.xlane.xlu0 %2730
        %2732 = vadd.xlane.f32.xlu0 %v2701
        %v2733 = vpop.xlane.xlu0 %2732
        %2734 = vadd.xlane.f32.xlu0 %v2703
        %v2735 = vpop.xlane.xlu0 %2734
        %2736 = vadd.xlane.f32.xlu0 %v2705
        %v2737 = vpop.xlane.xlu0 %2736
        %2738 = vadd.xlane.f32.xlu0 %v2707
        %v2739 = vpop.xlane.xlu0 %2738
        %2740 = vadd.xlane.f32.xlu0 %v2709
        %v2741 = vpop.xlane.xlu0 %2740
        %2742 = vadd.xlane.f32.xlu0 %v2711
        %v2743 = vpop.xlane.xlu0 %2742
        %v2744 = vrcp.pop %v2713
        %v2745 = vrcp.pop %v2715
        %v2746 = vrcp.pop %v2717
        %v2747 = vrcp.pop %v2719
        %v2748 = vrcp.pop %v2721
        %v2749 = vrcp.pop %v2723
        %v2750 = vrcp.pop %v2725
        %v2751 = vrcp.pop %v2727
        %v2752 = vrcp.pop %v2729
        %v2753 = vrcp.pop %v2731
        %v2754 = vrcp.pop %v2733
        %v2755 = vrcp.pop %v2735
        %v2756 = vrcp.pop %v2737
        %v2757 = vrcp.pop %v2739
        %v2758 = vrcp.pop %v2741
        %v2759 = vrcp.pop %v2743
        %v2760 = vmul.f32 %v2681, %v2744
        %v2761 = vmul.f32 %v2683, %v2745
        %v2762 = vmul.f32 %v2685, %v2746
        %v2763 = vmul.f32 %v2687, %v2747
        %v2764 = vmul.f32 %v2689, %v2748
        %v2765 = vmul.f32 %v2691, %v2749
        %v2766 = vmul.f32 %v2693, %v2750
        %v2767 = vmul.f32 %v2695, %v2751
        %v2768 = vmul.f32 %v2697, %v2752
        %v2769 = vmul.f32 %v2699, %v2753
        %v2770 = vmul.f32 %v2701, %v2754
        %v2771 = vmul.f32 %v2703, %v2755
        %v2772 = vmul.f32 %v2705, %v2756
        %v2773 = vmul.f32 %v2707, %v2757
        %v2774 = vmul.f32 %v2709, %v2758
        %v2775 = vmul.f32 %v2711, %v2759
        %v2776 = vpack.c.bf16 %v2761, %v2760
        %v2777 = vpack.c.bf16 %v2763, %v2762
        %v2778 = vpack.c.bf16 %v2765, %v2764
        %v2779 = vpack.c.bf16 %v2767, %v2766
        %v2780 = vpack.c.bf16 %v2769, %v2768
        %v2781 = vpack.c.bf16 %v2771, %v2770
        %v2782 = vpack.c.bf16 %v2773, %v2772
        %v2783 = vpack.c.bf16 %v2775, %v2774
        %v2800 = vunpack.c.l.b16 %v2471
        %v2801 = vunpack.c.l.b16 %v2472
        %v2802 = vunpack.c.l.b16 %v2473
        %v2803 = vunpack.c.l.b16 %v2474
        %v2804 = vunpack.c.l.b16 %v2475
        %v2805 = vunpack.c.l.b16 %v2476
        %v2806 = vunpack.c.l.b16 %v2477
        %v2807 = vunpack.c.l.b16 %v2478
        %v2808 = vunpack.c.l.b16 %v2479
        %v2809 = vunpack.c.l.b16 %v2480
        %v2810 = vunpack.c.l.b16 %v2481
        %v2811 = vunpack.c.l.b16 %v2482
        %v2812 = vunpack.c.l.b16 %v2483
        %v2813 = vunpack.c.l.b16 %v2484
        %v2814 = vunpack.c.l.b16 %v2485
        %v2815 = vunpack.c.l.b16 %v2486
        %v2816 = vpack.c.b16 %v2801, %v2800
        %v2817 = vpack.c.b16 %v2803, %v2802
        %v2818 = vpack.c.b16 %v2805, %v2804
        %v2819 = vpack.c.b16 %v2807, %v2806
        %v2820 = vpack.c.b16 %v2809, %v2808
        %v2821 = vpack.c.b16 %v2811, %v2810
        %v2822 = vpack.c.b16 %v2813, %v2812
        %v2823 = vpack.c.b16 %v2815, %v2814
        %2832 = vmatprep.subr.bf16.mxu0 0
        %2833 = vmatpush1.bf16.msra.mxu0 %v2823
        %2834 = vmatprep.subr.bf16.mxu0 0
        %2835 = vmatpush1.bf16.msra.mxu0 %v2822
        %2836 = vmatprep.subr.bf16.mxu0 0
        %2837 = vmatpush1.bf16.msra.mxu0 %v2821
        %2838 = vmatprep.subr.bf16.mxu0 0
        %2839 = vmatpush1.bf16.msra.mxu0 %v2820
        %2840 = vmatprep.subr.bf16.mxu0 0
        %2841 = vmatpush1.bf16.msra.mxu0 %v2819
        %2842 = vmatprep.subr.bf16.mxu0 0
        %2843 = vmatpush1.bf16.msra.mxu0 %v2818
        %2844 = vmatprep.subr.bf16.mxu0 0
        %2845 = vmatpush1.bf16.msra.mxu0 %v2817
        %2846 = vmatprep.subr.bf16.mxu0 0
        %2847 = vmatpush1.bf16.msra.mxu0 %v2816
        %2848 = vmatprep.subr.bf16.mxu0 0
        %2849 = vmatpush2.bf16.msra.mxu0 0
        %2850 = vmatprep.subr.bf16.mxu0 0
        %2851 = vmatpush2.bf16.msra.mxu0 0
        %2852 = vmatprep.subr.bf16.mxu0 0
        %2853 = vmatpush2.bf16.msra.mxu0 0
        %2854 = vmatprep.subr.bf16.mxu0 0
        %2855 = vmatpush2.bf16.msra.mxu0 0
        %2856 = vmatprep.subr.bf16.mxu0 0
        %2857 = vmatpush2.bf16.msra.mxu0 0
        %2858 = vmatprep.subr.bf16.mxu0 0
        %2859 = vmatpush2.bf16.msra.mxu0 0
        %2860 = vmatprep.subr.bf16.mxu0 0
        %2861 = vmatpush2.bf16.msra.mxu0 0
        %2862 = vmatprep.subr.bf16.mxu0 0
        %2863 = vmatpush2.bf16.msra.mxu0 0
        %2864 = vmatprep.mubr.bf16.mxu0 0
        %2865 = vmatmul.mubr.bf16.gmra.mxu0 %v2776
        %v2866 = vpop.f32.mrf.mxu0
        %v2867 = vadd.f32 0.0, %v2866
        %v2868 = vpop.f32.mrf.mxu0
        %v2869 = vpop.f32.mrf.mxu0
        %v2870 = vadd.f32 0.0, %v2869
        %v2871 = vpop.f32.mrf.mxu0
        %2872 = vmatprep.mubr.bf16.mxu0 0
        %2873 = vmatmul.mubr.bf16.gmra.mxu0 %v2777
        %v2874 = vpop.f32.mrf.mxu0
        %v2875 = vadd.f32 0.0, %v2874
        %v2876 = vpop.f32.mrf.mxu0
        %v2877 = vpop.f32.mrf.mxu0
        %v2878 = vadd.f32 0.0, %v2877
        %v2879 = vpop.f32.mrf.mxu0
        %2880 = vmatprep.mubr.bf16.mxu0 0
        %2881 = vmatmul.mubr.bf16.gmra.mxu0 %v2778
        %v2882 = vpop.f32.mrf.mxu0
        %v2883 = vadd.f32 0.0, %v2882
        %v2884 = vpop.f32.mrf.mxu0
        %v2885 = vpop.f32.mrf.mxu0
        %v2886 = vadd.f32 0.0, %v2885
        %v2887 = vpop.f32.mrf.mxu0
        %2888 = vmatprep.mubr.bf16.mxu0 0
        %2889 = vmatmul.mubr.bf16.gmra.mxu0 %v2779
        %v2890 = vpop.f32.mrf.mxu0
        %v2891 = vadd.f32 0.0, %v2890
        %v2892 = vpop.f32.mrf.mxu0
        %v2893 = vpop.f32.mrf.mxu0
        %v2894 = vadd.f32 0.0, %v2893
        %v2895 = vpop.f32.mrf.mxu0
        %2896 = vmatprep.mubr.bf16.mxu0 0
        %2897 = vmatmul.mubr.bf16.gmra.mxu0 %v2780
        %v2898 = vpop.f32.mrf.mxu0
        %v2899 = vadd.f32 0.0, %v2898
        %v2900 = vpop.f32.mrf.mxu0
        %v2901 = vpop.f32.mrf.mxu0
        %v2902 = vadd.f32 0.0, %v2901
        %v2903 = vpop.f32.mrf.mxu0
        %2904 = vmatprep.mubr.bf16.mxu0 0
        %2905 = vmatmul.mubr.bf16.gmra.mxu0 %v2781
        %v2906 = vpop.f32.mrf.mxu0
        %v2907 = vadd.f32 0.0, %v2906
        %v2908 = vpop.f32.mrf.mxu0
        %v2909 = vpop.f32.mrf.mxu0
        %v2910 = vadd.f32 0.0, %v2909
        %v2911 = vpop.f32.mrf.mxu0
        %2912 = vmatprep.mubr.bf16.mxu0 0
        %2913 = vmatmul.mubr.bf16.gmra.mxu0 %v2782
        %v2914 = vpop.f32.mrf.mxu0
        %v2915 = vadd.f32 0.0, %v2914
        %v2916 = vpop.f32.mrf.mxu0
        %v2917 = vpop.f32.mrf.mxu0
        %v2918 = vadd.f32 0.0, %v2917
        %v2919 = vpop.f32.mrf.mxu0
        %2920 = vmatprep.mubr.bf16.mxu0 0
        %2921 = vmatmul.mubr.bf16.gmra.mxu0 %v2783
        %v2922 = vpop.f32.mrf.mxu0
        %v2923 = vadd.f32 0.0, %v2922
        %v2924 = vpop.f32.mrf.mxu0
        %v2925 = vpop.f32.mrf.mxu0
        %v2926 = vadd.f32 0.0, %v2925
        %v2927 = vpop.f32.mrf.mxu0
        %2928 = vdwg.mxu0
        %v2929 = vpack.c.bf16 %v2870, %v2867
        %v2930 = vpack.c.bf16 %v2878, %v2875
        %v2931 = vpack.c.bf16 %v2886, %v2883
        %v2932 = vpack.c.bf16 %v2894, %v2891
        %v2933 = vpack.c.bf16 %v2902, %v2899
        %v2934 = vpack.c.bf16 %v2910, %v2907
        %v2935 = vpack.c.bf16 %v2918, %v2915
        %v2936 = vpack.c.bf16 %v2926, %v2923
        %v2945 = vunpack.c.l.b16 %v2929
        %v2946 = vunpack.c.h.b16 %v2929
        %v2947 = vunpack.c.l.b16 %v2930
        %v2948 = vunpack.c.h.b16 %v2930
        %v2949 = vunpack.c.l.b16 %v2931
        %v2950 = vunpack.c.h.b16 %v2931
        %v2951 = vunpack.c.l.b16 %v2932
        %v2952 = vunpack.c.h.b16 %v2932
        %v2953 = vunpack.c.l.b16 %v2933
        %v2954 = vunpack.c.h.b16 %v2933
        %v2955 = vunpack.c.l.b16 %v2934
        %v2956 = vunpack.c.h.b16 %v2934
        %v2957 = vunpack.c.l.b16 %v2935
        %v2958 = vunpack.c.h.b16 %v2935
        %v2959 = vunpack.c.l.b16 %v2936
        %v2960 = vunpack.c.h.b16 %v2936
        %v2961 = vpack.c.b16 %v2945, %v2945
        %v2962 = vpack.c.b16 %v2946, %v2946
        %v2963 = vpack.c.b16 %v2947, %v2947
        %v2964 = vpack.c.b16 %v2948, %v2948
        %v2965 = vpack.c.b16 %v2949, %v2949
        %v2966 = vpack.c.b16 %v2950, %v2950
        %v2967 = vpack.c.b16 %v2951, %v2951
        %v2968 = vpack.c.b16 %v2952, %v2952
        %v2969 = vpack.c.b16 %v2953, %v2953
        %v2970 = vpack.c.b16 %v2954, %v2954
        %v2971 = vpack.c.b16 %v2955, %v2955
        %v2972 = vpack.c.b16 %v2956, %v2956
        %v2973 = vpack.c.b16 %v2957, %v2957
        %v2974 = vpack.c.b16 %v2958, %v2958
        %v2975 = vpack.c.b16 %v2959, %v2959
        %v2976 = vpack.c.b16 %v2960, %v2960
        %2993 = vst [vmem:[#allocation2 + $0x4] sm:$0xf] %v2961
        %2994 = vst [vmem:[#allocation2 + $0xc] sm:$0xf] %v2962
        %2995 = vst [vmem:[#allocation2 + $0x14] sm:$0xf] %v2963
        %2996 = vst [vmem:[#allocation2 + $0x1c] sm:$0xf] %v2964
        %2997 = vst [vmem:[#allocation2 + $0x24] sm:$0xf] %v2965
        %2998 = vst [vmem:[#allocation2 + $0x2c] sm:$0xf] %v2966
        %2999 = vst [vmem:[#allocation2 + $0x34] sm:$0xf] %v2967
        %3000 = vst [vmem:[#allocation2 + $0x3c] sm:$0xf] %v2968
        %3001 = vst [vmem:[#allocation2 + $0x44] sm:$0xf] %v2969
        %3002 = vst [vmem:[#allocation2 + $0x4c] sm:$0xf] %v2970
        %3003 = vst [vmem:[#allocation2 + $0x54] sm:$0xf] %v2971
        %3004 = vst [vmem:[#allocation2 + $0x5c] sm:$0xf] %v2972
        %3005 = vst [vmem:[#allocation2 + $0x64] sm:$0xf] %v2973
        %3006 = vst [vmem:[#allocation2 + $0x6c] sm:$0xf] %v2974
        %3007 = vst [vmem:[#allocation2 + $0x74] sm:$0xf] %v2975
        %3008 = vst [vmem:[#allocation2 + $0x7c] sm:$0xf] %v2976
        %v3009 = vld [vmem:[#allocation2] sm:$0xff]
        %v3010 = vld [vmem:[#allocation2 + $0x8] sm:$0xff]
        %v3011 = vld [vmem:[#allocation2 + $0x10] sm:$0xff]
        %v3012 = vld [vmem:[#allocation2 + $0x18] sm:$0xff]
        %v3013 = vld [vmem:[#allocation2 + $0x20] sm:$0xff]
        %v3014 = vld [vmem:[#allocation2 + $0x28] sm:$0xff]
        %v3015 = vld [vmem:[#allocation2 + $0x30] sm:$0xff]
        %v3016 = vld [vmem:[#allocation2 + $0x38] sm:$0xff]
        %v3017 = vld [vmem:[#allocation2 + $0x40] sm:$0xff]
        %v3018 = vld [vmem:[#allocation2 + $0x48] sm:$0xff]
        %v3019 = vld [vmem:[#allocation2 + $0x50] sm:$0xff]
        %v3020 = vld [vmem:[#allocation2 + $0x58] sm:$0xff]
        %v3021 = vld [vmem:[#allocation2 + $0x60] sm:$0xff]
        %v3022 = vld [vmem:[#allocation2 + $0x68] sm:$0xff]
        %v3023 = vld [vmem:[#allocation2 + $0x70] sm:$0xff]
        %v3024 = vld [vmem:[#allocation2 + $0x78] sm:$0xff]
        %v3025 = vld [vmem:[#allocation16] sm:$0xff]
        %v3026 = vld [vmem:[#allocation16 + $0x8] sm:$0xff]
        %v3027 = vld [vmem:[#allocation16 + $0x10] sm:$0xff]
        %v3028 = vld [vmem:[#allocation16 + $0x18] sm:$0xff]
        %v3029 = vld [vmem:[#allocation16 + $0x20] sm:$0xff]
        %v3030 = vld [vmem:[#allocation16 + $0x28] sm:$0xff]
        %v3031 = vld [vmem:[#allocation16 + $0x30] sm:$0xff]
        %v3032 = vld [vmem:[#allocation16 + $0x38] sm:$0xff]
        %v3033 = vld [vmem:[#allocation16 + $0x40] sm:$0xff]
        %v3034 = vld [vmem:[#allocation16 + $0x48] sm:$0xff]
        %v3035 = vld [vmem:[#allocation16 + $0x50] sm:$0xff]
        %v3036 = vld [vmem:[#allocation16 + $0x58] sm:$0xff]
        %v3037 = vld [vmem:[#allocation16 + $0x60] sm:$0xff]
        %v3038 = vld [vmem:[#allocation16 + $0x68] sm:$0xff]
        %v3039 = vld [vmem:[#allocation16 + $0x70] sm:$0xff]
        %v3040 = vld [vmem:[#allocation16 + $0x78] sm:$0xff]
        %v3041 = vld [vmem:[#allocation16 + $0x80] sm:$0xff]
        %v3042 = vld [vmem:[#allocation16 + $0x88] sm:$0xff]
        %v3043 = vld [vmem:[#allocation16 + $0x90] sm:$0xff]
        %v3044 = vld [vmem:[#allocation16 + $0x98] sm:$0xff]
        %v3045 = vld [vmem:[#allocation16 + $0xa0] sm:$0xff]
        %v3046 = vld [vmem:[#allocation16 + $0xa8] sm:$0xff]
        %v3047 = vld [vmem:[#allocation16 + $0xb0] sm:$0xff]
        %v3048 = vld [vmem:[#allocation16 + $0xb8] sm:$0xff]
        %v3049 = vld [vmem:[#allocation16 + $0xc0] sm:$0xff]
        %v3050 = vld [vmem:[#allocation16 + $0xc8] sm:$0xff]
        %v3051 = vld [vmem:[#allocation16 + $0xd0] sm:$0xff]
        %v3052 = vld [vmem:[#allocation16 + $0xd8] sm:$0xff]
        %v3053 = vld [vmem:[#allocation16 + $0xe0] sm:$0xff]
        %v3054 = vld [vmem:[#allocation16 + $0xe8] sm:$0xff]
        %v3055 = vld [vmem:[#allocation16 + $0xf0] sm:$0xff]
        %v3056 = vld [vmem:[#allocation16 + $0xf8] sm:$0xff]
        %v3057 = vld [vmem:[%s10] sm:$0x3]
        %v3059 = vlaneseq
        %v3060 = vshrl.u32 %v3059, 7
        %v3061 = vsub.s32 0, %v3060
        %v3062 = vrot.slane %v3057, %v3061
        %v3063 = vlaneseq
        %v3064 = vshrl.u32 %v3063, 7
        %v3065 = vsub.s32 1, %v3064
        %v3066 = vrot.slane %v3057, %v3065
        %v3085 = vunpack.c.l.b16 %v3009
        %v3086 = vunpack.c.h.b16 %v3009
        %v3087 = vunpack.c.l.b16 %v3010
        %v3088 = vunpack.c.h.b16 %v3010
        %v3089 = vunpack.c.l.b16 %v3011
        %v3090 = vunpack.c.h.b16 %v3011
        %v3091 = vunpack.c.l.b16 %v3012
        %v3092 = vunpack.c.h.b16 %v3012
        %v3093 = vunpack.c.l.b16 %v3013
        %v3094 = vunpack.c.h.b16 %v3013
        %v3095 = vunpack.c.l.b16 %v3014
        %v3096 = vunpack.c.h.b16 %v3014
        %v3097 = vunpack.c.l.b16 %v3015
        %v3098 = vunpack.c.h.b16 %v3015
        %v3099 = vunpack.c.l.b16 %v3016
        %v3100 = vunpack.c.h.b16 %v3016
        %v3101 = vunpack.c.l.b16 %v3017
        %v3102 = vunpack.c.h.b16 %v3017
        %v3103 = vunpack.c.l.b16 %v3018
        %v3104 = vunpack.c.h.b16 %v3018
        %v3105 = vunpack.c.l.b16 %v3019
        %v3106 = vunpack.c.h.b16 %v3019
        %v3107 = vunpack.c.l.b16 %v3020
        %v3108 = vunpack.c.h.b16 %v3020
        %v3109 = vunpack.c.l.b16 %v3021
        %v3110 = vunpack.c.h.b16 %v3021
        %v3111 = vunpack.c.l.b16 %v3022
        %v3112 = vunpack.c.h.b16 %v3022
        %v3113 = vunpack.c.l.b16 %v3023
        %v3114 = vunpack.c.h.b16 %v3023
        %v3115 = vunpack.c.l.b16 %v3024
        %v3116 = vunpack.c.h.b16 %v3024
        %v3117 = vpack.c.b16 %v3087, %v3085
        %v3118 = vpack.c.b16 %v3088, %v3086
        %v3119 = vpack.c.b16 %v3091, %v3089
        %v3120 = vpack.c.b16 %v3092, %v3090
        %v3121 = vpack.c.b16 %v3095, %v3093
        %v3122 = vpack.c.b16 %v3096, %v3094
        %v3123 = vpack.c.b16 %v3099, %v3097
        %v3124 = vpack.c.b16 %v3100, %v3098
        %v3125 = vpack.c.b16 %v3103, %v3101
        %v3126 = vpack.c.b16 %v3104, %v3102
        %v3127 = vpack.c.b16 %v3107, %v3105
        %v3128 = vpack.c.b16 %v3108, %v3106
        %v3129 = vpack.c.b16 %v3111, %v3109
        %v3130 = vpack.c.b16 %v3112, %v3110
        %v3131 = vpack.c.b16 %v3115, %v3113
        %v3132 = vpack.c.b16 %v3116, %v3114
        %v3181 = vunpack.c.l.b16 %v3025
        %v3182 = vunpack.c.h.b16 %v3025
        %v3183 = vunpack.c.l.b16 %v3026
        %v3184 = vunpack.c.h.b16 %v3026
        %v3185 = vunpack.c.l.b16 %v3027
        %v3186 = vunpack.c.h.b16 %v3027
        %v3187 = vunpack.c.l.b16 %v3028
        %v3188 = vunpack.c.h.b16 %v3028
        %v3189 = vunpack.c.l.b16 %v3029
        %v3190 = vunpack.c.h.b16 %v3029
        %v3191 = vunpack.c.l.b16 %v3030
        %v3192 = vunpack.c.h.b16 %v3030
        %v3193 = vunpack.c.l.b16 %v3031
        %v3194 = vunpack.c.h.b16 %v3031
        %v3195 = vunpack.c.l.b16 %v3032
        %v3196 = vunpack.c.h.b16 %v3032
        %v3197 = vunpack.c.l.b16 %v3033
        %v3198 = vunpack.c.h.b16 %v3033
        %v3199 = vunpack.c.l.b16 %v3034
        %v3200 = vunpack.c.h.b16 %v3034
        %v3201 = vunpack.c.l.b16 %v3035
        %v3202 = vunpack.c.h.b16 %v3035
        %v3203 = vunpack.c.l.b16 %v3036
        %v3204 = vunpack.c.h.b16 %v3036
        %v3205 = vunpack.c.l.b16 %v3037
        %v3206 = vunpack.c.h.b16 %v3037
        %v3207 = vunpack.c.l.b16 %v3038
        %v3208 = vunpack.c.h.b16 %v3038
        %v3209 = vunpack.c.l.b16 %v3039
        %v3210 = vunpack.c.h.b16 %v3039
        %v3211 = vunpack.c.l.b16 %v3040
        %v3212 = vunpack.c.h.b16 %v3040
        %v3213 = vunpack.c.l.b16 %v3041
        %v3214 = vunpack.c.h.b16 %v3041
        %v3215 = vunpack.c.l.b16 %v3042
        %v3216 = vunpack.c.h.b16 %v3042
        %v3217 = vunpack.c.l.b16 %v3043
        %v3218 = vunpack.c.h.b16 %v3043
        %v3219 = vunpack.c.l.b16 %v3044
        %v3220 = vunpack.c.h.b16 %v3044
        %v3221 = vunpack.c.l.b16 %v3045
        %v3222 = vunpack.c.h.b16 %v3045
        %v3223 = vunpack.c.l.b16 %v3046
        %v3224 = vunpack.c.h.b16 %v3046
        %v3225 = vunpack.c.l.b16 %v3047
        %v3226 = vunpack.c.h.b16 %v3047
        %v3227 = vunpack.c.l.b16 %v3048
        %v3228 = vunpack.c.h.b16 %v3048
        %v3229 = vunpack.c.l.b16 %v3049
        %v3230 = vunpack.c.h.b16 %v3049
        %v3231 = vunpack.c.l.b16 %v3050
        %v3232 = vunpack.c.h.b16 %v3050
        %v3233 = vunpack.c.l.b16 %v3051
        %v3234 = vunpack.c.h.b16 %v3051
        %v3235 = vunpack.c.l.b16 %v3052
        %v3236 = vunpack.c.h.b16 %v3052
        %v3237 = vunpack.c.l.b16 %v3053
        %v3238 = vunpack.c.h.b16 %v3053
        %v3239 = vunpack.c.l.b16 %v3054
        %v3240 = vunpack.c.h.b16 %v3054
        %v3241 = vunpack.c.l.b16 %v3055
        %v3242 = vunpack.c.h.b16 %v3055
        %v3243 = vunpack.c.l.b16 %v3056
        %v3244 = vunpack.c.h.b16 %v3056
        %v3245 = vpack.c.b16 %v3183, %v3181
        %v3246 = vpack.c.b16 %v3184, %v3182
        %v3247 = vpack.c.b16 %v3187, %v3185
        %v3248 = vpack.c.b16 %v3188, %v3186
        %v3249 = vpack.c.b16 %v3191, %v3189
        %v3250 = vpack.c.b16 %v3192, %v3190
        %v3251 = vpack.c.b16 %v3195, %v3193
        %v3252 = vpack.c.b16 %v3196, %v3194
        %v3253 = vpack.c.b16 %v3199, %v3197
        %v3254 = vpack.c.b16 %v3200, %v3198
        %v3255 = vpack.c.b16 %v3203, %v3201
        %v3256 = vpack.c.b16 %v3204, %v3202
        %v3257 = vpack.c.b16 %v3207, %v3205
        %v3258 = vpack.c.b16 %v3208, %v3206
        %v3259 = vpack.c.b16 %v3211, %v3209
        %v3260 = vpack.c.b16 %v3212, %v3210
        %v3261 = vpack.c.b16 %v3215, %v3213
        %v3262 = vpack.c.b16 %v3216, %v3214
        %v3263 = vpack.c.b16 %v3219, %v3217
        %v3264 = vpack.c.b16 %v3220, %v3218
        %v3265 = vpack.c.b16 %v3223, %v3221
        %v3266 = vpack.c.b16 %v3224, %v3222
        %v3267 = vpack.c.b16 %v3227, %v3225
        %v3268 = vpack.c.b16 %v3228, %v3226
        %v3269 = vpack.c.b16 %v3231, %v3229
        %v3270 = vpack.c.b16 %v3232, %v3230
        %v3271 = vpack.c.b16 %v3235, %v3233
        %v3272 = vpack.c.b16 %v3236, %v3234
        %v3273 = vpack.c.b16 %v3239, %v3237
        %v3274 = vpack.c.b16 %v3240, %v3238
        %v3275 = vpack.c.b16 %v3243, %v3241
        %v3276 = vpack.c.b16 %v3244, %v3242
        %3309 = vmatprep.subr.bf16.mxu0 %v3260
        %3310 = vmatpush1.bf16.msra.mxu0 %v3259
        %3311 = vmatprep.subr.bf16.mxu0 %v3258
        %3312 = vmatpush1.bf16.msra.mxu0 %v3257
        %3313 = vmatprep.subr.bf16.mxu0 %v3256
        %3314 = vmatpush1.bf16.msra.mxu0 %v3255
        %3315 = vmatprep.subr.bf16.mxu0 %v3254
        %3316 = vmatpush1.bf16.msra.mxu0 %v3253
        %3317 = vmatprep.subr.bf16.mxu0 %v3252
        %3318 = vmatpush1.bf16.msra.mxu0 %v3251
        %3319 = vmatprep.subr.bf16.mxu0 %v3250
        %3320 = vmatpush1.bf16.msra.mxu0 %v3249
        %3321 = vmatprep.subr.bf16.mxu0 %v3248
        %3322 = vmatpush1.bf16.msra.mxu0 %v3247
        %3323 = vmatprep.subr.bf16.mxu0 %v3246
        %3324 = vmatpush1.bf16.msra.mxu0 %v3245
        %3325 = vmatprep.subr.bf16.mxu0 %v3276
        %3326 = vmatpush2.bf16.msra.mxu0 %v3275
        %3327 = vmatprep.subr.bf16.mxu0 %v3274
        %3328 = vmatpush2.bf16.msra.mxu0 %v3273
        %3329 = vmatprep.subr.bf16.mxu0 %v3272
        %3330 = vmatpush2.bf16.msra.mxu0 %v3271
        %3331 = vmatprep.subr.bf16.mxu0 %v3270
        %3332 = vmatpush2.bf16.msra.mxu0 %v3269
        %3333 = vmatprep.subr.bf16.mxu0 %v3268
        %3334 = vmatpush2.bf16.msra.mxu0 %v3267
        %3335 = vmatprep.subr.bf16.mxu0 %v3266
        %3336 = vmatpush2.bf16.msra.mxu0 %v3265
        %3337 = vmatprep.subr.bf16.mxu0 %v3264
        %3338 = vmatpush2.bf16.msra.mxu0 %v3263
        %3339 = vmatprep.subr.bf16.mxu0 %v3262
        %3340 = vmatpush2.bf16.msra.mxu0 %v3261
        %3341 = vmatprep.mubr.bf16.mxu0 %v3118
        %3342 = vmatmul.mubr.bf16.gmra.mxu0 %v3117
        %v3343 = vpop.f32.mrf.mxu0
        %v3344 = vadd.f32 %v3062, %v3343
        %v3345 = vpop.f32.mrf.mxu0
        %v3346 = vadd.f32 %v3066, %v3345
        %v3347 = vpop.f32.mrf.mxu0
        %v3348 = vadd.f32 %v3062, %v3347
        %v3349 = vpop.f32.mrf.mxu0
        %v3350 = vadd.f32 %v3066, %v3349
        %3351 = vmatprep.mubr.bf16.mxu0 %v3120
        %3352 = vmatmul.mubr.bf16.gmra.mxu0 %v3119
        %v3353 = vpop.f32.mrf.mxu0
        %v3354 = vadd.f32 %v3062, %v3353
        %v3355 = vpop.f32.mrf.mxu0
        %v3356 = vadd.f32 %v3066, %v3355
        %v3357 = vpop.f32.mrf.mxu0
        %v3358 = vadd.f32 %v3062, %v3357
        %v3359 = vpop.f32.mrf.mxu0
        %v3360 = vadd.f32 %v3066, %v3359
        %3361 = vmatprep.mubr.bf16.mxu0 %v3122
        %3362 = vmatmul.mubr.bf16.gmra.mxu0 %v3121
        %v3363 = vpop.f32.mrf.mxu0
        %v3364 = vadd.f32 %v3062, %v3363
        %v3365 = vpop.f32.mrf.mxu0
        %v3366 = vadd.f32 %v3066, %v3365
        %v3367 = vpop.f32.mrf.mxu0
        %v3368 = vadd.f32 %v3062, %v3367
        %v3369 = vpop.f32.mrf.mxu0
        %v3370 = vadd.f32 %v3066, %v3369
        %3371 = vmatprep.mubr.bf16.mxu0 %v3124
        %3372 = vmatmul.mubr.bf16.gmra.mxu0 %v3123
        %v3373 = vpop.f32.mrf.mxu0
        %v3374 = vadd.f32 %v3062, %v3373
        %v3375 = vpop.f32.mrf.mxu0
        %v3376 = vadd.f32 %v3066, %v3375
        %v3377 = vpop.f32.mrf.mxu0
        %v3378 = vadd.f32 %v3062, %v3377
        %v3379 = vpop.f32.mrf.mxu0
        %v3380 = vadd.f32 %v3066, %v3379
        %3381 = vmatprep.mubr.bf16.mxu0 %v3126
        %3382 = vmatmul.mubr.bf16.gmra.mxu0 %v3125
        %v3383 = vpop.f32.mrf.mxu0
        %v3384 = vadd.f32 %v3062, %v3383
        %v3385 = vpop.f32.mrf.mxu0
        %v3386 = vadd.f32 %v3066, %v3385
        %v3387 = vpop.f32.mrf.mxu0
        %v3388 = vadd.f32 %v3062, %v3387
        %v3389 = vpop.f32.mrf.mxu0
        %v3390 = vadd.f32 %v3066, %v3389
        %3391 = vmatprep.mubr.bf16.mxu0 %v3128
        %3392 = vmatmul.mubr.bf16.gmra.mxu0 %v3127
        %v3393 = vpop.f32.mrf.mxu0
        %v3394 = vadd.f32 %v3062, %v3393
        %v3395 = vpop.f32.mrf.mxu0
        %v3396 = vadd.f32 %v3066, %v3395
        %v3397 = vpop.f32.mrf.mxu0
        %v3398 = vadd.f32 %v3062, %v3397
        %v3399 = vpop.f32.mrf.mxu0
        %v3400 = vadd.f32 %v3066, %v3399
        %3401 = vmatprep.mubr.bf16.mxu0 %v3130
        %3402 = vmatmul.mubr.bf16.gmra.mxu0 %v3129
        %v3403 = vpop.f32.mrf.mxu0
        %v3404 = vadd.f32 %v3062, %v3403
        %v3405 = vpop.f32.mrf.mxu0
        %v3406 = vadd.f32 %v3066, %v3405
        %v3407 = vpop.f32.mrf.mxu0
        %v3408 = vadd.f32 %v3062, %v3407
        %v3409 = vpop.f32.mrf.mxu0
        %v3410 = vadd.f32 %v3066, %v3409
        %3411 = vmatprep.mubr.bf16.mxu0 %v3132
        %3412 = vmatmul.mubr.bf16.gmra.mxu0 %v3131
        %v3413 = vpop.f32.mrf.mxu0
        %v3414 = vadd.f32 %v3062, %v3413
        %v3415 = vpop.f32.mrf.mxu0
        %v3416 = vadd.f32 %v3066, %v3415
        %v3417 = vpop.f32.mrf.mxu0
        %v3418 = vadd.f32 %v3062, %v3417
        %v3419 = vpop.f32.mrf.mxu0
        %v3420 = vadd.f32 %v3066, %v3419
        %3421 = vdwg.mxu0
        %3422 = vst [vmem:[%s558] sm:$0xff] %v3344
        %3423 = vst [vmem:[%s558 + $0x8] sm:$0xff] %v3346
        %3424 = vst [vmem:[%s558 + $0x10] sm:$0xff] %v3348
        %3425 = vst [vmem:[%s558 + $0x18] sm:$0xff] %v3350
        %3426 = vst [vmem:[%s558 + $0x20] sm:$0xff] %v3354
        %3427 = vst [vmem:[%s558 + $0x28] sm:$0xff] %v3356
        %3428 = vst [vmem:[%s558 + $0x30] sm:$0xff] %v3358
        %3429 = vst [vmem:[%s558 + $0x38] sm:$0xff] %v3360
        %3430 = vst [vmem:[%s558 + $0x40] sm:$0xff] %v3364
        %3431 = vst [vmem:[%s558 + $0x48] sm:$0xff] %v3366
        %3432 = vst [vmem:[%s558 + $0x50] sm:$0xff] %v3368
        %3433 = vst [vmem:[%s558 + $0x58] sm:$0xff] %v3370
        %3434 = vst [vmem:[%s558 + $0x60] sm:$0xff] %v3374
        %3435 = vst [vmem:[%s558 + $0x68] sm:$0xff] %v3376
        %3436 = vst [vmem:[%s558 + $0x70] sm:$0xff] %v3378
        %3437 = vst [vmem:[%s558 + $0x78] sm:$0xff] %v3380
        %3438 = vst [vmem:[%s558 + $0x80] sm:$0xff] %v3384
        %3439 = vst [vmem:[%s558 + $0x88] sm:$0xff] %v3386
        %3440 = vst [vmem:[%s558 + $0x90] sm:$0xff] %v3388
        %3441 = vst [vmem:[%s558 + $0x98] sm:$0xff] %v3390
        %3442 = vst [vmem:[%s558 + $0xa0] sm:$0xff] %v3394
        %3443 = vst [vmem:[%s558 + $0xa8] sm:$0xff] %v3396
        %3444 = vst [vmem:[%s558 + $0xb0] sm:$0xff] %v3398
        %3445 = vst [vmem:[%s558 + $0xb8] sm:$0xff] %v3400
        %3446 = vst [vmem:[%s558 + $0xc0] sm:$0xff] %v3404
        %3447 = vst [vmem:[%s558 + $0xc8] sm:$0xff] %v3406
        %3448 = vst [vmem:[%s558 + $0xd0] sm:$0xff] %v3408
        %3449 = vst [vmem:[%s558 + $0xd8] sm:$0xff] %v3410
        %3450 = vst [vmem:[%s558 + $0xe0] sm:$0xff] %v3414
        %3451 = vst [vmem:[%s558 + $0xe8] sm:$0xff] %v3416
        %3452 = vst [vmem:[%s558 + $0xf0] sm:$0xff] %v3418
        %3453 = vst [vmem:[%s558 + $0xf8] sm:$0xff] %v3420
        %s3454 = sand.u32 %s303, 1
        %s3455 = scalar_lea.sflag [#allocation7], %s3454
        %s3456 = sand.u32 %s303, 1
        %s3457 = smul.addr %s3456, 256
        %s3458 = scalar_lea.vmem [#allocation17], %s3457
        // Predicated region
        $region97: #{tpu_custom_call.1} parent=63 // pred_check
          %p3459 = pneg %p313
        $region98: #{tpu_custom_call.1} parent=63 // pred_check_branch
          %3461 = sbr.rel (%p3459) target = $region100
        $region99: #{tpu_custom_call.1} parent=63 // pred_region
          %s3462 = smul.u32 16, %s38
          %s3464 = ssub.s32 4096, 4096
          %3465 = vsyncadd %s3455, %s3464
          %s3466 = smul.addr %s3462, 2
          %s3467 = smul.addr %s37, 32
          %s3468 = sadd.s32 %s3466, %s3467
          %s3469 = smul.addr %s3468, 128
          %s3470 = scalar_lea.hbm %s11, %s3469
          %s3471 = sshll.u32 %s3458, 4
          %s3472 = int_to_ptr.vmem [resolvable:$true] %s3471
          %3477 = dma.vmem_to_hbm [thread:$0]  %s3472, 4096, %s3470, %s3455, 256, 256, 16
        $region100: #{tpu_custom_call.1} parent=63 // pred_fallthru
          _
      $region64: #{tpu_custom_call.1} parent=5 // pred_fallthru
        _
      %p3478 = scmp.le.s32.totalorder 2, %s28
      // Predicated region
      $region101: #{tpu_custom_call.1} parent=5 // pred_check
        %p3479 = pneg %p3478
      $region102: #{tpu_custom_call.1} parent=5 // pred_check_branch
        %3481 = sbr.rel (%p3479) target = $region104
      $region103: #{tpu_custom_call.1} parent=5 // pred_region
        %s3482 = ssub.s32 %s28, 2
        // Predicated region
        $region105: #{tpu_custom_call.1} parent=103 // pred_check
          %p3483 = pneg %p319
        $region106: #{tpu_custom_call.1} parent=103 // pred_check_branch
          %3485 = sbr.rel (%p3483) target = $region108
        $region107: #{tpu_custom_call.1} parent=103 // pred_region
          %s3486 = sand.u32 %s304, 1
          %s3487 = scalar_lea.sflag [#allocation7], %s3486
          %s3488 = sand.u32 %s304, 1
          %s3489 = smul.addr %s3488, 256
          %s3490 = scalar_lea.vmem [#allocation17], %s3489
          %3491 = dma.done %s3487, 4096
        $region108: #{tpu_custom_call.1} parent=103 // pred_fallthru
          _
      $region104: #{tpu_custom_call.1} parent=5 // pred_fallthru
        _
    $region6: #{tpu_custom_call.1} parent=1 // loop_footer
      %s32 = sadd.s32 1, %s28
    $region7: #{tpu_custom_call.1} parent=1 // loop_footer_branch
      %27 = sbr.rel target = $region3
    $region8: #{tpu_custom_call.1} parent=1 // loop_exit
      _
    %3492 = vsyncpa [#allocation6], 1
    %s3493 = scalar_lea.sflag [#allocation6], 1
    %3494 = vsyncpa %s3493, 1
    %3495 = vsyncpa [#allocation9], 1
    %s3496 = scalar_lea.sflag [#allocation9], 1
    %3497 = vsyncpa %s3496, 1
    %3498 = vsyncpa [#allocation12], 1
    %3499 = vsyncpa [#allocation15], 1
    %3500 = vsyncpa [#allocation7], 1
    %s3501 = scalar_lea.sflag [#allocation7], 1
    %3502 = vsyncpa %s3501, 1

</llo_original>
